<compile_context>
chip_gen: v7x
topology: tpu7x:2x2x1
jax: 0.10.0
libtpu: 0.0.40
codegen_flags: <defaults>
</compile_context>

<pallas_src>
import functools

import jax
import jax.numpy as jnp
from jax import lax
from jax.experimental import pallas as pl
from jax.experimental.pallas import tpu as pltpu


def _round_up(x, m):
    return (x + m - 1) // m * m


def _pick_batch_block(n, per_elem_bytes, budget=4 << 20):
    """Largest divisor of n whose block stays under a conservative VMEM budget."""
    nb = max(1, min(n, budget // max(per_elem_bytes, 1)))
    while n % nb:
        nb -= 1
    return nb


def _shortcut_kernel(x_ref, o_ref, *, C, H_out, W, W_out, pad):
    # x_ref: (NB, C*H_out, 2, W)   -- wrapper-reshaped input; dim 2 is the H parity.
    # o_ref: (NB, C_out*H_out*W_out) -- flat, lane-dense output block.
    NB = x_ref.shape[0]
    dtype = o_ref.dtype
    S_out = H_out * W_out

    # ---- H stride-2: even rows are parity 0 of the reshaped input (pure slice).
    xh = x_ref[:, :, 0, :]                                   # (NB, C*H_out, W)

    # ---- W stride-2: out[., m, j] = xh[., m, 2*j].
    # Expressed as a compare/select + lane-dim reduction so no strided lane
    # access or minor-dim reshape is needed.  Native dtype, no MXU.
    j2 = lax.broadcasted_iota(jnp.int32, (W_out, W), 0)
    w2 = lax.broadcasted_iota(jnp.int32, (W_out, W), 1)
    sel = w2 == 2 * j2                                       # (W_out, W)
    xb = jnp.broadcast_to(xh[:, :, None, :], (NB, C * H_out, W_out, W))
    masked = jnp.where(sel, xb, jnp.zeros((), dtype))        # (NB, C*H_out, W_out, W)
    # Collapse the non-minor dims so the result (and its store) is lane-dense.
    masked = masked.reshape(NB, C * S_out, W)
    y = masked.sum(axis=-1).astype(dtype)                    # (NB, C*S_out); astype is a no-op for float dtypes

    # ---- Channel zero-padding via slice stores (no concatenated full buffer).
    # Every element of the output block is written each grid step.
    if pad > 0:
        zeros = jnp.zeros((NB, pad * S_out), dtype)
        o_ref[:, : pad * S_out] = zeros
        o_ref[:, (pad + C) * S_out:] = zeros
    o_ref[:, pad * S_out:(pad + C) * S_out] = y


def lambda_layer(x, planes):
    """Option-A shortcut: x[:, :, ::2, ::2] zero-padded to C + 2*(planes//4) channels."""
    N, C, H, W = x.shape
    assert H % 2 == 0 and W % 2 == 0
    H_out, W_out = H // 2, W // 2
    pad = planes // 4
    C_out = C + 2 * pad
    S_out = H_out * W_out

    # Free wrapper reshape: expose the H parity as its own (second-minor) dim.
    # TODO(synk): for feature maps much larger than CIFAR, shrink the parity dim
    # in the BlockSpec (or use a manual strided DMA) so only even rows are read
    # from HBM; at these sizes the full-block DMA is fine.
    x4 = x.reshape(N, C * H_out, 2, W)

    # Conservative VMEM estimate per batch element (accounts for (8,128) tile
    # padding of the small trailing dims, the masked intermediate, and the
    # output block); keeps blocks safe on v7x's 64 MiB VMEM too.
    itemsize = jnp.dtype(x.dtype).itemsize
    per_elem = (C * H_out * 8 * _round_up(W, 128) * itemsize      # input block (tiled)
                + C * H_out * 8 * _round_up(W, 128) * itemsize    # masked intermediate
                + _round_up(C_out * S_out, 128) * itemsize)       # output block
    NB = _pick_batch_block(N, per_elem)

    kernel = functools.partial(
        _shortcut_kernel, C=C, H_out=H_out, W=W, W_out=W_out, pad=pad)

    out_flat = pl.pallas_call(
        kernel,
        out_shape=jax.ShapeDtypeStruct((N, C_out * S_out), x.dtype),
        grid=(N // NB,),
        in_specs=[pl.BlockSpec((NB, C * H_out, 2, W), lambda n: (n, 0, 0, 0))],
        out_specs=pl.BlockSpec((NB, C_out * S_out), lambda n: (n, 0)),
        compiler_params=pltpu.CompilerParams(dimension_semantics=("parallel",)),
    )(x4)

    # Free wrapper reshape back to NCHW.
    return out_flat.reshape(N, C_out, H_out, W_out)


def _reference(x, planes):
    pad = planes // 4
    y = x[:, :, ::2, ::2]
    return jnp.pad(y, ((0, 0), (pad, pad), (0, 0), (0, 0)))


if __name__ == "__main__":
    # TODO(synk): `lambd` is an arbitrary Python callable; only the canonical
    # option-A shortcut lambda used in vae_cifar.py is implemented here.
    key = jax.random.PRNGKey(0)
    x = jax.random.normal(key, (2, 4, 16, 16), dtype=jnp.float32)
    planes = 8  # -> pad = 2 channels on each side

    out = lambda_layer(x, planes)
    out = jax.block_until_ready(out)

    ref = _reference(x, planes)
    assert out.shape == (2, 8, 8, 8), out.shape
    assert jnp.allclose(out, ref, atol=1e-5, rtol=1e-5), "mismatch vs reference"
    print("KERNEL_OK")
</pallas_src>

<mosaic_0001>
module attributes {stable_mosaic.version = 11 : i64} {
  func.func @_shortcut_kernel(%arg0: i32, %arg1: memref<2x32x2x16xf32, #tpu.memory_space<vmem>>, %arg2: memref<2x512xf32, #tpu.memory_space<vmem>>) attributes {dimension_semantics = [#tpu.dimension_semantics<parallel>], iteration_bounds = array<i64: 1>, scalar_prefetch = 0 : i64, scratch_operands = 0 : i64, tpu.core_type = #tpu.core_type<tc>, window_params = [{transform_indices = @transform_0, window_bounds = array<i64: 2, 32, 2, 16>}, {transform_indices = @transform_1, window_bounds = array<i64: 2, 512>}]} {
    %c0 = arith.constant 0 : index
    %c0_0 = arith.constant 0 : index
    %c0_1 = arith.constant 0 : index
    %c0_2 = arith.constant 0 : index
    %0 = vector.load %arg1[%c0, %c0_0, %c0_1, %c0_2] : memref<2x32x2x16xf32, #tpu.memory_space<vmem>>, vector<2x32x1x16xf32>
    %1 = vector.shape_cast %0 : vector<2x32x1x16xf32> to vector<2x32x16xf32>
    %2 = tpu.iota {dimensions = array<i32: 0>} : vector<8x16xi32>
    %3 = tpu.iota {dimensions = array<i32: 1>} : vector<8x16xi32>
    %c2_i32 = arith.constant 2 : i32
    %4 = vector.broadcast %c2_i32 : i32 to vector<8x16xi32>
    %5 = arith.muli %4, %2 : vector<8x16xi32>
    %6 = arith.cmpi eq, %3, %5 : vector<8x16xi32>
    %7 = vector.shape_cast %1 : vector<2x32x16xf32> to vector<2x32x1x16xf32>
    %8 = vector.shape_cast %7 : vector<2x32x1x16xf32> to vector<2x32x1x16xf32>
    %9 = vector.broadcast %8 : vector<2x32x1x16xf32> to vector<2x32x8x16xf32>
    %cst = arith.constant 0.000000e+00 : f32
    %10 = vector.shape_cast %6 : vector<8x16xi1> to vector<1x1x8x16xi1>
    %11 = vector.broadcast %10 : vector<1x1x8x16xi1> to vector<2x32x8x16xi1>
    %12 = vector.broadcast %cst : f32 to vector<2x32x8x16xf32>
    %13 = arith.select %11, %9, %12 : vector<2x32x8x16xi1>, vector<2x32x8x16xf32>
    %14 = vector.shape_cast %13 : vector<2x32x8x16xf32> to vector<2x256x16xf32>
    %cst_3 = arith.constant dense<0.000000e+00> : vector<2x256xf32>
    %15 = vector.multi_reduction <add>, %14, %cst_3 [2] : vector<2x256x16xf32> to vector<2x256xf32>
    %cst_4 = arith.constant 0.000000e+00 : f32
    %16 = vector.broadcast %cst_4 : f32 to vector<2x128xf32>
    %c0_5 = arith.constant 0 : index
    %c0_6 = arith.constant 0 : index
    %17 = vector.load %arg2[%c0_5, %c0_6] : memref<2x512xf32, #tpu.memory_space<vmem>>, vector<2x128xf32>
    tpu.vector_store %arg2[%c0_5, %c0_6], %16 {strides = array<i32>} : memref<2x512xf32, #tpu.memory_space<vmem>>, vector<2x128xf32>,
    %c0_7 = arith.constant 0 : index
    %c384 = arith.constant 384 : index
    %18 = vector.load %arg2[%c0_7, %c384] : memref<2x512xf32, #tpu.memory_space<vmem>>, vector<2x128xf32>
    tpu.vector_store %arg2[%c0_7, %c384], %16 {strides = array<i32>} : memref<2x512xf32, #tpu.memory_space<vmem>>, vector<2x128xf32>,
    %c0_8 = arith.constant 0 : index
    %c128 = arith.constant 128 : index
    %19 = vector.load %arg2[%c0_8, %c128] : memref<2x512xf32, #tpu.memory_space<vmem>>, vector<2x256xf32>
    tpu.vector_store %arg2[%c0_8, %c128], %15 {strides = array<i32>} : memref<2x512xf32, #tpu.memory_space<vmem>>, vector<2x256xf32>,
    return
  }
  func.func @transform_0(%arg0: i32) -> (i32, i32, i32, i32) {
    %c0_i32 = arith.constant 0 : i32
    %c0_i32_0 = arith.constant 0 : i32
    %c0_i32_1 = arith.constant 0 : i32
    %c0_i32_2 = arith.constant 0 : i32
    return %arg0, %c0_i32, %c0_i32_0, %c0_i32_1 : i32, i32, i32, i32
  }
  func.func @transform_1(%arg0: i32) -> (i32, i32) {
    %c0_i32 = arith.constant 0 : i32
    %c0_i32_0 = arith.constant 0 : i32
    return %arg0, %c0_i32 : i32, i32
  }
}

</mosaic_0001>

<llo_original>
// kernel: tpu_custom_call.1
$region0: #{tpu_custom_call.1}
  #allocation0 [shape = 'u32[]', space=smem, size = 0x4, offset = 0x4, fixed_abs, tag = 'smem constant byte address 0x4 - core index']
  #allocation1 [shape = 'u32[144,128]{1,0:T(1,128)}', space=vmem, size = 0x12000, scoped, tag = 'internal scratch']
  %s0 = inlined_call_operand.vmem [shape: f32[2,32,2,16], index: 0, kind: input, shape index: {}]
  %s1 = inlined_call_operand.hbm [shape: f32[2,512], index: 1, kind: output, shape index: {}]
  %s2 = sld [smem:[#allocation0]]
  $region14: #{tpu_custom_call.1} parent=0
    _
  %s4 = ssub.s32 1, %s2
  %s5 = scalar_select 0, %s4, %s2
  $region1: #{tpu_custom_call.1} parent=0
    #allocation2 [shape = 'u8[4096]{0}', space=vmem, size = 0x1000, scoped, tag = 'output window, operand 0, single buffered']
    #allocation3 [shape = 's32[1]{0}', space=sflag, size = 0x4, scoped, tag = 'scoped memory for tpu_custom_call.1']
    %6 = vsyncpa [#allocation3], 0
    // Predicated region
    $region2: #{tpu_custom_call.1} parent=1 // pred_check
      _
    $region3: #{tpu_custom_call.1} parent=1 // pred_check_branch
      %8 = sbr.rel (0) target = $region5
    $region4: #{tpu_custom_call.1} parent=1 // pred_region
      _
    $region5: #{tpu_custom_call.1} parent=1 // pred_fallthru
      _
    %v9 = vld [vmem:[%s0] sm:$0x1]
    %v10 = vld [vmem:[%s0 + $0x2] sm:$0x1]
    %v11 = vld [vmem:[%s0 + $0x4] sm:$0x1]
    %v12 = vld [vmem:[%s0 + $0x6] sm:$0x1]
    %v13 = vld [vmem:[%s0 + $0x8] sm:$0x1]
    %v14 = vld [vmem:[%s0 + $0xa] sm:$0x1]
    %v15 = vld [vmem:[%s0 + $0xc] sm:$0x1]
    %v16 = vld [vmem:[%s0 + $0xe] sm:$0x1]
    %v17 = vld [vmem:[%s0 + $0x10] sm:$0x1]
    %v18 = vld [vmem:[%s0 + $0x12] sm:$0x1]
    %v19 = vld [vmem:[%s0 + $0x14] sm:$0x1]
    %v20 = vld [vmem:[%s0 + $0x16] sm:$0x1]
    %v21 = vld [vmem:[%s0 + $0x18] sm:$0x1]
    %v22 = vld [vmem:[%s0 + $0x1a] sm:$0x1]
    %v23 = vld [vmem:[%s0 + $0x1c] sm:$0x1]
    %v24 = vld [vmem:[%s0 + $0x1e] sm:$0x1]
    %v25 = vld [vmem:[%s0 + $0x20] sm:$0x1]
    %v26 = vld [vmem:[%s0 + $0x22] sm:$0x1]
    %v27 = vld [vmem:[%s0 + $0x24] sm:$0x1]
    %v28 = vld [vmem:[%s0 + $0x26] sm:$0x1]
    %v29 = vld [vmem:[%s0 + $0x28] sm:$0x1]
    %v30 = vld [vmem:[%s0 + $0x2a] sm:$0x1]
    %v31 = vld [vmem:[%s0 + $0x2c] sm:$0x1]
    %v32 = vld [vmem:[%s0 + $0x2e] sm:$0x1]
    %v33 = vld [vmem:[%s0 + $0x30] sm:$0x1]
    %v34 = vld [vmem:[%s0 + $0x32] sm:$0x1]
    %v35 = vld [vmem:[%s0 + $0x34] sm:$0x1]
    %v36 = vld [vmem:[%s0 + $0x36] sm:$0x1]
    %v37 = vld [vmem:[%s0 + $0x38] sm:$0x1]
    %v38 = vld [vmem:[%s0 + $0x3a] sm:$0x1]
    %v39 = vld [vmem:[%s0 + $0x3c] sm:$0x1]
    %v40 = vld [vmem:[%s0 + $0x3e] sm:$0x1]
    %v41 = vld [vmem:[%s0 + $0x40] sm:$0x1]
    %v42 = vld [vmem:[%s0 + $0x42] sm:$0x1]
    %v43 = vld [vmem:[%s0 + $0x44] sm:$0x1]
    %v44 = vld [vmem:[%s0 + $0x46] sm:$0x1]
    %v45 = vld [vmem:[%s0 + $0x48] sm:$0x1]
    %v46 = vld [vmem:[%s0 + $0x4a] sm:$0x1]
    %v47 = vld [vmem:[%s0 + $0x4c] sm:$0x1]
    %v48 = vld [vmem:[%s0 + $0x4e] sm:$0x1]
    %v49 = vld [vmem:[%s0 + $0x50] sm:$0x1]
    %v50 = vld [vmem:[%s0 + $0x52] sm:$0x1]
    %v51 = vld [vmem:[%s0 + $0x54] sm:$0x1]
    %v52 = vld [vmem:[%s0 + $0x56] sm:$0x1]
    %v53 = vld [vmem:[%s0 + $0x58] sm:$0x1]
    %v54 = vld [vmem:[%s0 + $0x5a] sm:$0x1]
    %v55 = vld [vmem:[%s0 + $0x5c] sm:$0x1]
    %v56 = vld [vmem:[%s0 + $0x5e] sm:$0x1]
    %v57 = vld [vmem:[%s0 + $0x60] sm:$0x1]
    %v58 = vld [vmem:[%s0 + $0x62] sm:$0x1]
    %v59 = vld [vmem:[%s0 + $0x64] sm:$0x1]
    %v60 = vld [vmem:[%s0 + $0x66] sm:$0x1]
    %v61 = vld [vmem:[%s0 + $0x68] sm:$0x1]
    %v62 = vld [vmem:[%s0 + $0x6a] sm:$0x1]
    %v63 = vld [vmem:[%s0 + $0x6c] sm:$0x1]
    %v64 = vld [vmem:[%s0 + $0x6e] sm:$0x1]
    %v65 = vld [vmem:[%s0 + $0x70] sm:$0x1]
    %v66 = vld [vmem:[%s0 + $0x72] sm:$0x1]
    %v67 = vld [vmem:[%s0 + $0x74] sm:$0x1]
    %v68 = vld [vmem:[%s0 + $0x76] sm:$0x1]
    %v69 = vld [vmem:[%s0 + $0x78] sm:$0x1]
    %v70 = vld [vmem:[%s0 + $0x7a] sm:$0x1]
    %v71 = vld [vmem:[%s0 + $0x7c] sm:$0x1]
    %v72 = vld [vmem:[%s0 + $0x7e] sm:$0x1]
    %v73 = vlaneseq
    %v74 = vshrl.u32 %v73, 7
    %v75 = vlaneseq
    %v76 = vand.u32 %v75, 127
    %v77 = vmul.u32 %v74, 2
    %vm78 = vcmp.eq.s32.totalorder %v76, %v77
    %v79 = vlaneseq
    %v80 = vshrl.u32 %v79, 7
    %v81 = vsub.s32 0, %v80
    %v82 = vrot.slane %v9, %v81
    %v83 = vlaneseq
    %v84 = vshrl.u32 %v83, 7
    %v85 = vsub.s32 0, %v84
    %v86 = vrot.slane %v10, %v85
    %v87 = vlaneseq
    %v88 = vshrl.u32 %v87, 7
    %v89 = vsub.s32 0, %v88
    %v90 = vrot.slane %v11, %v89
    %v91 = vlaneseq
    %v92 = vshrl.u32 %v91, 7
    %v93 = vsub.s32 0, %v92
    %v94 = vrot.slane %v12, %v93
    %v95 = vlaneseq
    %v96 = vshrl.u32 %v95, 7
    %v97 = vsub.s32 0, %v96
    %v98 = vrot.slane %v13, %v97
    %v99 = vlaneseq
    %v100 = vshrl.u32 %v99, 7
    %v101 = vsub.s32 0, %v100
    %v102 = vrot.slane %v14, %v101
    %v103 = vlaneseq
    %v104 = vshrl.u32 %v103, 7
    %v105 = vsub.s32 0, %v104
    %v106 = vrot.slane %v15, %v105
    %v107 = vlaneseq
    %v108 = vshrl.u32 %v107, 7
    %v109 = vsub.s32 0, %v108
    %v110 = vrot.slane %v16, %v109
    %v111 = vlaneseq
    %v112 = vshrl.u32 %v111, 7
    %v113 = vsub.s32 0, %v112
    %v114 = vrot.slane %v17, %v113
    %v115 = vlaneseq
    %v116 = vshrl.u32 %v115, 7
    %v117 = vsub.s32 0, %v116
    %v118 = vrot.slane %v18, %v117
    %v119 = vlaneseq
    %v120 = vshrl.u32 %v119, 7
    %v121 = vsub.s32 0, %v120
    %v122 = vrot.slane %v19, %v121
    %v123 = vlaneseq
    %v124 = vshrl.u32 %v123, 7
    %v125 = vsub.s32 0, %v124
    %v126 = vrot.slane %v20, %v125
    %v127 = vlaneseq
    %v128 = vshrl.u32 %v127, 7
    %v129 = vsub.s32 0, %v128
    %v130 = vrot.slane %v21, %v129
    %v131 = vlaneseq
    %v132 = vshrl.u32 %v131, 7
    %v133 = vsub.s32 0, %v132
    %v134 = vrot.slane %v22, %v133
    %v135 = vlaneseq
    %v136 = vshrl.u32 %v135, 7
    %v137 = vsub.s32 0, %v136
    %v138 = vrot.slane %v23, %v137
    %v139 = vlaneseq
    %v140 = vshrl.u32 %v139, 7
    %v141 = vsub.s32 0, %v140
    %v142 = vrot.slane %v24, %v141
    %v143 = vlaneseq
    %v144 = vshrl.u32 %v143, 7
    %v145 = vsub.s32 0, %v144
    %v146 = vrot.slane %v25, %v145
    %v147 = vlaneseq
    %v148 = vshrl.u32 %v147, 7
    %v149 = vsub.s32 0, %v148
    %v150 = vrot.slane %v26, %v149
    %v151 = vlaneseq
    %v152 = vshrl.u32 %v151, 7
    %v153 = vsub.s32 0, %v152
    %v154 = vrot.slane %v27, %v153
    %v155 = vlaneseq
    %v156 = vshrl.u32 %v155, 7
    %v157 = vsub.s32 0, %v156
    %v158 = vrot.slane %v28, %v157
    %v159 = vlaneseq
    %v160 = vshrl.u32 %v159, 7
    %v161 = vsub.s32 0, %v160
    %v162 = vrot.slane %v29, %v161
    %v163 = vlaneseq
    %v164 = vshrl.u32 %v163, 7
    %v165 = vsub.s32 0, %v164
    %v166 = vrot.slane %v30, %v165
    %v167 = vlaneseq
    %v168 = vshrl.u32 %v167, 7
    %v169 = vsub.s32 0, %v168
    %v170 = vrot.slane %v31, %v169
    %v171 = vlaneseq
    %v172 = vshrl.u32 %v171, 7
    %v173 = vsub.s32 0, %v172
    %v174 = vrot.slane %v32, %v173
    %v175 = vlaneseq
    %v176 = vshrl.u32 %v175, 7
    %v177 = vsub.s32 0, %v176
    %v178 = vrot.slane %v33, %v177
    %v179 = vlaneseq
    %v180 = vshrl.u32 %v179, 7
    %v181 = vsub.s32 0, %v180
    %v182 = vrot.slane %v34, %v181
    %v183 = vlaneseq
    %v184 = vshrl.u32 %v183, 7
    %v185 = vsub.s32 0, %v184
    %v186 = vrot.slane %v35, %v185
    %v187 = vlaneseq
    %v188 = vshrl.u32 %v187, 7
    %v189 = vsub.s32 0, %v188
    %v190 = vrot.slane %v36, %v189
    %v191 = vlaneseq
    %v192 = vshrl.u32 %v191, 7
    %v193 = vsub.s32 0, %v192
    %v194 = vrot.slane %v37, %v193
    %v195 = vlaneseq
    %v196 = vshrl.u32 %v195, 7
    %v197 = vsub.s32 0, %v196
    %v198 = vrot.slane %v38, %v197
    %v199 = vlaneseq
    %v200 = vshrl.u32 %v199, 7
    %v201 = vsub.s32 0, %v200
    %v202 = vrot.slane %v39, %v201
    %v203 = vlaneseq
    %v204 = vshrl.u32 %v203, 7
    %v205 = vsub.s32 0, %v204
    %v206 = vrot.slane %v40, %v205
    %v207 = vlaneseq
    %v208 = vshrl.u32 %v207, 7
    %v209 = vsub.s32 0, %v208
    %v210 = vrot.slane %v41, %v209
    %v211 = vlaneseq
    %v212 = vshrl.u32 %v211, 7
    %v213 = vsub.s32 0, %v212
    %v214 = vrot.slane %v42, %v213
    %v215 = vlaneseq
    %v216 = vshrl.u32 %v215, 7
    %v217 = vsub.s32 0, %v216
    %v218 = vrot.slane %v43, %v217
    %v219 = vlaneseq
    %v220 = vshrl.u32 %v219, 7
    %v221 = vsub.s32 0, %v220
    %v222 = vrot.slane %v44, %v221
    %v223 = vlaneseq
    %v224 = vshrl.u32 %v223, 7
    %v225 = vsub.s32 0, %v224
    %v226 = vrot.slane %v45, %v225
    %v227 = vlaneseq
    %v228 = vshrl.u32 %v227, 7
    %v229 = vsub.s32 0, %v228
    %v230 = vrot.slane %v46, %v229
    %v231 = vlaneseq
    %v232 = vshrl.u32 %v231, 7
    %v233 = vsub.s32 0, %v232
    %v234 = vrot.slane %v47, %v233
    %v235 = vlaneseq
    %v236 = vshrl.u32 %v235, 7
    %v237 = vsub.s32 0, %v236
    %v238 = vrot.slane %v48, %v237
    %v239 = vlaneseq
    %v240 = vshrl.u32 %v239, 7
    %v241 = vsub.s32 0, %v240
    %v242 = vrot.slane %v49, %v241
    %v243 = vlaneseq
    %v244 = vshrl.u32 %v243, 7
    %v245 = vsub.s32 0, %v244
    %v246 = vrot.slane %v50, %v245
    %v247 = vlaneseq
    %v248 = vshrl.u32 %v247, 7
    %v249 = vsub.s32 0, %v248
    %v250 = vrot.slane %v51, %v249
    %v251 = vlaneseq
    %v252 = vshrl.u32 %v251, 7
    %v253 = vsub.s32 0, %v252
    %v254 = vrot.slane %v52, %v253
    %v255 = vlaneseq
    %v256 = vshrl.u32 %v255, 7
    %v257 = vsub.s32 0, %v256
    %v258 = vrot.slane %v53, %v257
    %v259 = vlaneseq
    %v260 = vshrl.u32 %v259, 7
    %v261 = vsub.s32 0, %v260
    %v262 = vrot.slane %v54, %v261
    %v263 = vlaneseq
    %v264 = vshrl.u32 %v263, 7
    %v265 = vsub.s32 0, %v264
    %v266 = vrot.slane %v55, %v265
    %v267 = vlaneseq
    %v268 = vshrl.u32 %v267, 7
    %v269 = vsub.s32 0, %v268
    %v270 = vrot.slane %v56, %v269
    %v271 = vlaneseq
    %v272 = vshrl.u32 %v271, 7
    %v273 = vsub.s32 0, %v272
    %v274 = vrot.slane %v57, %v273
    %v275 = vlaneseq
    %v276 = vshrl.u32 %v275, 7
    %v277 = vsub.s32 0, %v276
    %v278 = vrot.slane %v58, %v277
    %v279 = vlaneseq
    %v280 = vshrl.u32 %v279, 7
    %v281 = vsub.s32 0, %v280
    %v282 = vrot.slane %v59, %v281
    %v283 = vlaneseq
    %v284 = vshrl.u32 %v283, 7
    %v285 = vsub.s32 0, %v284
    %v286 = vrot.slane %v60, %v285
    %v287 = vlaneseq
    %v288 = vshrl.u32 %v287, 7
    %v289 = vsub.s32 0, %v288
    %v290 = vrot.slane %v61, %v289
    %v291 = vlaneseq
    %v292 = vshrl.u32 %v291, 7
    %v293 = vsub.s32 0, %v292
    %v294 = vrot.slane %v62, %v293
    %v295 = vlaneseq
    %v296 = vshrl.u32 %v295, 7
    %v297 = vsub.s32 0, %v296
    %v298 = vrot.slane %v63, %v297
    %v299 = vlaneseq
    %v300 = vshrl.u32 %v299, 7
    %v301 = vsub.s32 0, %v300
    %v302 = vrot.slane %v64, %v301
    %v303 = vlaneseq
    %v304 = vshrl.u32 %v303, 7
    %v305 = vsub.s32 0, %v304
    %v306 = vrot.slane %v65, %v305
    %v307 = vlaneseq
    %v308 = vshrl.u32 %v307, 7
    %v309 = vsub.s32 0, %v308
    %v310 = vrot.slane %v66, %v309
    %v311 = vlaneseq
    %v312 = vshrl.u32 %v311, 7
    %v313 = vsub.s32 0, %v312
    %v314 = vrot.slane %v67, %v313
    %v315 = vlaneseq
    %v316 = vshrl.u32 %v315, 7
    %v317 = vsub.s32 0, %v316
    %v318 = vrot.slane %v68, %v317
    %v319 = vlaneseq
    %v320 = vshrl.u32 %v319, 7
    %v321 = vsub.s32 0, %v320
    %v322 = vrot.slane %v69, %v321
    %v323 = vlaneseq
    %v324 = vshrl.u32 %v323, 7
    %v325 = vsub.s32 0, %v324
    %v326 = vrot.slane %v70, %v325
    %v327 = vlaneseq
    %v328 = vshrl.u32 %v327, 7
    %v329 = vsub.s32 0, %v328
    %v330 = vrot.slane %v71, %v329
    %v331 = vlaneseq
    %v332 = vshrl.u32 %v331, 7
    %v333 = vsub.s32 0, %v332
    %v334 = vrot.slane %v72, %v333
    %v335 = vsel %vm78, 1, 0
    %vm336 = vcmp.eq.s32.totalorder %v335, 1
    %v337 = vsel %vm336, %v82, 0.0
    %v338 = vsel %vm336, %v86, 0.0
    %v339 = vsel %vm336, %v90, 0.0
    %v340 = vsel %vm336, %v94, 0.0
    %v341 = vsel %vm336, %v98, 0.0
    %v342 = vsel %vm336, %v102, 0.0
    %v343 = vsel %vm336, %v106, 0.0
    %v344 = vsel %vm336, %v110, 0.0
    %v345 = vsel %vm336, %v114, 0.0
    %v346 = vsel %vm336, %v118, 0.0
    %v347 = vsel %vm336, %v122, 0.0
    %v348 = vsel %vm336, %v126, 0.0
    %v349 = vsel %vm336, %v130, 0.0
    %v350 = vsel %vm336, %v134, 0.0
    %v351 = vsel %vm336, %v138, 0.0
    %v352 = vsel %vm336, %v142, 0.0
    %v353 = vsel %vm336, %v146, 0.0
    %v354 = vsel %vm336, %v150, 0.0
    %v355 = vsel %vm336, %v154, 0.0
    %v356 = vsel %vm336, %v158, 0.0
    %v357 = vsel %vm336, %v162, 0.0
    %v358 = vsel %vm336, %v166, 0.0
    %v359 = vsel %vm336, %v170, 0.0
    %v360 = vsel %vm336, %v174, 0.0
    %v361 = vsel %vm336, %v178, 0.0
    %v362 = vsel %vm336, %v182, 0.0
    %v363 = vsel %vm336, %v186, 0.0
    %v364 = vsel %vm336, %v190, 0.0
    %v365 = vsel %vm336, %v194, 0.0
    %v366 = vsel %vm336, %v198, 0.0
    %v367 = vsel %vm336, %v202, 0.0
    %v368 = vsel %vm336, %v206, 0.0
    %v369 = vsel %vm336, %v210, 0.0
    %v370 = vsel %vm336, %v214, 0.0
    %v371 = vsel %vm336, %v218, 0.0
    %v372 = vsel %vm336, %v222, 0.0
    %v373 = vsel %vm336, %v226, 0.0
    %v374 = vsel %vm336, %v230, 0.0
    %v375 = vsel %vm336, %v234, 0.0
    %v376 = vsel %vm336, %v238, 0.0
    %v377 = vsel %vm336, %v242, 0.0
    %v378 = vsel %vm336, %v246, 0.0
    %v379 = vsel %vm336, %v250, 0.0
    %v380 = vsel %vm336, %v254, 0.0
    %v381 = vsel %vm336, %v258, 0.0
    %v382 = vsel %vm336, %v262, 0.0
    %v383 = vsel %vm336, %v266, 0.0
    %v384 = vsel %vm336, %v270, 0.0
    %v385 = vsel %vm336, %v274, 0.0
    %v386 = vsel %vm336, %v278, 0.0
    %v387 = vsel %vm336, %v282, 0.0
    %v388 = vsel %vm336, %v286, 0.0
    %v389 = vsel %vm336, %v290, 0.0
    %v390 = vsel %vm336, %v294, 0.0
    %v391 = vsel %vm336, %v298, 0.0
    %v392 = vsel %vm336, %v302, 0.0
    %v393 = vsel %vm336, %v306, 0.0
    %v394 = vsel %vm336, %v310, 0.0
    %v395 = vsel %vm336, %v314, 0.0
    %v396 = vsel %vm336, %v318, 0.0
    %v397 = vsel %vm336, %v322, 0.0
    %v398 = vsel %vm336, %v326, 0.0
    %v399 = vsel %vm336, %v330, 0.0
    %v400 = vsel %vm336, %v334, 0.0
    %vm401 = vcmask 130048
    %v402 = vsel %vm401, %v337, 0.0
    %403 = vadd.xlane.f32.xlu0 %v402
    %v404 = vpop.xlane.xlu0 %403
    %v405 = vsel %vm401, %v338, 0.0
    %406 = vadd.xlane.f32.xlu0 %v405
    %v407 = vpop.xlane.xlu0 %406
    %v408 = vsel %vm401, %v339, 0.0
    %409 = vadd.xlane.f32.xlu0 %v408
    %v410 = vpop.xlane.xlu0 %409
    %v411 = vsel %vm401, %v340, 0.0
    %412 = vadd.xlane.f32.xlu0 %v411
    %v413 = vpop.xlane.xlu0 %412
    %v414 = vsel %vm401, %v341, 0.0
    %415 = vadd.xlane.f32.xlu0 %v414
    %v416 = vpop.xlane.xlu0 %415
    %v417 = vsel %vm401, %v342, 0.0
    %418 = vadd.xlane.f32.xlu0 %v417
    %v419 = vpop.xlane.xlu0 %418
    %v420 = vsel %vm401, %v343, 0.0
    %421 = vadd.xlane.f32.xlu0 %v420
    %v422 = vpop.xlane.xlu0 %421
    %v423 = vsel %vm401, %v344, 0.0
    %424 = vadd.xlane.f32.xlu0 %v423
    %v425 = vpop.xlane.xlu0 %424
    %v426 = vsel %vm401, %v345, 0.0
    %427 = vadd.xlane.f32.xlu0 %v426
    %v428 = vpop.xlane.xlu0 %427
    %v429 = vsel %vm401, %v346, 0.0
    %430 = vadd.xlane.f32.xlu0 %v429
    %v431 = vpop.xlane.xlu0 %430
    %v432 = vsel %vm401, %v347, 0.0
    %433 = vadd.xlane.f32.xlu0 %v432
    %v434 = vpop.xlane.xlu0 %433
    %v435 = vsel %vm401, %v348, 0.0
    %436 = vadd.xlane.f32.xlu0 %v435
    %v437 = vpop.xlane.xlu0 %436
    %v438 = vsel %vm401, %v349, 0.0
    %439 = vadd.xlane.f32.xlu0 %v438
    %v440 = vpop.xlane.xlu0 %439
    %v441 = vsel %vm401, %v350, 0.0
    %442 = vadd.xlane.f32.xlu0 %v441
    %v443 = vpop.xlane.xlu0 %442
    %v444 = vsel %vm401, %v351, 0.0
    %445 = vadd.xlane.f32.xlu0 %v444
    %v446 = vpop.xlane.xlu0 %445
    %v447 = vsel %vm401, %v352, 0.0
    %448 = vadd.xlane.f32.xlu0 %v447
    %v449 = vpop.xlane.xlu0 %448
    %v450 = vsel %vm401, %v353, 0.0
    %451 = vadd.xlane.f32.xlu0 %v450
    %v452 = vpop.xlane.xlu0 %451
    %v453 = vsel %vm401, %v354, 0.0
    %454 = vadd.xlane.f32.xlu0 %v453
    %v455 = vpop.xlane.xlu0 %454
    %v456 = vsel %vm401, %v355, 0.0
    %457 = vadd.xlane.f32.xlu0 %v456
    %v458 = vpop.xlane.xlu0 %457
    %v459 = vsel %vm401, %v356, 0.0
    %460 = vadd.xlane.f32.xlu0 %v459
    %v461 = vpop.xlane.xlu0 %460
    %v462 = vsel %vm401, %v357, 0.0
    %463 = vadd.xlane.f32.xlu0 %v462
    %v464 = vpop.xlane.xlu0 %463
    %v465 = vsel %vm401, %v358, 0.0
    %466 = vadd.xlane.f32.xlu0 %v465
    %v467 = vpop.xlane.xlu0 %466
    %v468 = vsel %vm401, %v359, 0.0
    %469 = vadd.xlane.f32.xlu0 %v468
    %v470 = vpop.xlane.xlu0 %469
    %v471 = vsel %vm401, %v360, 0.0
    %472 = vadd.xlane.f32.xlu0 %v471
    %v473 = vpop.xlane.xlu0 %472
    %v474 = vsel %vm401, %v361, 0.0
    %475 = vadd.xlane.f32.xlu0 %v474
    %v476 = vpop.xlane.xlu0 %475
    %v477 = vsel %vm401, %v362, 0.0
    %478 = vadd.xlane.f32.xlu0 %v477
    %v479 = vpop.xlane.xlu0 %478
    %v480 = vsel %vm401, %v363, 0.0
    %481 = vadd.xlane.f32.xlu0 %v480
    %v482 = vpop.xlane.xlu0 %481
    %v483 = vsel %vm401, %v364, 0.0
    %484 = vadd.xlane.f32.xlu0 %v483
    %v485 = vpop.xlane.xlu0 %484
    %v486 = vsel %vm401, %v365, 0.0
    %487 = vadd.xlane.f32.xlu0 %v486
    %v488 = vpop.xlane.xlu0 %487
    %v489 = vsel %vm401, %v366, 0.0
    %490 = vadd.xlane.f32.xlu0 %v489
    %v491 = vpop.xlane.xlu0 %490
    %v492 = vsel %vm401, %v367, 0.0
    %493 = vadd.xlane.f32.xlu0 %v492
    %v494 = vpop.xlane.xlu0 %493
    %v495 = vsel %vm401, %v368, 0.0
    %496 = vadd.xlane.f32.xlu0 %v495
    %v497 = vpop.xlane.xlu0 %496
    %v498 = vsel %vm401, %v369, 0.0
    %499 = vadd.xlane.f32.xlu0 %v498
    %v500 = vpop.xlane.xlu0 %499
    %v501 = vsel %vm401, %v370, 0.0
    %502 = vadd.xlane.f32.xlu0 %v501
    %v503 = vpop.xlane.xlu0 %502
    %v504 = vsel %vm401, %v371, 0.0
    %505 = vadd.xlane.f32.xlu0 %v504
    %v506 = vpop.xlane.xlu0 %505
    %v507 = vsel %vm401, %v372, 0.0
    %508 = vadd.xlane.f32.xlu0 %v507
    %v509 = vpop.xlane.xlu0 %508
    %v510 = vsel %vm401, %v373, 0.0
    %511 = vadd.xlane.f32.xlu0 %v510
    %v512 = vpop.xlane.xlu0 %511
    %v513 = vsel %vm401, %v374, 0.0
    %514 = vadd.xlane.f32.xlu0 %v513
    %v515 = vpop.xlane.xlu0 %514
    %v516 = vsel %vm401, %v375, 0.0
    %517 = vadd.xlane.f32.xlu0 %v516
    %v518 = vpop.xlane.xlu0 %517
    %v519 = vsel %vm401, %v376, 0.0
    %520 = vadd.xlane.f32.xlu0 %v519
    %v521 = vpop.xlane.xlu0 %520
    %v522 = vsel %vm401, %v377, 0.0
    %523 = vadd.xlane.f32.xlu0 %v522
    %v524 = vpop.xlane.xlu0 %523
    %v525 = vsel %vm401, %v378, 0.0
    %526 = vadd.xlane.f32.xlu0 %v525
    %v527 = vpop.xlane.xlu0 %526
    %v528 = vsel %vm401, %v379, 0.0
    %529 = vadd.xlane.f32.xlu0 %v528
    %v530 = vpop.xlane.xlu0 %529
    %v531 = vsel %vm401, %v380, 0.0
    %532 = vadd.xlane.f32.xlu0 %v531
    %v533 = vpop.xlane.xlu0 %532
    %v534 = vsel %vm401, %v381, 0.0
    %535 = vadd.xlane.f32.xlu0 %v534
    %v536 = vpop.xlane.xlu0 %535
    %v537 = vsel %vm401, %v382, 0.0
    %538 = vadd.xlane.f32.xlu0 %v537
    %v539 = vpop.xlane.xlu0 %538
    %v540 = vsel %vm401, %v383, 0.0
    %541 = vadd.xlane.f32.xlu0 %v540
    %v542 = vpop.xlane.xlu0 %541
    %v543 = vsel %vm401, %v384, 0.0
    %544 = vadd.xlane.f32.xlu0 %v543
    %v545 = vpop.xlane.xlu0 %544
    %v546 = vsel %vm401, %v385, 0.0
    %547 = vadd.xlane.f32.xlu0 %v546
    %v548 = vpop.xlane.xlu0 %547
    %v549 = vsel %vm401, %v386, 0.0
    %550 = vadd.xlane.f32.xlu0 %v549
    %v551 = vpop.xlane.xlu0 %550
    %v552 = vsel %vm401, %v387, 0.0
    %553 = vadd.xlane.f32.xlu0 %v552
    %v554 = vpop.xlane.xlu0 %553
    %v555 = vsel %vm401, %v388, 0.0
    %556 = vadd.xlane.f32.xlu0 %v555
    %v557 = vpop.xlane.xlu0 %556
    %v558 = vsel %vm401, %v389, 0.0
    %559 = vadd.xlane.f32.xlu0 %v558
    %v560 = vpop.xlane.xlu0 %559
    %v561 = vsel %vm401, %v390, 0.0
    %562 = vadd.xlane.f32.xlu0 %v561
    %v563 = vpop.xlane.xlu0 %562
    %v564 = vsel %vm401, %v391, 0.0
    %565 = vadd.xlane.f32.xlu0 %v564
    %v566 = vpop.xlane.xlu0 %565
    %v567 = vsel %vm401, %v392, 0.0
    %568 = vadd.xlane.f32.xlu0 %v567
    %v569 = vpop.xlane.xlu0 %568
    %v570 = vsel %vm401, %v393, 0.0
    %571 = vadd.xlane.f32.xlu0 %v570
    %v572 = vpop.xlane.xlu0 %571
    %v573 = vsel %vm401, %v394, 0.0
    %574 = vadd.xlane.f32.xlu0 %v573
    %v575 = vpop.xlane.xlu0 %574
    %v576 = vsel %vm401, %v395, 0.0
    %577 = vadd.xlane.f32.xlu0 %v576
    %v578 = vpop.xlane.xlu0 %577
    %v579 = vsel %vm401, %v396, 0.0
    %580 = vadd.xlane.f32.xlu0 %v579
    %v581 = vpop.xlane.xlu0 %580
    %v582 = vsel %vm401, %v397, 0.0
    %583 = vadd.xlane.f32.xlu0 %v582
    %v584 = vpop.xlane.xlu0 %583
    %v585 = vsel %vm401, %v398, 0.0
    %586 = vadd.xlane.f32.xlu0 %v585
    %v587 = vpop.xlane.xlu0 %586
    %v588 = vsel %vm401, %v399, 0.0
    %589 = vadd.xlane.f32.xlu0 %v588
    %v590 = vpop.xlane.xlu0 %589
    %v591 = vsel %vm401, %v400, 0.0
    %592 = vadd.xlane.f32.xlu0 %v591
    %v593 = vpop.xlane.xlu0 %592
    %594 = vst [vmem:[#allocation2] sm:$0x3] 0.0
    %595 = vst [vmem:[#allocation2 + $0x6] sm:$0x3] 0.0
    %v661 = vunpack.c.l.s4 269488144
    %v662 = vunpack.c.0.s8 %v661
    %v663 = vlaneseq
    %v664 = vshrl.u32 %v663, 7
    %v665 = vsub.s32 %v662, %v664
    %v666 = vrot.slane %v404, %v665
    %v668 = vunpack.c.l.s4 842150450
    %v669 = vunpack.c.0.s8 %v668
    %v670 = vlaneseq
    %v671 = vshrl.u32 %v670, 7
    %v672 = vsub.s32 %v669, %v671
    %v673 = vrot.slane %v404, %v672
    %v675 = vunpack.c.l.s4 1414812756
    %v676 = vunpack.c.0.s8 %v675
    %v677 = vlaneseq
    %v678 = vshrl.u32 %v677, 7
    %v679 = vsub.s32 %v676, %v678
    %v680 = vrot.slane %v404, %v679
    %v682 = vunpack.c.l.s4 1987475062
    %v683 = vunpack.c.0.s8 %v682
    %v684 = vlaneseq
    %v685 = vshrl.u32 %v684, 7
    %v686 = vsub.s32 %v683, %v685
    %v687 = vrot.slane %v404, %v686
    %v689 = vunpack.c.l.s4 269488144
    %v690 = vunpack.c.0.s8 %v689
    %v691 = vlaneseq
    %v692 = vshrl.u32 %v691, 7
    %v693 = vsub.s32 %v690, %v692
    %v694 = vrot.slane %v407, %v693
    %v696 = vunpack.c.l.s4 842150450
    %v697 = vunpack.c.0.s8 %v696
    %v698 = vlaneseq
    %v699 = vshrl.u32 %v698, 7
    %v700 = vsub.s32 %v697, %v699
    %v701 = vrot.slane %v407, %v700
    %v703 = vunpack.c.l.s4 1414812756
    %v704 = vunpack.c.0.s8 %v703
    %v705 = vlaneseq
    %v706 = vshrl.u32 %v705, 7
    %v707 = vsub.s32 %v704, %v706
    %v708 = vrot.slane %v407, %v707
    %v710 = vunpack.c.l.s4 1987475062
    %v711 = vunpack.c.0.s8 %v710
    %v712 = vlaneseq
    %v713 = vshrl.u32 %v712, 7
    %v714 = vsub.s32 %v711, %v713
    %v715 = vrot.slane %v407, %v714
    %v717 = vunpack.c.l.s4 269488144
    %v718 = vunpack.c.0.s8 %v717
    %v719 = vlaneseq
    %v720 = vshrl.u32 %v719, 7
    %v721 = vsub.s32 %v718, %v720
    %v722 = vrot.slane %v410, %v721
    %v724 = vunpack.c.l.s4 842150450
    %v725 = vunpack.c.0.s8 %v724
    %v726 = vlaneseq
    %v727 = vshrl.u32 %v726, 7
    %v728 = vsub.s32 %v725, %v727
    %v729 = vrot.slane %v410, %v728
    %v731 = vunpack.c.l.s4 1414812756
    %v732 = vunpack.c.0.s8 %v731
    %v733 = vlaneseq
    %v734 = vshrl.u32 %v733, 7
    %v735 = vsub.s32 %v732, %v734
    %v736 = vrot.slane %v410, %v735
    %v738 = vunpack.c.l.s4 1987475062
    %v739 = vunpack.c.0.s8 %v738
    %v740 = vlaneseq
    %v741 = vshrl.u32 %v740, 7
    %v742 = vsub.s32 %v739, %v741
    %v743 = vrot.slane %v410, %v742
    %v745 = vunpack.c.l.s4 269488144
    %v746 = vunpack.c.0.s8 %v745
    %v747 = vlaneseq
    %v748 = vshrl.u32 %v747, 7
    %v749 = vsub.s32 %v746, %v748
    %v750 = vrot.slane %v413, %v749
    %v752 = vunpack.c.l.s4 842150450
    %v753 = vunpack.c.0.s8 %v752
    %v754 = vlaneseq
    %v755 = vshrl.u32 %v754, 7
    %v756 = vsub.s32 %v753, %v755
    %v757 = vrot.slane %v413, %v756
    %v759 = vunpack.c.l.s4 1414812756
    %v760 = vunpack.c.0.s8 %v759
    %v761 = vlaneseq
    %v762 = vshrl.u32 %v761, 7
    %v763 = vsub.s32 %v760, %v762
    %v764 = vrot.slane %v413, %v763
    %v766 = vunpack.c.l.s4 1987475062
    %v767 = vunpack.c.0.s8 %v766
    %v768 = vlaneseq
    %v769 = vshrl.u32 %v768, 7
    %v770 = vsub.s32 %v767, %v769
    %v771 = vrot.slane %v413, %v770
    %v773 = vunpack.c.l.s4 269488144
    %v774 = vunpack.c.0.s8 %v773
    %v775 = vlaneseq
    %v776 = vshrl.u32 %v775, 7
    %v777 = vsub.s32 %v774, %v776
    %v778 = vrot.slane %v416, %v777
    %v780 = vunpack.c.l.s4 842150450
    %v781 = vunpack.c.0.s8 %v780
    %v782 = vlaneseq
    %v783 = vshrl.u32 %v782, 7
    %v784 = vsub.s32 %v781, %v783
    %v785 = vrot.slane %v416, %v784
    %v787 = vunpack.c.l.s4 1414812756
    %v788 = vunpack.c.0.s8 %v787
    %v789 = vlaneseq
    %v790 = vshrl.u32 %v789, 7
    %v791 = vsub.s32 %v788, %v790
    %v792 = vrot.slane %v416, %v791
    %v794 = vunpack.c.l.s4 1987475062
    %v795 = vunpack.c.0.s8 %v794
    %v796 = vlaneseq
    %v797 = vshrl.u32 %v796, 7
    %v798 = vsub.s32 %v795, %v797
    %v799 = vrot.slane %v416, %v798
    %v801 = vunpack.c.l.s4 269488144
    %v802 = vunpack.c.0.s8 %v801
    %v803 = vlaneseq
    %v804 = vshrl.u32 %v803, 7
    %v805 = vsub.s32 %v802, %v804
    %v806 = vrot.slane %v419, %v805
    %v808 = vunpack.c.l.s4 842150450
    %v809 = vunpack.c.0.s8 %v808
    %v810 = vlaneseq
    %v811 = vshrl.u32 %v810, 7
    %v812 = vsub.s32 %v809, %v811
    %v813 = vrot.slane %v419, %v812
    %v815 = vunpack.c.l.s4 1414812756
    %v816 = vunpack.c.0.s8 %v815
    %v817 = vlaneseq
    %v818 = vshrl.u32 %v817, 7
    %v819 = vsub.s32 %v816, %v818
    %v820 = vrot.slane %v419, %v819
    %v822 = vunpack.c.l.s4 1987475062
    %v823 = vunpack.c.0.s8 %v822
    %v824 = vlaneseq
    %v825 = vshrl.u32 %v824, 7
    %v826 = vsub.s32 %v823, %v825
    %v827 = vrot.slane %v419, %v826
    %v829 = vunpack.c.l.s4 269488144
    %v830 = vunpack.c.0.s8 %v829
    %v831 = vlaneseq
    %v832 = vshrl.u32 %v831, 7
    %v833 = vsub.s32 %v830, %v832
    %v834 = vrot.slane %v422, %v833
    %v836 = vunpack.c.l.s4 842150450
    %v837 = vunpack.c.0.s8 %v836
    %v838 = vlaneseq
    %v839 = vshrl.u32 %v838, 7
    %v840 = vsub.s32 %v837, %v839
    %v841 = vrot.slane %v422, %v840
    %v843 = vunpack.c.l.s4 1414812756
    %v844 = vunpack.c.0.s8 %v843
    %v845 = vlaneseq
    %v846 = vshrl.u32 %v845, 7
    %v847 = vsub.s32 %v844, %v846
    %v848 = vrot.slane %v422, %v847
    %v850 = vunpack.c.l.s4 1987475062
    %v851 = vunpack.c.0.s8 %v850
    %v852 = vlaneseq
    %v853 = vshrl.u32 %v852, 7
    %v854 = vsub.s32 %v851, %v853
    %v855 = vrot.slane %v422, %v854
    %v857 = vunpack.c.l.s4 269488144
    %v858 = vunpack.c.0.s8 %v857
    %v859 = vlaneseq
    %v860 = vshrl.u32 %v859, 7
    %v861 = vsub.s32 %v858, %v860
    %v862 = vrot.slane %v425, %v861
    %v864 = vunpack.c.l.s4 842150450
    %v865 = vunpack.c.0.s8 %v864
    %v866 = vlaneseq
    %v867 = vshrl.u32 %v866, 7
    %v868 = vsub.s32 %v865, %v867
    %v869 = vrot.slane %v425, %v868
    %v871 = vunpack.c.l.s4 1414812756
    %v872 = vunpack.c.0.s8 %v871
    %v873 = vlaneseq
    %v874 = vshrl.u32 %v873, 7
    %v875 = vsub.s32 %v872, %v874
    %v876 = vrot.slane %v425, %v875
    %v878 = vunpack.c.l.s4 1987475062
    %v879 = vunpack.c.0.s8 %v878
    %v880 = vlaneseq
    %v881 = vshrl.u32 %v880, 7
    %v882 = vsub.s32 %v879, %v881
    %v883 = vrot.slane %v425, %v882
    %v885 = vunpack.c.l.s4 269488144
    %v886 = vunpack.c.0.s8 %v885
    %v887 = vlaneseq
    %v888 = vshrl.u32 %v887, 7
    %v889 = vsub.s32 %v886, %v888
    %v890 = vrot.slane %v428, %v889
    %v892 = vunpack.c.l.s4 842150450
    %v893 = vunpack.c.0.s8 %v892
    %v894 = vlaneseq
    %v895 = vshrl.u32 %v894, 7
    %v896 = vsub.s32 %v893, %v895
    %v897 = vrot.slane %v428, %v896
    %v899 = vunpack.c.l.s4 1414812756
    %v900 = vunpack.c.0.s8 %v899
    %v901 = vlaneseq
    %v902 = vshrl.u32 %v901, 7
    %v903 = vsub.s32 %v900, %v902
    %v904 = vrot.slane %v428, %v903
    %v906 = vunpack.c.l.s4 1987475062
    %v907 = vunpack.c.0.s8 %v906
    %v908 = vlaneseq
    %v909 = vshrl.u32 %v908, 7
    %v910 = vsub.s32 %v907, %v909
    %v911 = vrot.slane %v428, %v910
    %v913 = vunpack.c.l.s4 269488144
    %v914 = vunpack.c.0.s8 %v913
    %v915 = vlaneseq
    %v916 = vshrl.u32 %v915, 7
    %v917 = vsub.s32 %v914, %v916
    %v918 = vrot.slane %v431, %v917
    %v920 = vunpack.c.l.s4 842150450
    %v921 = vunpack.c.0.s8 %v920
    %v922 = vlaneseq
    %v923 = vshrl.u32 %v922, 7
    %v924 = vsub.s32 %v921, %v923
    %v925 = vrot.slane %v431, %v924
    %v927 = vunpack.c.l.s4 1414812756
    %v928 = vunpack.c.0.s8 %v927
    %v929 = vlaneseq
    %v930 = vshrl.u32 %v929, 7
    %v931 = vsub.s32 %v928, %v930
    %v932 = vrot.slane %v431, %v931
    %v934 = vunpack.c.l.s4 1987475062
    %v935 = vunpack.c.0.s8 %v934
    %v936 = vlaneseq
    %v937 = vshrl.u32 %v936, 7
    %v938 = vsub.s32 %v935, %v937
    %v939 = vrot.slane %v431, %v938
    %v941 = vunpack.c.l.s4 269488144
    %v942 = vunpack.c.0.s8 %v941
    %v943 = vlaneseq
    %v944 = vshrl.u32 %v943, 7
    %v945 = vsub.s32 %v942, %v944
    %v946 = vrot.slane %v434, %v945
    %v948 = vunpack.c.l.s4 842150450
    %v949 = vunpack.c.0.s8 %v948
    %v950 = vlaneseq
    %v951 = vshrl.u32 %v950, 7
    %v952 = vsub.s32 %v949, %v951
    %v953 = vrot.slane %v434, %v952
    %v955 = vunpack.c.l.s4 1414812756
    %v956 = vunpack.c.0.s8 %v955
    %v957 = vlaneseq
    %v958 = vshrl.u32 %v957, 7
    %v959 = vsub.s32 %v956, %v958
    %v960 = vrot.slane %v434, %v959
    %v962 = vunpack.c.l.s4 1987475062
    %v963 = vunpack.c.0.s8 %v962
    %v964 = vlaneseq
    %v965 = vshrl.u32 %v964, 7
    %v966 = vsub.s32 %v963, %v965
    %v967 = vrot.slane %v434, %v966
    %v969 = vunpack.c.l.s4 269488144
    %v970 = vunpack.c.0.s8 %v969
    %v971 = vlaneseq
    %v972 = vshrl.u32 %v971, 7
    %v973 = vsub.s32 %v970, %v972
    %v974 = vrot.slane %v437, %v973
    %v976 = vunpack.c.l.s4 842150450
    %v977 = vunpack.c.0.s8 %v976
    %v978 = vlaneseq
    %v979 = vshrl.u32 %v978, 7
    %v980 = vsub.s32 %v977, %v979
    %v981 = vrot.slane %v437, %v980
    %v983 = vunpack.c.l.s4 1414812756
    %v984 = vunpack.c.0.s8 %v983
    %v985 = vlaneseq
    %v986 = vshrl.u32 %v985, 7
    %v987 = vsub.s32 %v984, %v986
    %v988 = vrot.slane %v437, %v987
    %v990 = vunpack.c.l.s4 1987475062
    %v991 = vunpack.c.0.s8 %v990
    %v992 = vlaneseq
    %v993 = vshrl.u32 %v992, 7
    %v994 = vsub.s32 %v991, %v993
    %v995 = vrot.slane %v437, %v994
    %v997 = vunpack.c.l.s4 269488144
    %v998 = vunpack.c.0.s8 %v997
    %v999 = vlaneseq
    %v1000 = vshrl.u32 %v999, 7
    %v1001 = vsub.s32 %v998, %v1000
    %v1002 = vrot.slane %v440, %v1001
    %v1004 = vunpack.c.l.s4 842150450
    %v1005 = vunpack.c.0.s8 %v1004
    %v1006 = vlaneseq
    %v1007 = vshrl.u32 %v1006, 7
    %v1008 = vsub.s32 %v1005, %v1007
    %v1009 = vrot.slane %v440, %v1008
    %v1011 = vunpack.c.l.s4 1414812756
    %v1012 = vunpack.c.0.s8 %v1011
    %v1013 = vlaneseq
    %v1014 = vshrl.u32 %v1013, 7
    %v1015 = vsub.s32 %v1012, %v1014
    %v1016 = vrot.slane %v440, %v1015
    %v1018 = vunpack.c.l.s4 1987475062
    %v1019 = vunpack.c.0.s8 %v1018
    %v1020 = vlaneseq
    %v1021 = vshrl.u32 %v1020, 7
    %v1022 = vsub.s32 %v1019, %v1021
    %v1023 = vrot.slane %v440, %v1022
    %v1025 = vunpack.c.l.s4 269488144
    %v1026 = vunpack.c.0.s8 %v1025
    %v1027 = vlaneseq
    %v1028 = vshrl.u32 %v1027, 7
    %v1029 = vsub.s32 %v1026, %v1028
    %v1030 = vrot.slane %v443, %v1029
    %v1032 = vunpack.c.l.s4 842150450
    %v1033 = vunpack.c.0.s8 %v1032
    %v1034 = vlaneseq
    %v1035 = vshrl.u32 %v1034, 7
    %v1036 = vsub.s32 %v1033, %v1035
    %v1037 = vrot.slane %v443, %v1036
    %v1039 = vunpack.c.l.s4 1414812756
    %v1040 = vunpack.c.0.s8 %v1039
    %v1041 = vlaneseq
    %v1042 = vshrl.u32 %v1041, 7
    %v1043 = vsub.s32 %v1040, %v1042
    %v1044 = vrot.slane %v443, %v1043
    %v1046 = vunpack.c.l.s4 1987475062
    %v1047 = vunpack.c.0.s8 %v1046
    %v1048 = vlaneseq
    %v1049 = vshrl.u32 %v1048, 7
    %v1050 = vsub.s32 %v1047, %v1049
    %v1051 = vrot.slane %v443, %v1050
    %v1053 = vunpack.c.l.s4 269488144
    %v1054 = vunpack.c.0.s8 %v1053
    %v1055 = vlaneseq
    %v1056 = vshrl.u32 %v1055, 7
    %v1057 = vsub.s32 %v1054, %v1056
    %v1058 = vrot.slane %v446, %v1057
    %v1060 = vunpack.c.l.s4 842150450
    %v1061 = vunpack.c.0.s8 %v1060
    %v1062 = vlaneseq
    %v1063 = vshrl.u32 %v1062, 7
    %v1064 = vsub.s32 %v1061, %v1063
    %v1065 = vrot.slane %v446, %v1064
    %v1067 = vunpack.c.l.s4 1414812756
    %v1068 = vunpack.c.0.s8 %v1067
    %v1069 = vlaneseq
    %v1070 = vshrl.u32 %v1069, 7
    %v1071 = vsub.s32 %v1068, %v1070
    %v1072 = vrot.slane %v446, %v1071
    %v1074 = vunpack.c.l.s4 1987475062
    %v1075 = vunpack.c.0.s8 %v1074
    %v1076 = vlaneseq
    %v1077 = vshrl.u32 %v1076, 7
    %v1078 = vsub.s32 %v1075, %v1077
    %v1079 = vrot.slane %v446, %v1078
    %v1081 = vunpack.c.l.s4 269488144
    %v1082 = vunpack.c.0.s8 %v1081
    %v1083 = vlaneseq
    %v1084 = vshrl.u32 %v1083, 7
    %v1085 = vsub.s32 %v1082, %v1084
    %v1086 = vrot.slane %v449, %v1085
    %v1088 = vunpack.c.l.s4 842150450
    %v1089 = vunpack.c.0.s8 %v1088
    %v1090 = vlaneseq
    %v1091 = vshrl.u32 %v1090, 7
    %v1092 = vsub.s32 %v1089, %v1091
    %v1093 = vrot.slane %v449, %v1092
    %v1095 = vunpack.c.l.s4 1414812756
    %v1096 = vunpack.c.0.s8 %v1095
    %v1097 = vlaneseq
    %v1098 = vshrl.u32 %v1097, 7
    %v1099 = vsub.s32 %v1096, %v1098
    %v1100 = vrot.slane %v449, %v1099
    %v1102 = vunpack.c.l.s4 1987475062
    %v1103 = vunpack.c.0.s8 %v1102
    %v1104 = vlaneseq
    %v1105 = vshrl.u32 %v1104, 7
    %v1106 = vsub.s32 %v1103, %v1105
    %v1107 = vrot.slane %v449, %v1106
    %v1109 = vunpack.c.l.s4 269488144
    %v1110 = vunpack.c.0.s8 %v1109
    %v1111 = vlaneseq
    %v1112 = vshrl.u32 %v1111, 7
    %v1113 = vsub.s32 %v1110, %v1112
    %v1114 = vrot.slane %v452, %v1113
    %v1116 = vunpack.c.l.s4 842150450
    %v1117 = vunpack.c.0.s8 %v1116
    %v1118 = vlaneseq
    %v1119 = vshrl.u32 %v1118, 7
    %v1120 = vsub.s32 %v1117, %v1119
    %v1121 = vrot.slane %v452, %v1120
    %v1123 = vunpack.c.l.s4 1414812756
    %v1124 = vunpack.c.0.s8 %v1123
    %v1125 = vlaneseq
    %v1126 = vshrl.u32 %v1125, 7
    %v1127 = vsub.s32 %v1124, %v1126
    %v1128 = vrot.slane %v452, %v1127
    %v1130 = vunpack.c.l.s4 1987475062
    %v1131 = vunpack.c.0.s8 %v1130
    %v1132 = vlaneseq
    %v1133 = vshrl.u32 %v1132, 7
    %v1134 = vsub.s32 %v1131, %v1133
    %v1135 = vrot.slane %v452, %v1134
    %v1137 = vunpack.c.l.s4 269488144
    %v1138 = vunpack.c.0.s8 %v1137
    %v1139 = vlaneseq
    %v1140 = vshrl.u32 %v1139, 7
    %v1141 = vsub.s32 %v1138, %v1140
    %v1142 = vrot.slane %v455, %v1141
    %v1144 = vunpack.c.l.s4 842150450
    %v1145 = vunpack.c.0.s8 %v1144
    %v1146 = vlaneseq
    %v1147 = vshrl.u32 %v1146, 7
    %v1148 = vsub.s32 %v1145, %v1147
    %v1149 = vrot.slane %v455, %v1148
    %v1151 = vunpack.c.l.s4 1414812756
    %v1152 = vunpack.c.0.s8 %v1151
    %v1153 = vlaneseq
    %v1154 = vshrl.u32 %v1153, 7
    %v1155 = vsub.s32 %v1152, %v1154
    %v1156 = vrot.slane %v455, %v1155
    %v1158 = vunpack.c.l.s4 1987475062
    %v1159 = vunpack.c.0.s8 %v1158
    %v1160 = vlaneseq
    %v1161 = vshrl.u32 %v1160, 7
    %v1162 = vsub.s32 %v1159, %v1161
    %v1163 = vrot.slane %v455, %v1162
    %v1165 = vunpack.c.l.s4 269488144
    %v1166 = vunpack.c.0.s8 %v1165
    %v1167 = vlaneseq
    %v1168 = vshrl.u32 %v1167, 7
    %v1169 = vsub.s32 %v1166, %v1168
    %v1170 = vrot.slane %v458, %v1169
    %v1172 = vunpack.c.l.s4 842150450
    %v1173 = vunpack.c.0.s8 %v1172
    %v1174 = vlaneseq
    %v1175 = vshrl.u32 %v1174, 7
    %v1176 = vsub.s32 %v1173, %v1175
    %v1177 = vrot.slane %v458, %v1176
    %v1179 = vunpack.c.l.s4 1414812756
    %v1180 = vunpack.c.0.s8 %v1179
    %v1181 = vlaneseq
    %v1182 = vshrl.u32 %v1181, 7
    %v1183 = vsub.s32 %v1180, %v1182
    %v1184 = vrot.slane %v458, %v1183
    %v1186 = vunpack.c.l.s4 1987475062
    %v1187 = vunpack.c.0.s8 %v1186
    %v1188 = vlaneseq
    %v1189 = vshrl.u32 %v1188, 7
    %v1190 = vsub.s32 %v1187, %v1189
    %v1191 = vrot.slane %v458, %v1190
    %v1193 = vunpack.c.l.s4 269488144
    %v1194 = vunpack.c.0.s8 %v1193
    %v1195 = vlaneseq
    %v1196 = vshrl.u32 %v1195, 7
    %v1197 = vsub.s32 %v1194, %v1196
    %v1198 = vrot.slane %v461, %v1197
    %v1200 = vunpack.c.l.s4 842150450
    %v1201 = vunpack.c.0.s8 %v1200
    %v1202 = vlaneseq
    %v1203 = vshrl.u32 %v1202, 7
    %v1204 = vsub.s32 %v1201, %v1203
    %v1205 = vrot.slane %v461, %v1204
    %v1207 = vunpack.c.l.s4 1414812756
    %v1208 = vunpack.c.0.s8 %v1207
    %v1209 = vlaneseq
    %v1210 = vshrl.u32 %v1209, 7
    %v1211 = vsub.s32 %v1208, %v1210
    %v1212 = vrot.slane %v461, %v1211
    %v1214 = vunpack.c.l.s4 1987475062
    %v1215 = vunpack.c.0.s8 %v1214
    %v1216 = vlaneseq
    %v1217 = vshrl.u32 %v1216, 7
    %v1218 = vsub.s32 %v1215, %v1217
    %v1219 = vrot.slane %v461, %v1218
    %v1221 = vunpack.c.l.s4 269488144
    %v1222 = vunpack.c.0.s8 %v1221
    %v1223 = vlaneseq
    %v1224 = vshrl.u32 %v1223, 7
    %v1225 = vsub.s32 %v1222, %v1224
    %v1226 = vrot.slane %v464, %v1225
    %v1228 = vunpack.c.l.s4 842150450
    %v1229 = vunpack.c.0.s8 %v1228
    %v1230 = vlaneseq
    %v1231 = vshrl.u32 %v1230, 7
    %v1232 = vsub.s32 %v1229, %v1231
    %v1233 = vrot.slane %v464, %v1232
    %v1235 = vunpack.c.l.s4 1414812756
    %v1236 = vunpack.c.0.s8 %v1235
    %v1237 = vlaneseq
    %v1238 = vshrl.u32 %v1237, 7
    %v1239 = vsub.s32 %v1236, %v1238
    %v1240 = vrot.slane %v464, %v1239
    %v1242 = vunpack.c.l.s4 1987475062
    %v1243 = vunpack.c.0.s8 %v1242
    %v1244 = vlaneseq
    %v1245 = vshrl.u32 %v1244, 7
    %v1246 = vsub.s32 %v1243, %v1245
    %v1247 = vrot.slane %v464, %v1246
    %v1249 = vunpack.c.l.s4 269488144
    %v1250 = vunpack.c.0.s8 %v1249
    %v1251 = vlaneseq
    %v1252 = vshrl.u32 %v1251, 7
    %v1253 = vsub.s32 %v1250, %v1252
    %v1254 = vrot.slane %v467, %v1253
    %v1256 = vunpack.c.l.s4 842150450
    %v1257 = vunpack.c.0.s8 %v1256
    %v1258 = vlaneseq
    %v1259 = vshrl.u32 %v1258, 7
    %v1260 = vsub.s32 %v1257, %v1259
    %v1261 = vrot.slane %v467, %v1260
    %v1263 = vunpack.c.l.s4 1414812756
    %v1264 = vunpack.c.0.s8 %v1263
    %v1265 = vlaneseq
    %v1266 = vshrl.u32 %v1265, 7
    %v1267 = vsub.s32 %v1264, %v1266
    %v1268 = vrot.slane %v467, %v1267
    %v1270 = vunpack.c.l.s4 1987475062
    %v1271 = vunpack.c.0.s8 %v1270
    %v1272 = vlaneseq
    %v1273 = vshrl.u32 %v1272, 7
    %v1274 = vsub.s32 %v1271, %v1273
    %v1275 = vrot.slane %v467, %v1274
    %v1277 = vunpack.c.l.s4 269488144
    %v1278 = vunpack.c.0.s8 %v1277
    %v1279 = vlaneseq
    %v1280 = vshrl.u32 %v1279, 7
    %v1281 = vsub.s32 %v1278, %v1280
    %v1282 = vrot.slane %v470, %v1281
    %v1284 = vunpack.c.l.s4 842150450
    %v1285 = vunpack.c.0.s8 %v1284
    %v1286 = vlaneseq
    %v1287 = vshrl.u32 %v1286, 7
    %v1288 = vsub.s32 %v1285, %v1287
    %v1289 = vrot.slane %v470, %v1288
    %v1291 = vunpack.c.l.s4 1414812756
    %v1292 = vunpack.c.0.s8 %v1291
    %v1293 = vlaneseq
    %v1294 = vshrl.u32 %v1293, 7
    %v1295 = vsub.s32 %v1292, %v1294
    %v1296 = vrot.slane %v470, %v1295
    %v1298 = vunpack.c.l.s4 1987475062
    %v1299 = vunpack.c.0.s8 %v1298
    %v1300 = vlaneseq
    %v1301 = vshrl.u32 %v1300, 7
    %v1302 = vsub.s32 %v1299, %v1301
    %v1303 = vrot.slane %v470, %v1302
    %v1305 = vunpack.c.l.s4 269488144
    %v1306 = vunpack.c.0.s8 %v1305
    %v1307 = vlaneseq
    %v1308 = vshrl.u32 %v1307, 7
    %v1309 = vsub.s32 %v1306, %v1308
    %v1310 = vrot.slane %v473, %v1309
    %v1312 = vunpack.c.l.s4 842150450
    %v1313 = vunpack.c.0.s8 %v1312
    %v1314 = vlaneseq
    %v1315 = vshrl.u32 %v1314, 7
    %v1316 = vsub.s32 %v1313, %v1315
    %v1317 = vrot.slane %v473, %v1316
    %v1319 = vunpack.c.l.s4 1414812756
    %v1320 = vunpack.c.0.s8 %v1319
    %v1321 = vlaneseq
    %v1322 = vshrl.u32 %v1321, 7
    %v1323 = vsub.s32 %v1320, %v1322
    %v1324 = vrot.slane %v473, %v1323
    %v1326 = vunpack.c.l.s4 1987475062
    %v1327 = vunpack.c.0.s8 %v1326
    %v1328 = vlaneseq
    %v1329 = vshrl.u32 %v1328, 7
    %v1330 = vsub.s32 %v1327, %v1329
    %v1331 = vrot.slane %v473, %v1330
    %v1333 = vunpack.c.l.s4 269488144
    %v1334 = vunpack.c.0.s8 %v1333
    %v1335 = vlaneseq
    %v1336 = vshrl.u32 %v1335, 7
    %v1337 = vsub.s32 %v1334, %v1336
    %v1338 = vrot.slane %v476, %v1337
    %v1340 = vunpack.c.l.s4 842150450
    %v1341 = vunpack.c.0.s8 %v1340
    %v1342 = vlaneseq
    %v1343 = vshrl.u32 %v1342, 7
    %v1344 = vsub.s32 %v1341, %v1343
    %v1345 = vrot.slane %v476, %v1344
    %v1347 = vunpack.c.l.s4 1414812756
    %v1348 = vunpack.c.0.s8 %v1347
    %v1349 = vlaneseq
    %v1350 = vshrl.u32 %v1349, 7
    %v1351 = vsub.s32 %v1348, %v1350
    %v1352 = vrot.slane %v476, %v1351
    %v1354 = vunpack.c.l.s4 1987475062
    %v1355 = vunpack.c.0.s8 %v1354
    %v1356 = vlaneseq
    %v1357 = vshrl.u32 %v1356, 7
    %v1358 = vsub.s32 %v1355, %v1357
    %v1359 = vrot.slane %v476, %v1358
    %v1361 = vunpack.c.l.s4 269488144
    %v1362 = vunpack.c.0.s8 %v1361
    %v1363 = vlaneseq
    %v1364 = vshrl.u32 %v1363, 7
    %v1365 = vsub.s32 %v1362, %v1364
    %v1366 = vrot.slane %v479, %v1365
    %v1368 = vunpack.c.l.s4 842150450
    %v1369 = vunpack.c.0.s8 %v1368
    %v1370 = vlaneseq
    %v1371 = vshrl.u32 %v1370, 7
    %v1372 = vsub.s32 %v1369, %v1371
    %v1373 = vrot.slane %v479, %v1372
    %v1375 = vunpack.c.l.s4 1414812756
    %v1376 = vunpack.c.0.s8 %v1375
    %v1377 = vlaneseq
    %v1378 = vshrl.u32 %v1377, 7
    %v1379 = vsub.s32 %v1376, %v1378
    %v1380 = vrot.slane %v479, %v1379
    %v1382 = vunpack.c.l.s4 1987475062
    %v1383 = vunpack.c.0.s8 %v1382
    %v1384 = vlaneseq
    %v1385 = vshrl.u32 %v1384, 7
    %v1386 = vsub.s32 %v1383, %v1385
    %v1387 = vrot.slane %v479, %v1386
    %v1389 = vunpack.c.l.s4 269488144
    %v1390 = vunpack.c.0.s8 %v1389
    %v1391 = vlaneseq
    %v1392 = vshrl.u32 %v1391, 7
    %v1393 = vsub.s32 %v1390, %v1392
    %v1394 = vrot.slane %v482, %v1393
    %v1396 = vunpack.c.l.s4 842150450
    %v1397 = vunpack.c.0.s8 %v1396
    %v1398 = vlaneseq
    %v1399 = vshrl.u32 %v1398, 7
    %v1400 = vsub.s32 %v1397, %v1399
    %v1401 = vrot.slane %v482, %v1400
    %v1403 = vunpack.c.l.s4 1414812756
    %v1404 = vunpack.c.0.s8 %v1403
    %v1405 = vlaneseq
    %v1406 = vshrl.u32 %v1405, 7
    %v1407 = vsub.s32 %v1404, %v1406
    %v1408 = vrot.slane %v482, %v1407
    %v1410 = vunpack.c.l.s4 1987475062
    %v1411 = vunpack.c.0.s8 %v1410
    %v1412 = vlaneseq
    %v1413 = vshrl.u32 %v1412, 7
    %v1414 = vsub.s32 %v1411, %v1413
    %v1415 = vrot.slane %v482, %v1414
    %v1417 = vunpack.c.l.s4 269488144
    %v1418 = vunpack.c.0.s8 %v1417
    %v1419 = vlaneseq
    %v1420 = vshrl.u32 %v1419, 7
    %v1421 = vsub.s32 %v1418, %v1420
    %v1422 = vrot.slane %v485, %v1421
    %v1424 = vunpack.c.l.s4 842150450
    %v1425 = vunpack.c.0.s8 %v1424
    %v1426 = vlaneseq
    %v1427 = vshrl.u32 %v1426, 7
    %v1428 = vsub.s32 %v1425, %v1427
    %v1429 = vrot.slane %v485, %v1428
    %v1431 = vunpack.c.l.s4 1414812756
    %v1432 = vunpack.c.0.s8 %v1431
    %v1433 = vlaneseq
    %v1434 = vshrl.u32 %v1433, 7
    %v1435 = vsub.s32 %v1432, %v1434
    %v1436 = vrot.slane %v485, %v1435
    %v1438 = vunpack.c.l.s4 1987475062
    %v1439 = vunpack.c.0.s8 %v1438
    %v1440 = vlaneseq
    %v1441 = vshrl.u32 %v1440, 7
    %v1442 = vsub.s32 %v1439, %v1441
    %v1443 = vrot.slane %v485, %v1442
    %v1445 = vunpack.c.l.s4 269488144
    %v1446 = vunpack.c.0.s8 %v1445
    %v1447 = vlaneseq
    %v1448 = vshrl.u32 %v1447, 7
    %v1449 = vsub.s32 %v1446, %v1448
    %v1450 = vrot.slane %v488, %v1449
    %v1452 = vunpack.c.l.s4 842150450
    %v1453 = vunpack.c.0.s8 %v1452
    %v1454 = vlaneseq
    %v1455 = vshrl.u32 %v1454, 7
    %v1456 = vsub.s32 %v1453, %v1455
    %v1457 = vrot.slane %v488, %v1456
    %v1459 = vunpack.c.l.s4 1414812756
    %v1460 = vunpack.c.0.s8 %v1459
    %v1461 = vlaneseq
    %v1462 = vshrl.u32 %v1461, 7
    %v1463 = vsub.s32 %v1460, %v1462
    %v1464 = vrot.slane %v488, %v1463
    %v1466 = vunpack.c.l.s4 1987475062
    %v1467 = vunpack.c.0.s8 %v1466
    %v1468 = vlaneseq
    %v1469 = vshrl.u32 %v1468, 7
    %v1470 = vsub.s32 %v1467, %v1469
    %v1471 = vrot.slane %v488, %v1470
    %v1473 = vunpack.c.l.s4 269488144
    %v1474 = vunpack.c.0.s8 %v1473
    %v1475 = vlaneseq
    %v1476 = vshrl.u32 %v1475, 7
    %v1477 = vsub.s32 %v1474, %v1476
    %v1478 = vrot.slane %v491, %v1477
    %v1480 = vunpack.c.l.s4 842150450
    %v1481 = vunpack.c.0.s8 %v1480
    %v1482 = vlaneseq
    %v1483 = vshrl.u32 %v1482, 7
    %v1484 = vsub.s32 %v1481, %v1483
    %v1485 = vrot.slane %v491, %v1484
    %v1487 = vunpack.c.l.s4 1414812756
    %v1488 = vunpack.c.0.s8 %v1487
    %v1489 = vlaneseq
    %v1490 = vshrl.u32 %v1489, 7
    %v1491 = vsub.s32 %v1488, %v1490
    %v1492 = vrot.slane %v491, %v1491
    %v1494 = vunpack.c.l.s4 1987475062
    %v1495 = vunpack.c.0.s8 %v1494
    %v1496 = vlaneseq
    %v1497 = vshrl.u32 %v1496, 7
    %v1498 = vsub.s32 %v1495, %v1497
    %v1499 = vrot.slane %v491, %v1498
    %v1501 = vunpack.c.l.s4 269488144
    %v1502 = vunpack.c.0.s8 %v1501
    %v1503 = vlaneseq
    %v1504 = vshrl.u32 %v1503, 7
    %v1505 = vsub.s32 %v1502, %v1504
    %v1506 = vrot.slane %v494, %v1505
    %v1508 = vunpack.c.l.s4 842150450
    %v1509 = vunpack.c.0.s8 %v1508
    %v1510 = vlaneseq
    %v1511 = vshrl.u32 %v1510, 7
    %v1512 = vsub.s32 %v1509, %v1511
    %v1513 = vrot.slane %v494, %v1512
    %v1515 = vunpack.c.l.s4 1414812756
    %v1516 = vunpack.c.0.s8 %v1515
    %v1517 = vlaneseq
    %v1518 = vshrl.u32 %v1517, 7
    %v1519 = vsub.s32 %v1516, %v1518
    %v1520 = vrot.slane %v494, %v1519
    %v1522 = vunpack.c.l.s4 1987475062
    %v1523 = vunpack.c.0.s8 %v1522
    %v1524 = vlaneseq
    %v1525 = vshrl.u32 %v1524, 7
    %v1526 = vsub.s32 %v1523, %v1525
    %v1527 = vrot.slane %v494, %v1526
    %v1529 = vunpack.c.l.s4 269488144
    %v1530 = vunpack.c.0.s8 %v1529
    %v1531 = vlaneseq
    %v1532 = vshrl.u32 %v1531, 7
    %v1533 = vsub.s32 %v1530, %v1532
    %v1534 = vrot.slane %v497, %v1533
    %v1536 = vunpack.c.l.s4 842150450
    %v1537 = vunpack.c.0.s8 %v1536
    %v1538 = vlaneseq
    %v1539 = vshrl.u32 %v1538, 7
    %v1540 = vsub.s32 %v1537, %v1539
    %v1541 = vrot.slane %v497, %v1540
    %v1543 = vunpack.c.l.s4 1414812756
    %v1544 = vunpack.c.0.s8 %v1543
    %v1545 = vlaneseq
    %v1546 = vshrl.u32 %v1545, 7
    %v1547 = vsub.s32 %v1544, %v1546
    %v1548 = vrot.slane %v497, %v1547
    %v1550 = vunpack.c.l.s4 1987475062
    %v1551 = vunpack.c.0.s8 %v1550
    %v1552 = vlaneseq
    %v1553 = vshrl.u32 %v1552, 7
    %v1554 = vsub.s32 %v1551, %v1553
    %v1555 = vrot.slane %v497, %v1554
    %v1557 = vunpack.c.l.s4 269488144
    %v1558 = vunpack.c.0.s8 %v1557
    %v1559 = vlaneseq
    %v1560 = vshrl.u32 %v1559, 7
    %v1561 = vsub.s32 %v1558, %v1560
    %v1562 = vrot.slane %v500, %v1561
    %v1564 = vunpack.c.l.s4 842150450
    %v1565 = vunpack.c.0.s8 %v1564
    %v1566 = vlaneseq
    %v1567 = vshrl.u32 %v1566, 7
    %v1568 = vsub.s32 %v1565, %v1567
    %v1569 = vrot.slane %v500, %v1568
    %v1571 = vunpack.c.l.s4 1414812756
    %v1572 = vunpack.c.0.s8 %v1571
    %v1573 = vlaneseq
    %v1574 = vshrl.u32 %v1573, 7
    %v1575 = vsub.s32 %v1572, %v1574
    %v1576 = vrot.slane %v500, %v1575
    %v1578 = vunpack.c.l.s4 1987475062
    %v1579 = vunpack.c.0.s8 %v1578
    %v1580 = vlaneseq
    %v1581 = vshrl.u32 %v1580, 7
    %v1582 = vsub.s32 %v1579, %v1581
    %v1583 = vrot.slane %v500, %v1582
    %v1585 = vunpack.c.l.s4 269488144
    %v1586 = vunpack.c.0.s8 %v1585
    %v1587 = vlaneseq
    %v1588 = vshrl.u32 %v1587, 7
    %v1589 = vsub.s32 %v1586, %v1588
    %v1590 = vrot.slane %v503, %v1589
    %v1592 = vunpack.c.l.s4 842150450
    %v1593 = vunpack.c.0.s8 %v1592
    %v1594 = vlaneseq
    %v1595 = vshrl.u32 %v1594, 7
    %v1596 = vsub.s32 %v1593, %v1595
    %v1597 = vrot.slane %v503, %v1596
    %v1599 = vunpack.c.l.s4 1414812756
    %v1600 = vunpack.c.0.s8 %v1599
    %v1601 = vlaneseq
    %v1602 = vshrl.u32 %v1601, 7
    %v1603 = vsub.s32 %v1600, %v1602
    %v1604 = vrot.slane %v503, %v1603
    %v1606 = vunpack.c.l.s4 1987475062
    %v1607 = vunpack.c.0.s8 %v1606
    %v1608 = vlaneseq
    %v1609 = vshrl.u32 %v1608, 7
    %v1610 = vsub.s32 %v1607, %v1609
    %v1611 = vrot.slane %v503, %v1610
    %v1613 = vunpack.c.l.s4 269488144
    %v1614 = vunpack.c.0.s8 %v1613
    %v1615 = vlaneseq
    %v1616 = vshrl.u32 %v1615, 7
    %v1617 = vsub.s32 %v1614, %v1616
    %v1618 = vrot.slane %v506, %v1617
    %v1620 = vunpack.c.l.s4 842150450
    %v1621 = vunpack.c.0.s8 %v1620
    %v1622 = vlaneseq
    %v1623 = vshrl.u32 %v1622, 7
    %v1624 = vsub.s32 %v1621, %v1623
    %v1625 = vrot.slane %v506, %v1624
    %v1627 = vunpack.c.l.s4 1414812756
    %v1628 = vunpack.c.0.s8 %v1627
    %v1629 = vlaneseq
    %v1630 = vshrl.u32 %v1629, 7
    %v1631 = vsub.s32 %v1628, %v1630
    %v1632 = vrot.slane %v506, %v1631
    %v1634 = vunpack.c.l.s4 1987475062
    %v1635 = vunpack.c.0.s8 %v1634
    %v1636 = vlaneseq
    %v1637 = vshrl.u32 %v1636, 7
    %v1638 = vsub.s32 %v1635, %v1637
    %v1639 = vrot.slane %v506, %v1638
    %v1641 = vunpack.c.l.s4 269488144
    %v1642 = vunpack.c.0.s8 %v1641
    %v1643 = vlaneseq
    %v1644 = vshrl.u32 %v1643, 7
    %v1645 = vsub.s32 %v1642, %v1644
    %v1646 = vrot.slane %v509, %v1645
    %v1648 = vunpack.c.l.s4 842150450
    %v1649 = vunpack.c.0.s8 %v1648
    %v1650 = vlaneseq
    %v1651 = vshrl.u32 %v1650, 7
    %v1652 = vsub.s32 %v1649, %v1651
    %v1653 = vrot.slane %v509, %v1652
    %v1655 = vunpack.c.l.s4 1414812756
    %v1656 = vunpack.c.0.s8 %v1655
    %v1657 = vlaneseq
    %v1658 = vshrl.u32 %v1657, 7
    %v1659 = vsub.s32 %v1656, %v1658
    %v1660 = vrot.slane %v509, %v1659
    %v1662 = vunpack.c.l.s4 1987475062
    %v1663 = vunpack.c.0.s8 %v1662
    %v1664 = vlaneseq
    %v1665 = vshrl.u32 %v1664, 7
    %v1666 = vsub.s32 %v1663, %v1665
    %v1667 = vrot.slane %v509, %v1666
    %v1669 = vunpack.c.l.s4 269488144
    %v1670 = vunpack.c.0.s8 %v1669
    %v1671 = vlaneseq
    %v1672 = vshrl.u32 %v1671, 7
    %v1673 = vsub.s32 %v1670, %v1672
    %v1674 = vrot.slane %v512, %v1673
    %v1676 = vunpack.c.l.s4 842150450
    %v1677 = vunpack.c.0.s8 %v1676
    %v1678 = vlaneseq
    %v1679 = vshrl.u32 %v1678, 7
    %v1680 = vsub.s32 %v1677, %v1679
    %v1681 = vrot.slane %v512, %v1680
    %v1683 = vunpack.c.l.s4 1414812756
    %v1684 = vunpack.c.0.s8 %v1683
    %v1685 = vlaneseq
    %v1686 = vshrl.u32 %v1685, 7
    %v1687 = vsub.s32 %v1684, %v1686
    %v1688 = vrot.slane %v512, %v1687
    %v1690 = vunpack.c.l.s4 1987475062
    %v1691 = vunpack.c.0.s8 %v1690
    %v1692 = vlaneseq
    %v1693 = vshrl.u32 %v1692, 7
    %v1694 = vsub.s32 %v1691, %v1693
    %v1695 = vrot.slane %v512, %v1694
    %v1697 = vunpack.c.l.s4 269488144
    %v1698 = vunpack.c.0.s8 %v1697
    %v1699 = vlaneseq
    %v1700 = vshrl.u32 %v1699, 7
    %v1701 = vsub.s32 %v1698, %v1700
    %v1702 = vrot.slane %v515, %v1701
    %v1704 = vunpack.c.l.s4 842150450
    %v1705 = vunpack.c.0.s8 %v1704
    %v1706 = vlaneseq
    %v1707 = vshrl.u32 %v1706, 7
    %v1708 = vsub.s32 %v1705, %v1707
    %v1709 = vrot.slane %v515, %v1708
    %v1711 = vunpack.c.l.s4 1414812756
    %v1712 = vunpack.c.0.s8 %v1711
    %v1713 = vlaneseq
    %v1714 = vshrl.u32 %v1713, 7
    %v1715 = vsub.s32 %v1712, %v1714
    %v1716 = vrot.slane %v515, %v1715
    %v1718 = vunpack.c.l.s4 1987475062
    %v1719 = vunpack.c.0.s8 %v1718
    %v1720 = vlaneseq
    %v1721 = vshrl.u32 %v1720, 7
    %v1722 = vsub.s32 %v1719, %v1721
    %v1723 = vrot.slane %v515, %v1722
    %v1725 = vunpack.c.l.s4 269488144
    %v1726 = vunpack.c.0.s8 %v1725
    %v1727 = vlaneseq
    %v1728 = vshrl.u32 %v1727, 7
    %v1729 = vsub.s32 %v1726, %v1728
    %v1730 = vrot.slane %v518, %v1729
    %v1732 = vunpack.c.l.s4 842150450
    %v1733 = vunpack.c.0.s8 %v1732
    %v1734 = vlaneseq
    %v1735 = vshrl.u32 %v1734, 7
    %v1736 = vsub.s32 %v1733, %v1735
    %v1737 = vrot.slane %v518, %v1736
    %v1739 = vunpack.c.l.s4 1414812756
    %v1740 = vunpack.c.0.s8 %v1739
    %v1741 = vlaneseq
    %v1742 = vshrl.u32 %v1741, 7
    %v1743 = vsub.s32 %v1740, %v1742
    %v1744 = vrot.slane %v518, %v1743
    %v1746 = vunpack.c.l.s4 1987475062
    %v1747 = vunpack.c.0.s8 %v1746
    %v1748 = vlaneseq
    %v1749 = vshrl.u32 %v1748, 7
    %v1750 = vsub.s32 %v1747, %v1749
    %v1751 = vrot.slane %v518, %v1750
    %v1753 = vunpack.c.l.s4 269488144
    %v1754 = vunpack.c.0.s8 %v1753
    %v1755 = vlaneseq
    %v1756 = vshrl.u32 %v1755, 7
    %v1757 = vsub.s32 %v1754, %v1756
    %v1758 = vrot.slane %v521, %v1757
    %v1760 = vunpack.c.l.s4 842150450
    %v1761 = vunpack.c.0.s8 %v1760
    %v1762 = vlaneseq
    %v1763 = vshrl.u32 %v1762, 7
    %v1764 = vsub.s32 %v1761, %v1763
    %v1765 = vrot.slane %v521, %v1764
    %v1767 = vunpack.c.l.s4 1414812756
    %v1768 = vunpack.c.0.s8 %v1767
    %v1769 = vlaneseq
    %v1770 = vshrl.u32 %v1769, 7
    %v1771 = vsub.s32 %v1768, %v1770
    %v1772 = vrot.slane %v521, %v1771
    %v1774 = vunpack.c.l.s4 1987475062
    %v1775 = vunpack.c.0.s8 %v1774
    %v1776 = vlaneseq
    %v1777 = vshrl.u32 %v1776, 7
    %v1778 = vsub.s32 %v1775, %v1777
    %v1779 = vrot.slane %v521, %v1778
    %v1781 = vunpack.c.l.s4 269488144
    %v1782 = vunpack.c.0.s8 %v1781
    %v1783 = vlaneseq
    %v1784 = vshrl.u32 %v1783, 7
    %v1785 = vsub.s32 %v1782, %v1784
    %v1786 = vrot.slane %v524, %v1785
    %v1788 = vunpack.c.l.s4 842150450
    %v1789 = vunpack.c.0.s8 %v1788
    %v1790 = vlaneseq
    %v1791 = vshrl.u32 %v1790, 7
    %v1792 = vsub.s32 %v1789, %v1791
    %v1793 = vrot.slane %v524, %v1792
    %v1795 = vunpack.c.l.s4 1414812756
    %v1796 = vunpack.c.0.s8 %v1795
    %v1797 = vlaneseq
    %v1798 = vshrl.u32 %v1797, 7
    %v1799 = vsub.s32 %v1796, %v1798
    %v1800 = vrot.slane %v524, %v1799
    %v1802 = vunpack.c.l.s4 1987475062
    %v1803 = vunpack.c.0.s8 %v1802
    %v1804 = vlaneseq
    %v1805 = vshrl.u32 %v1804, 7
    %v1806 = vsub.s32 %v1803, %v1805
    %v1807 = vrot.slane %v524, %v1806
    %v1809 = vunpack.c.l.s4 269488144
    %v1810 = vunpack.c.0.s8 %v1809
    %v1811 = vlaneseq
    %v1812 = vshrl.u32 %v1811, 7
    %v1813 = vsub.s32 %v1810, %v1812
    %v1814 = vrot.slane %v527, %v1813
    %v1816 = vunpack.c.l.s4 842150450
    %v1817 = vunpack.c.0.s8 %v1816
    %v1818 = vlaneseq
    %v1819 = vshrl.u32 %v1818, 7
    %v1820 = vsub.s32 %v1817, %v1819
    %v1821 = vrot.slane %v527, %v1820
    %v1823 = vunpack.c.l.s4 1414812756
    %v1824 = vunpack.c.0.s8 %v1823
    %v1825 = vlaneseq
    %v1826 = vshrl.u32 %v1825, 7
    %v1827 = vsub.s32 %v1824, %v1826
    %v1828 = vrot.slane %v527, %v1827
    %v1830 = vunpack.c.l.s4 1987475062
    %v1831 = vunpack.c.0.s8 %v1830
    %v1832 = vlaneseq
    %v1833 = vshrl.u32 %v1832, 7
    %v1834 = vsub.s32 %v1831, %v1833
    %v1835 = vrot.slane %v527, %v1834
    %v1837 = vunpack.c.l.s4 269488144
    %v1838 = vunpack.c.0.s8 %v1837
    %v1839 = vlaneseq
    %v1840 = vshrl.u32 %v1839, 7
    %v1841 = vsub.s32 %v1838, %v1840
    %v1842 = vrot.slane %v530, %v1841
    %v1844 = vunpack.c.l.s4 842150450
    %v1845 = vunpack.c.0.s8 %v1844
    %v1846 = vlaneseq
    %v1847 = vshrl.u32 %v1846, 7
    %v1848 = vsub.s32 %v1845, %v1847
    %v1849 = vrot.slane %v530, %v1848
    %v1851 = vunpack.c.l.s4 1414812756
    %v1852 = vunpack.c.0.s8 %v1851
    %v1853 = vlaneseq
    %v1854 = vshrl.u32 %v1853, 7
    %v1855 = vsub.s32 %v1852, %v1854
    %v1856 = vrot.slane %v530, %v1855
    %v1858 = vunpack.c.l.s4 1987475062
    %v1859 = vunpack.c.0.s8 %v1858
    %v1860 = vlaneseq
    %v1861 = vshrl.u32 %v1860, 7
    %v1862 = vsub.s32 %v1859, %v1861
    %v1863 = vrot.slane %v530, %v1862
    %v1865 = vunpack.c.l.s4 269488144
    %v1866 = vunpack.c.0.s8 %v1865
    %v1867 = vlaneseq
    %v1868 = vshrl.u32 %v1867, 7
    %v1869 = vsub.s32 %v1866, %v1868
    %v1870 = vrot.slane %v533, %v1869
    %v1872 = vunpack.c.l.s4 842150450
    %v1873 = vunpack.c.0.s8 %v1872
    %v1874 = vlaneseq
    %v1875 = vshrl.u32 %v1874, 7
    %v1876 = vsub.s32 %v1873, %v1875
    %v1877 = vrot.slane %v533, %v1876
    %v1879 = vunpack.c.l.s4 1414812756
    %v1880 = vunpack.c.0.s8 %v1879
    %v1881 = vlaneseq
    %v1882 = vshrl.u32 %v1881, 7
    %v1883 = vsub.s32 %v1880, %v1882
    %v1884 = vrot.slane %v533, %v1883
    %v1886 = vunpack.c.l.s4 1987475062
    %v1887 = vunpack.c.0.s8 %v1886
    %v1888 = vlaneseq
    %v1889 = vshrl.u32 %v1888, 7
    %v1890 = vsub.s32 %v1887, %v1889
    %v1891 = vrot.slane %v533, %v1890
    %v1893 = vunpack.c.l.s4 269488144
    %v1894 = vunpack.c.0.s8 %v1893
    %v1895 = vlaneseq
    %v1896 = vshrl.u32 %v1895, 7
    %v1897 = vsub.s32 %v1894, %v1896
    %v1898 = vrot.slane %v536, %v1897
    %v1900 = vunpack.c.l.s4 842150450
    %v1901 = vunpack.c.0.s8 %v1900
    %v1902 = vlaneseq
    %v1903 = vshrl.u32 %v1902, 7
    %v1904 = vsub.s32 %v1901, %v1903
    %v1905 = vrot.slane %v536, %v1904
    %v1907 = vunpack.c.l.s4 1414812756
    %v1908 = vunpack.c.0.s8 %v1907
    %v1909 = vlaneseq
    %v1910 = vshrl.u32 %v1909, 7
    %v1911 = vsub.s32 %v1908, %v1910
    %v1912 = vrot.slane %v536, %v1911
    %v1914 = vunpack.c.l.s4 1987475062
    %v1915 = vunpack.c.0.s8 %v1914
    %v1916 = vlaneseq
    %v1917 = vshrl.u32 %v1916, 7
    %v1918 = vsub.s32 %v1915, %v1917
    %v1919 = vrot.slane %v536, %v1918
    %v1921 = vunpack.c.l.s4 269488144
    %v1922 = vunpack.c.0.s8 %v1921
    %v1923 = vlaneseq
    %v1924 = vshrl.u32 %v1923, 7
    %v1925 = vsub.s32 %v1922, %v1924
    %v1926 = vrot.slane %v539, %v1925
    %v1928 = vunpack.c.l.s4 842150450
    %v1929 = vunpack.c.0.s8 %v1928
    %v1930 = vlaneseq
    %v1931 = vshrl.u32 %v1930, 7
    %v1932 = vsub.s32 %v1929, %v1931
    %v1933 = vrot.slane %v539, %v1932
    %v1935 = vunpack.c.l.s4 1414812756
    %v1936 = vunpack.c.0.s8 %v1935
    %v1937 = vlaneseq
    %v1938 = vshrl.u32 %v1937, 7
    %v1939 = vsub.s32 %v1936, %v1938
    %v1940 = vrot.slane %v539, %v1939
    %v1942 = vunpack.c.l.s4 1987475062
    %v1943 = vunpack.c.0.s8 %v1942
    %v1944 = vlaneseq
    %v1945 = vshrl.u32 %v1944, 7
    %v1946 = vsub.s32 %v1943, %v1945
    %v1947 = vrot.slane %v539, %v1946
    %v1949 = vunpack.c.l.s4 269488144
    %v1950 = vunpack.c.0.s8 %v1949
    %v1951 = vlaneseq
    %v1952 = vshrl.u32 %v1951, 7
    %v1953 = vsub.s32 %v1950, %v1952
    %v1954 = vrot.slane %v542, %v1953
    %v1956 = vunpack.c.l.s4 842150450
    %v1957 = vunpack.c.0.s8 %v1956
    %v1958 = vlaneseq
    %v1959 = vshrl.u32 %v1958, 7
    %v1960 = vsub.s32 %v1957, %v1959
    %v1961 = vrot.slane %v542, %v1960
    %v1963 = vunpack.c.l.s4 1414812756
    %v1964 = vunpack.c.0.s8 %v1963
    %v1965 = vlaneseq
    %v1966 = vshrl.u32 %v1965, 7
    %v1967 = vsub.s32 %v1964, %v1966
    %v1968 = vrot.slane %v542, %v1967
    %v1970 = vunpack.c.l.s4 1987475062
    %v1971 = vunpack.c.0.s8 %v1970
    %v1972 = vlaneseq
    %v1973 = vshrl.u32 %v1972, 7
    %v1974 = vsub.s32 %v1971, %v1973
    %v1975 = vrot.slane %v542, %v1974
    %v1977 = vunpack.c.l.s4 269488144
    %v1978 = vunpack.c.0.s8 %v1977
    %v1979 = vlaneseq
    %v1980 = vshrl.u32 %v1979, 7
    %v1981 = vsub.s32 %v1978, %v1980
    %v1982 = vrot.slane %v545, %v1981
    %v1984 = vunpack.c.l.s4 842150450
    %v1985 = vunpack.c.0.s8 %v1984
    %v1986 = vlaneseq
    %v1987 = vshrl.u32 %v1986, 7
    %v1988 = vsub.s32 %v1985, %v1987
    %v1989 = vrot.slane %v545, %v1988
    %v1991 = vunpack.c.l.s4 1414812756
    %v1992 = vunpack.c.0.s8 %v1991
    %v1993 = vlaneseq
    %v1994 = vshrl.u32 %v1993, 7
    %v1995 = vsub.s32 %v1992, %v1994
    %v1996 = vrot.slane %v545, %v1995
    %v1998 = vunpack.c.l.s4 1987475062
    %v1999 = vunpack.c.0.s8 %v1998
    %v2000 = vlaneseq
    %v2001 = vshrl.u32 %v2000, 7
    %v2002 = vsub.s32 %v1999, %v2001
    %v2003 = vrot.slane %v545, %v2002
    %v2005 = vunpack.c.l.s4 269488144
    %v2006 = vunpack.c.0.s8 %v2005
    %v2007 = vlaneseq
    %v2008 = vshrl.u32 %v2007, 7
    %v2009 = vsub.s32 %v2006, %v2008
    %v2010 = vrot.slane %v548, %v2009
    %v2012 = vunpack.c.l.s4 842150450
    %v2013 = vunpack.c.0.s8 %v2012
    %v2014 = vlaneseq
    %v2015 = vshrl.u32 %v2014, 7
    %v2016 = vsub.s32 %v2013, %v2015
    %v2017 = vrot.slane %v548, %v2016
    %v2019 = vunpack.c.l.s4 1414812756
    %v2020 = vunpack.c.0.s8 %v2019
    %v2021 = vlaneseq
    %v2022 = vshrl.u32 %v2021, 7
    %v2023 = vsub.s32 %v2020, %v2022
    %v2024 = vrot.slane %v548, %v2023
    %v2026 = vunpack.c.l.s4 1987475062
    %v2027 = vunpack.c.0.s8 %v2026
    %v2028 = vlaneseq
    %v2029 = vshrl.u32 %v2028, 7
    %v2030 = vsub.s32 %v2027, %v2029
    %v2031 = vrot.slane %v548, %v2030
    %v2033 = vunpack.c.l.s4 269488144
    %v2034 = vunpack.c.0.s8 %v2033
    %v2035 = vlaneseq
    %v2036 = vshrl.u32 %v2035, 7
    %v2037 = vsub.s32 %v2034, %v2036
    %v2038 = vrot.slane %v551, %v2037
    %v2040 = vunpack.c.l.s4 842150450
    %v2041 = vunpack.c.0.s8 %v2040
    %v2042 = vlaneseq
    %v2043 = vshrl.u32 %v2042, 7
    %v2044 = vsub.s32 %v2041, %v2043
    %v2045 = vrot.slane %v551, %v2044
    %v2047 = vunpack.c.l.s4 1414812756
    %v2048 = vunpack.c.0.s8 %v2047
    %v2049 = vlaneseq
    %v2050 = vshrl.u32 %v2049, 7
    %v2051 = vsub.s32 %v2048, %v2050
    %v2052 = vrot.slane %v551, %v2051
    %v2054 = vunpack.c.l.s4 1987475062
    %v2055 = vunpack.c.0.s8 %v2054
    %v2056 = vlaneseq
    %v2057 = vshrl.u32 %v2056, 7
    %v2058 = vsub.s32 %v2055, %v2057
    %v2059 = vrot.slane %v551, %v2058
    %v2061 = vunpack.c.l.s4 269488144
    %v2062 = vunpack.c.0.s8 %v2061
    %v2063 = vlaneseq
    %v2064 = vshrl.u32 %v2063, 7
    %v2065 = vsub.s32 %v2062, %v2064
    %v2066 = vrot.slane %v554, %v2065
    %v2068 = vunpack.c.l.s4 842150450
    %v2069 = vunpack.c.0.s8 %v2068
    %v2070 = vlaneseq
    %v2071 = vshrl.u32 %v2070, 7
    %v2072 = vsub.s32 %v2069, %v2071
    %v2073 = vrot.slane %v554, %v2072
    %v2075 = vunpack.c.l.s4 1414812756
    %v2076 = vunpack.c.0.s8 %v2075
    %v2077 = vlaneseq
    %v2078 = vshrl.u32 %v2077, 7
    %v2079 = vsub.s32 %v2076, %v2078
    %v2080 = vrot.slane %v554, %v2079
    %v2082 = vunpack.c.l.s4 1987475062
    %v2083 = vunpack.c.0.s8 %v2082
    %v2084 = vlaneseq
    %v2085 = vshrl.u32 %v2084, 7
    %v2086 = vsub.s32 %v2083, %v2085
    %v2087 = vrot.slane %v554, %v2086
    %v2089 = vunpack.c.l.s4 269488144
    %v2090 = vunpack.c.0.s8 %v2089
    %v2091 = vlaneseq
    %v2092 = vshrl.u32 %v2091, 7
    %v2093 = vsub.s32 %v2090, %v2092
    %v2094 = vrot.slane %v557, %v2093
    %v2096 = vunpack.c.l.s4 842150450
    %v2097 = vunpack.c.0.s8 %v2096
    %v2098 = vlaneseq
    %v2099 = vshrl.u32 %v2098, 7
    %v2100 = vsub.s32 %v2097, %v2099
    %v2101 = vrot.slane %v557, %v2100
    %v2103 = vunpack.c.l.s4 1414812756
    %v2104 = vunpack.c.0.s8 %v2103
    %v2105 = vlaneseq
    %v2106 = vshrl.u32 %v2105, 7
    %v2107 = vsub.s32 %v2104, %v2106
    %v2108 = vrot.slane %v557, %v2107
    %v2110 = vunpack.c.l.s4 1987475062
    %v2111 = vunpack.c.0.s8 %v2110
    %v2112 = vlaneseq
    %v2113 = vshrl.u32 %v2112, 7
    %v2114 = vsub.s32 %v2111, %v2113
    %v2115 = vrot.slane %v557, %v2114
    %v2117 = vunpack.c.l.s4 269488144
    %v2118 = vunpack.c.0.s8 %v2117
    %v2119 = vlaneseq
    %v2120 = vshrl.u32 %v2119, 7
    %v2121 = vsub.s32 %v2118, %v2120
    %v2122 = vrot.slane %v560, %v2121
    %v2124 = vunpack.c.l.s4 842150450
    %v2125 = vunpack.c.0.s8 %v2124
    %v2126 = vlaneseq
    %v2127 = vshrl.u32 %v2126, 7
    %v2128 = vsub.s32 %v2125, %v2127
    %v2129 = vrot.slane %v560, %v2128
    %v2131 = vunpack.c.l.s4 1414812756
    %v2132 = vunpack.c.0.s8 %v2131
    %v2133 = vlaneseq
    %v2134 = vshrl.u32 %v2133, 7
    %v2135 = vsub.s32 %v2132, %v2134
    %v2136 = vrot.slane %v560, %v2135
    %v2138 = vunpack.c.l.s4 1987475062
    %v2139 = vunpack.c.0.s8 %v2138
    %v2140 = vlaneseq
    %v2141 = vshrl.u32 %v2140, 7
    %v2142 = vsub.s32 %v2139, %v2141
    %v2143 = vrot.slane %v560, %v2142
    %v2145 = vunpack.c.l.s4 269488144
    %v2146 = vunpack.c.0.s8 %v2145
    %v2147 = vlaneseq
    %v2148 = vshrl.u32 %v2147, 7
    %v2149 = vsub.s32 %v2146, %v2148
    %v2150 = vrot.slane %v563, %v2149
    %v2152 = vunpack.c.l.s4 842150450
    %v2153 = vunpack.c.0.s8 %v2152
    %v2154 = vlaneseq
    %v2155 = vshrl.u32 %v2154, 7
    %v2156 = vsub.s32 %v2153, %v2155
    %v2157 = vrot.slane %v563, %v2156
    %v2159 = vunpack.c.l.s4 1414812756
    %v2160 = vunpack.c.0.s8 %v2159
    %v2161 = vlaneseq
    %v2162 = vshrl.u32 %v2161, 7
    %v2163 = vsub.s32 %v2160, %v2162
    %v2164 = vrot.slane %v563, %v2163
    %v2166 = vunpack.c.l.s4 1987475062
    %v2167 = vunpack.c.0.s8 %v2166
    %v2168 = vlaneseq
    %v2169 = vshrl.u32 %v2168, 7
    %v2170 = vsub.s32 %v2167, %v2169
    %v2171 = vrot.slane %v563, %v2170
    %v2173 = vunpack.c.l.s4 269488144
    %v2174 = vunpack.c.0.s8 %v2173
    %v2175 = vlaneseq
    %v2176 = vshrl.u32 %v2175, 7
    %v2177 = vsub.s32 %v2174, %v2176
    %v2178 = vrot.slane %v566, %v2177
    %v2180 = vunpack.c.l.s4 842150450
    %v2181 = vunpack.c.0.s8 %v2180
    %v2182 = vlaneseq
    %v2183 = vshrl.u32 %v2182, 7
    %v2184 = vsub.s32 %v2181, %v2183
    %v2185 = vrot.slane %v566, %v2184
    %v2187 = vunpack.c.l.s4 1414812756
    %v2188 = vunpack.c.0.s8 %v2187
    %v2189 = vlaneseq
    %v2190 = vshrl.u32 %v2189, 7
    %v2191 = vsub.s32 %v2188, %v2190
    %v2192 = vrot.slane %v566, %v2191
    %v2194 = vunpack.c.l.s4 1987475062
    %v2195 = vunpack.c.0.s8 %v2194
    %v2196 = vlaneseq
    %v2197 = vshrl.u32 %v2196, 7
    %v2198 = vsub.s32 %v2195, %v2197
    %v2199 = vrot.slane %v566, %v2198
    %v2201 = vunpack.c.l.s4 269488144
    %v2202 = vunpack.c.0.s8 %v2201
    %v2203 = vlaneseq
    %v2204 = vshrl.u32 %v2203, 7
    %v2205 = vsub.s32 %v2202, %v2204
    %v2206 = vrot.slane %v569, %v2205
    %v2208 = vunpack.c.l.s4 842150450
    %v2209 = vunpack.c.0.s8 %v2208
    %v2210 = vlaneseq
    %v2211 = vshrl.u32 %v2210, 7
    %v2212 = vsub.s32 %v2209, %v2211
    %v2213 = vrot.slane %v569, %v2212
    %v2215 = vunpack.c.l.s4 1414812756
    %v2216 = vunpack.c.0.s8 %v2215
    %v2217 = vlaneseq
    %v2218 = vshrl.u32 %v2217, 7
    %v2219 = vsub.s32 %v2216, %v2218
    %v2220 = vrot.slane %v569, %v2219
    %v2222 = vunpack.c.l.s4 1987475062
    %v2223 = vunpack.c.0.s8 %v2222
    %v2224 = vlaneseq
    %v2225 = vshrl.u32 %v2224, 7
    %v2226 = vsub.s32 %v2223, %v2225
    %v2227 = vrot.slane %v569, %v2226
    %v2229 = vunpack.c.l.s4 269488144
    %v2230 = vunpack.c.0.s8 %v2229
    %v2231 = vlaneseq
    %v2232 = vshrl.u32 %v2231, 7
    %v2233 = vsub.s32 %v2230, %v2232
    %v2234 = vrot.slane %v572, %v2233
    %v2236 = vunpack.c.l.s4 842150450
    %v2237 = vunpack.c.0.s8 %v2236
    %v2238 = vlaneseq
    %v2239 = vshrl.u32 %v2238, 7
    %v2240 = vsub.s32 %v2237, %v2239
    %v2241 = vrot.slane %v572, %v2240
    %v2243 = vunpack.c.l.s4 1414812756
    %v2244 = vunpack.c.0.s8 %v2243
    %v2245 = vlaneseq
    %v2246 = vshrl.u32 %v2245, 7
    %v2247 = vsub.s32 %v2244, %v2246
    %v2248 = vrot.slane %v572, %v2247
    %v2250 = vunpack.c.l.s4 1987475062
    %v2251 = vunpack.c.0.s8 %v2250
    %v2252 = vlaneseq
    %v2253 = vshrl.u32 %v2252, 7
    %v2254 = vsub.s32 %v2251, %v2253
    %v2255 = vrot.slane %v572, %v2254
    %v2257 = vunpack.c.l.s4 269488144
    %v2258 = vunpack.c.0.s8 %v2257
    %v2259 = vlaneseq
    %v2260 = vshrl.u32 %v2259, 7
    %v2261 = vsub.s32 %v2258, %v2260
    %v2262 = vrot.slane %v575, %v2261
    %v2264 = vunpack.c.l.s4 842150450
    %v2265 = vunpack.c.0.s8 %v2264
    %v2266 = vlaneseq
    %v2267 = vshrl.u32 %v2266, 7
    %v2268 = vsub.s32 %v2265, %v2267
    %v2269 = vrot.slane %v575, %v2268
    %v2271 = vunpack.c.l.s4 1414812756
    %v2272 = vunpack.c.0.s8 %v2271
    %v2273 = vlaneseq
    %v2274 = vshrl.u32 %v2273, 7
    %v2275 = vsub.s32 %v2272, %v2274
    %v2276 = vrot.slane %v575, %v2275
    %v2278 = vunpack.c.l.s4 1987475062
    %v2279 = vunpack.c.0.s8 %v2278
    %v2280 = vlaneseq
    %v2281 = vshrl.u32 %v2280, 7
    %v2282 = vsub.s32 %v2279, %v2281
    %v2283 = vrot.slane %v575, %v2282
    %v2285 = vunpack.c.l.s4 269488144
    %v2286 = vunpack.c.0.s8 %v2285
    %v2287 = vlaneseq
    %v2288 = vshrl.u32 %v2287, 7
    %v2289 = vsub.s32 %v2286, %v2288
    %v2290 = vrot.slane %v578, %v2289
    %v2292 = vunpack.c.l.s4 842150450
    %v2293 = vunpack.c.0.s8 %v2292
    %v2294 = vlaneseq
    %v2295 = vshrl.u32 %v2294, 7
    %v2296 = vsub.s32 %v2293, %v2295
    %v2297 = vrot.slane %v578, %v2296
    %v2299 = vunpack.c.l.s4 1414812756
    %v2300 = vunpack.c.0.s8 %v2299
    %v2301 = vlaneseq
    %v2302 = vshrl.u32 %v2301, 7
    %v2303 = vsub.s32 %v2300, %v2302
    %v2304 = vrot.slane %v578, %v2303
    %v2306 = vunpack.c.l.s4 1987475062
    %v2307 = vunpack.c.0.s8 %v2306
    %v2308 = vlaneseq
    %v2309 = vshrl.u32 %v2308, 7
    %v2310 = vsub.s32 %v2307, %v2309
    %v2311 = vrot.slane %v578, %v2310
    %v2313 = vunpack.c.l.s4 269488144
    %v2314 = vunpack.c.0.s8 %v2313
    %v2315 = vlaneseq
    %v2316 = vshrl.u32 %v2315, 7
    %v2317 = vsub.s32 %v2314, %v2316
    %v2318 = vrot.slane %v581, %v2317
    %v2320 = vunpack.c.l.s4 842150450
    %v2321 = vunpack.c.0.s8 %v2320
    %v2322 = vlaneseq
    %v2323 = vshrl.u32 %v2322, 7
    %v2324 = vsub.s32 %v2321, %v2323
    %v2325 = vrot.slane %v581, %v2324
    %v2327 = vunpack.c.l.s4 1414812756
    %v2328 = vunpack.c.0.s8 %v2327
    %v2329 = vlaneseq
    %v2330 = vshrl.u32 %v2329, 7
    %v2331 = vsub.s32 %v2328, %v2330
    %v2332 = vrot.slane %v581, %v2331
    %v2334 = vunpack.c.l.s4 1987475062
    %v2335 = vunpack.c.0.s8 %v2334
    %v2336 = vlaneseq
    %v2337 = vshrl.u32 %v2336, 7
    %v2338 = vsub.s32 %v2335, %v2337
    %v2339 = vrot.slane %v581, %v2338
    %v2341 = vunpack.c.l.s4 269488144
    %v2342 = vunpack.c.0.s8 %v2341
    %v2343 = vlaneseq
    %v2344 = vshrl.u32 %v2343, 7
    %v2345 = vsub.s32 %v2342, %v2344
    %v2346 = vrot.slane %v584, %v2345
    %v2348 = vunpack.c.l.s4 842150450
    %v2349 = vunpack.c.0.s8 %v2348
    %v2350 = vlaneseq
    %v2351 = vshrl.u32 %v2350, 7
    %v2352 = vsub.s32 %v2349, %v2351
    %v2353 = vrot.slane %v584, %v2352
    %v2355 = vunpack.c.l.s4 1414812756
    %v2356 = vunpack.c.0.s8 %v2355
    %v2357 = vlaneseq
    %v2358 = vshrl.u32 %v2357, 7
    %v2359 = vsub.s32 %v2356, %v2358
    %v2360 = vrot.slane %v584, %v2359
    %v2362 = vunpack.c.l.s4 1987475062
    %v2363 = vunpack.c.0.s8 %v2362
    %v2364 = vlaneseq
    %v2365 = vshrl.u32 %v2364, 7
    %v2366 = vsub.s32 %v2363, %v2365
    %v2367 = vrot.slane %v584, %v2366
    %v2369 = vunpack.c.l.s4 269488144
    %v2370 = vunpack.c.0.s8 %v2369
    %v2371 = vlaneseq
    %v2372 = vshrl.u32 %v2371, 7
    %v2373 = vsub.s32 %v2370, %v2372
    %v2374 = vrot.slane %v587, %v2373
    %v2376 = vunpack.c.l.s4 842150450
    %v2377 = vunpack.c.0.s8 %v2376
    %v2378 = vlaneseq
    %v2379 = vshrl.u32 %v2378, 7
    %v2380 = vsub.s32 %v2377, %v2379
    %v2381 = vrot.slane %v587, %v2380
    %v2383 = vunpack.c.l.s4 1414812756
    %v2384 = vunpack.c.0.s8 %v2383
    %v2385 = vlaneseq
    %v2386 = vshrl.u32 %v2385, 7
    %v2387 = vsub.s32 %v2384, %v2386
    %v2388 = vrot.slane %v587, %v2387
    %v2390 = vunpack.c.l.s4 1987475062
    %v2391 = vunpack.c.0.s8 %v2390
    %v2392 = vlaneseq
    %v2393 = vshrl.u32 %v2392, 7
    %v2394 = vsub.s32 %v2391, %v2393
    %v2395 = vrot.slane %v587, %v2394
    %v2397 = vunpack.c.l.s4 269488144
    %v2398 = vunpack.c.0.s8 %v2397
    %v2399 = vlaneseq
    %v2400 = vshrl.u32 %v2399, 7
    %v2401 = vsub.s32 %v2398, %v2400
    %v2402 = vrot.slane %v590, %v2401
    %v2404 = vunpack.c.l.s4 842150450
    %v2405 = vunpack.c.0.s8 %v2404
    %v2406 = vlaneseq
    %v2407 = vshrl.u32 %v2406, 7
    %v2408 = vsub.s32 %v2405, %v2407
    %v2409 = vrot.slane %v590, %v2408
    %v2411 = vunpack.c.l.s4 1414812756
    %v2412 = vunpack.c.0.s8 %v2411
    %v2413 = vlaneseq
    %v2414 = vshrl.u32 %v2413, 7
    %v2415 = vsub.s32 %v2412, %v2414
    %v2416 = vrot.slane %v590, %v2415
    %v2418 = vunpack.c.l.s4 1987475062
    %v2419 = vunpack.c.0.s8 %v2418
    %v2420 = vlaneseq
    %v2421 = vshrl.u32 %v2420, 7
    %v2422 = vsub.s32 %v2419, %v2421
    %v2423 = vrot.slane %v590, %v2422
    %v2425 = vunpack.c.l.s4 269488144
    %v2426 = vunpack.c.0.s8 %v2425
    %v2427 = vlaneseq
    %v2428 = vshrl.u32 %v2427, 7
    %v2429 = vsub.s32 %v2426, %v2428
    %v2430 = vrot.slane %v593, %v2429
    %v2432 = vunpack.c.l.s4 842150450
    %v2433 = vunpack.c.0.s8 %v2432
    %v2434 = vlaneseq
    %v2435 = vshrl.u32 %v2434, 7
    %v2436 = vsub.s32 %v2433, %v2435
    %v2437 = vrot.slane %v593, %v2436
    %v2439 = vunpack.c.l.s4 1414812756
    %v2440 = vunpack.c.0.s8 %v2439
    %v2441 = vlaneseq
    %v2442 = vshrl.u32 %v2441, 7
    %v2443 = vsub.s32 %v2440, %v2442
    %v2444 = vrot.slane %v593, %v2443
    %v2446 = vunpack.c.l.s4 1987475062
    %v2447 = vunpack.c.0.s8 %v2446
    %v2448 = vlaneseq
    %v2449 = vshrl.u32 %v2448, 7
    %v2450 = vsub.s32 %v2447, %v2449
    %v2451 = vrot.slane %v593, %v2450
    %v2452 = vcombine.low %v666, %v673
    %v2453 = vcombine.low %v680, %v687
    %v2455 = vunpack.c.l.s4 1983009808
    %v2456 = vunpack.c.0.s8 %v2455
    %v2457 = vlaneseq
    %v2458 = vshrl.u32 %v2457, 7
    %v2459 = vsub.s32 %v2456, %v2458
    %v2460 = vrot.slane %v2452, %v2459
    %v2462 = vunpack.c.l.s4 1983009808
    %v2463 = vunpack.c.0.s8 %v2462
    %v2464 = vlaneseq
    %v2465 = vshrl.u32 %v2464, 7
    %v2466 = vsub.s32 %v2463, %v2465
    %v2467 = vrot.slane %v2453, %v2466
    %v2468 = vcombine.low %v2460, %v2467
    %v2469 = vcombine.low %v694, %v701
    %v2470 = vcombine.low %v708, %v715
    %v2472 = vunpack.c.l.s4 1983009808
    %v2473 = vunpack.c.0.s8 %v2472
    %v2474 = vlaneseq
    %v2475 = vshrl.u32 %v2474, 7
    %v2476 = vsub.s32 %v2473, %v2475
    %v2477 = vrot.slane %v2469, %v2476
    %v2479 = vunpack.c.l.s4 1983009808
    %v2480 = vunpack.c.0.s8 %v2479
    %v2481 = vlaneseq
    %v2482 = vshrl.u32 %v2481, 7
    %v2483 = vsub.s32 %v2480, %v2482
    %v2484 = vrot.slane %v2470, %v2483
    %v2485 = vcombine.low %v2477, %v2484
    %v2486 = vcombine.low %v722, %v729
    %v2487 = vcombine.low %v736, %v743
    %v2489 = vunpack.c.l.s4 1983009808
    %v2490 = vunpack.c.0.s8 %v2489
    %v2491 = vlaneseq
    %v2492 = vshrl.u32 %v2491, 7
    %v2493 = vsub.s32 %v2490, %v2492
    %v2494 = vrot.slane %v2486, %v2493
    %v2496 = vunpack.c.l.s4 1983009808
    %v2497 = vunpack.c.0.s8 %v2496
    %v2498 = vlaneseq
    %v2499 = vshrl.u32 %v2498, 7
    %v2500 = vsub.s32 %v2497, %v2499
    %v2501 = vrot.slane %v2487, %v2500
    %v2502 = vcombine.low %v2494, %v2501
    %v2503 = vcombine.low %v750, %v757
    %v2504 = vcombine.low %v764, %v771
    %v2506 = vunpack.c.l.s4 1983009808
    %v2507 = vunpack.c.0.s8 %v2506
    %v2508 = vlaneseq
    %v2509 = vshrl.u32 %v2508, 7
    %v2510 = vsub.s32 %v2507, %v2509
    %v2511 = vrot.slane %v2503, %v2510
    %v2513 = vunpack.c.l.s4 1983009808
    %v2514 = vunpack.c.0.s8 %v2513
    %v2515 = vlaneseq
    %v2516 = vshrl.u32 %v2515, 7
    %v2517 = vsub.s32 %v2514, %v2516
    %v2518 = vrot.slane %v2504, %v2517
    %v2519 = vcombine.low %v2511, %v2518
    %v2520 = vcombine.low %v778, %v785
    %v2521 = vcombine.low %v792, %v799
    %v2523 = vunpack.c.l.s4 1983009808
    %v2524 = vunpack.c.0.s8 %v2523
    %v2525 = vlaneseq
    %v2526 = vshrl.u32 %v2525, 7
    %v2527 = vsub.s32 %v2524, %v2526
    %v2528 = vrot.slane %v2520, %v2527
    %v2530 = vunpack.c.l.s4 1983009808
    %v2531 = vunpack.c.0.s8 %v2530
    %v2532 = vlaneseq
    %v2533 = vshrl.u32 %v2532, 7
    %v2534 = vsub.s32 %v2531, %v2533
    %v2535 = vrot.slane %v2521, %v2534
    %v2536 = vcombine.low %v2528, %v2535
    %v2537 = vcombine.low %v806, %v813
    %v2538 = vcombine.low %v820, %v827
    %v2540 = vunpack.c.l.s4 1983009808
    %v2541 = vunpack.c.0.s8 %v2540
    %v2542 = vlaneseq
    %v2543 = vshrl.u32 %v2542, 7
    %v2544 = vsub.s32 %v2541, %v2543
    %v2545 = vrot.slane %v2537, %v2544
    %v2547 = vunpack.c.l.s4 1983009808
    %v2548 = vunpack.c.0.s8 %v2547
    %v2549 = vlaneseq
    %v2550 = vshrl.u32 %v2549, 7
    %v2551 = vsub.s32 %v2548, %v2550
    %v2552 = vrot.slane %v2538, %v2551
    %v2553 = vcombine.low %v2545, %v2552
    %v2554 = vcombine.low %v834, %v841
    %v2555 = vcombine.low %v848, %v855
    %v2557 = vunpack.c.l.s4 1983009808
    %v2558 = vunpack.c.0.s8 %v2557
    %v2559 = vlaneseq
    %v2560 = vshrl.u32 %v2559, 7
    %v2561 = vsub.s32 %v2558, %v2560
    %v2562 = vrot.slane %v2554, %v2561
    %v2564 = vunpack.c.l.s4 1983009808
    %v2565 = vunpack.c.0.s8 %v2564
    %v2566 = vlaneseq
    %v2567 = vshrl.u32 %v2566, 7
    %v2568 = vsub.s32 %v2565, %v2567
    %v2569 = vrot.slane %v2555, %v2568
    %v2570 = vcombine.low %v2562, %v2569
    %v2571 = vcombine.low %v862, %v869
    %v2572 = vcombine.low %v876, %v883
    %v2574 = vunpack.c.l.s4 1983009808
    %v2575 = vunpack.c.0.s8 %v2574
    %v2576 = vlaneseq
    %v2577 = vshrl.u32 %v2576, 7
    %v2578 = vsub.s32 %v2575, %v2577
    %v2579 = vrot.slane %v2571, %v2578
    %v2581 = vunpack.c.l.s4 1983009808
    %v2582 = vunpack.c.0.s8 %v2581
    %v2583 = vlaneseq
    %v2584 = vshrl.u32 %v2583, 7
    %v2585 = vsub.s32 %v2582, %v2584
    %v2586 = vrot.slane %v2572, %v2585
    %v2587 = vcombine.low %v2579, %v2586
    %v2588 = vcombine.low %v890, %v897
    %v2589 = vcombine.low %v904, %v911
    %v2591 = vunpack.c.l.s4 1983009808
    %v2592 = vunpack.c.0.s8 %v2591
    %v2593 = vlaneseq
    %v2594 = vshrl.u32 %v2593, 7
    %v2595 = vsub.s32 %v2592, %v2594
    %v2596 = vrot.slane %v2588, %v2595
    %v2598 = vunpack.c.l.s4 1983009808
    %v2599 = vunpack.c.0.s8 %v2598
    %v2600 = vlaneseq
    %v2601 = vshrl.u32 %v2600, 7
    %v2602 = vsub.s32 %v2599, %v2601
    %v2603 = vrot.slane %v2589, %v2602
    %v2604 = vcombine.low %v2596, %v2603
    %v2605 = vcombine.low %v918, %v925
    %v2606 = vcombine.low %v932, %v939
    %v2608 = vunpack.c.l.s4 1983009808
    %v2609 = vunpack.c.0.s8 %v2608
    %v2610 = vlaneseq
    %v2611 = vshrl.u32 %v2610, 7
    %v2612 = vsub.s32 %v2609, %v2611
    %v2613 = vrot.slane %v2605, %v2612
    %v2615 = vunpack.c.l.s4 1983009808
    %v2616 = vunpack.c.0.s8 %v2615
    %v2617 = vlaneseq
    %v2618 = vshrl.u32 %v2617, 7
    %v2619 = vsub.s32 %v2616, %v2618
    %v2620 = vrot.slane %v2606, %v2619
    %v2621 = vcombine.low %v2613, %v2620
    %v2622 = vcombine.low %v946, %v953
    %v2623 = vcombine.low %v960, %v967
    %v2625 = vunpack.c.l.s4 1983009808
    %v2626 = vunpack.c.0.s8 %v2625
    %v2627 = vlaneseq
    %v2628 = vshrl.u32 %v2627, 7
    %v2629 = vsub.s32 %v2626, %v2628
    %v2630 = vrot.slane %v2622, %v2629
    %v2632 = vunpack.c.l.s4 1983009808
    %v2633 = vunpack.c.0.s8 %v2632
    %v2634 = vlaneseq
    %v2635 = vshrl.u32 %v2634, 7
    %v2636 = vsub.s32 %v2633, %v2635
    %v2637 = vrot.slane %v2623, %v2636
    %v2638 = vcombine.low %v2630, %v2637
    %v2639 = vcombine.low %v974, %v981
    %v2640 = vcombine.low %v988, %v995
    %v2642 = vunpack.c.l.s4 1983009808
    %v2643 = vunpack.c.0.s8 %v2642
    %v2644 = vlaneseq
    %v2645 = vshrl.u32 %v2644, 7
    %v2646 = vsub.s32 %v2643, %v2645
    %v2647 = vrot.slane %v2639, %v2646
    %v2649 = vunpack.c.l.s4 1983009808
    %v2650 = vunpack.c.0.s8 %v2649
    %v2651 = vlaneseq
    %v2652 = vshrl.u32 %v2651, 7
    %v2653 = vsub.s32 %v2650, %v2652
    %v2654 = vrot.slane %v2640, %v2653
    %v2655 = vcombine.low %v2647, %v2654
    %v2656 = vcombine.low %v1002, %v1009
    %v2657 = vcombine.low %v1016, %v1023
    %v2659 = vunpack.c.l.s4 1983009808
    %v2660 = vunpack.c.0.s8 %v2659
    %v2661 = vlaneseq
    %v2662 = vshrl.u32 %v2661, 7
    %v2663 = vsub.s32 %v2660, %v2662
    %v2664 = vrot.slane %v2656, %v2663
    %v2666 = vunpack.c.l.s4 1983009808
    %v2667 = vunpack.c.0.s8 %v2666
    %v2668 = vlaneseq
    %v2669 = vshrl.u32 %v2668, 7
    %v2670 = vsub.s32 %v2667, %v2669
    %v2671 = vrot.slane %v2657, %v2670
    %v2672 = vcombine.low %v2664, %v2671
    %v2673 = vcombine.low %v1030, %v1037
    %v2674 = vcombine.low %v1044, %v1051
    %v2676 = vunpack.c.l.s4 1983009808
    %v2677 = vunpack.c.0.s8 %v2676
    %v2678 = vlaneseq
    %v2679 = vshrl.u32 %v2678, 7
    %v2680 = vsub.s32 %v2677, %v2679
    %v2681 = vrot.slane %v2673, %v2680
    %v2683 = vunpack.c.l.s4 1983009808
    %v2684 = vunpack.c.0.s8 %v2683
    %v2685 = vlaneseq
    %v2686 = vshrl.u32 %v2685, 7
    %v2687 = vsub.s32 %v2684, %v2686
    %v2688 = vrot.slane %v2674, %v2687
    %v2689 = vcombine.low %v2681, %v2688
    %v2690 = vcombine.low %v1058, %v1065
    %v2691 = vcombine.low %v1072, %v1079
    %v2693 = vunpack.c.l.s4 1983009808
    %v2694 = vunpack.c.0.s8 %v2693
    %v2695 = vlaneseq
    %v2696 = vshrl.u32 %v2695, 7
    %v2697 = vsub.s32 %v2694, %v2696
    %v2698 = vrot.slane %v2690, %v2697
    %v2700 = vunpack.c.l.s4 1983009808
    %v2701 = vunpack.c.0.s8 %v2700
    %v2702 = vlaneseq
    %v2703 = vshrl.u32 %v2702, 7
    %v2704 = vsub.s32 %v2701, %v2703
    %v2705 = vrot.slane %v2691, %v2704
    %v2706 = vcombine.low %v2698, %v2705
    %v2707 = vcombine.low %v1086, %v1093
    %v2708 = vcombine.low %v1100, %v1107
    %v2710 = vunpack.c.l.s4 1983009808
    %v2711 = vunpack.c.0.s8 %v2710
    %v2712 = vlaneseq
    %v2713 = vshrl.u32 %v2712, 7
    %v2714 = vsub.s32 %v2711, %v2713
    %v2715 = vrot.slane %v2707, %v2714
    %v2717 = vunpack.c.l.s4 1983009808
    %v2718 = vunpack.c.0.s8 %v2717
    %v2719 = vlaneseq
    %v2720 = vshrl.u32 %v2719, 7
    %v2721 = vsub.s32 %v2718, %v2720
    %v2722 = vrot.slane %v2708, %v2721
    %v2723 = vcombine.low %v2715, %v2722
    %v2724 = vcombine.low %v1114, %v1121
    %v2725 = vcombine.low %v1128, %v1135
    %v2727 = vunpack.c.l.s4 1983009808
    %v2728 = vunpack.c.0.s8 %v2727
    %v2729 = vlaneseq
    %v2730 = vshrl.u32 %v2729, 7
    %v2731 = vsub.s32 %v2728, %v2730
    %v2732 = vrot.slane %v2724, %v2731
    %v2734 = vunpack.c.l.s4 1983009808
    %v2735 = vunpack.c.0.s8 %v2734
    %v2736 = vlaneseq
    %v2737 = vshrl.u32 %v2736, 7
    %v2738 = vsub.s32 %v2735, %v2737
    %v2739 = vrot.slane %v2725, %v2738
    %v2740 = vcombine.low %v2732, %v2739
    %v2741 = vcombine.low %v1142, %v1149
    %v2742 = vcombine.low %v1156, %v1163
    %v2744 = vunpack.c.l.s4 1983009808
    %v2745 = vunpack.c.0.s8 %v2744
    %v2746 = vlaneseq
    %v2747 = vshrl.u32 %v2746, 7
    %v2748 = vsub.s32 %v2745, %v2747
    %v2749 = vrot.slane %v2741, %v2748
    %v2751 = vunpack.c.l.s4 1983009808
    %v2752 = vunpack.c.0.s8 %v2751
    %v2753 = vlaneseq
    %v2754 = vshrl.u32 %v2753, 7
    %v2755 = vsub.s32 %v2752, %v2754
    %v2756 = vrot.slane %v2742, %v2755
    %v2757 = vcombine.low %v2749, %v2756
    %v2758 = vcombine.low %v1170, %v1177
    %v2759 = vcombine.low %v1184, %v1191
    %v2761 = vunpack.c.l.s4 1983009808
    %v2762 = vunpack.c.0.s8 %v2761
    %v2763 = vlaneseq
    %v2764 = vshrl.u32 %v2763, 7
    %v2765 = vsub.s32 %v2762, %v2764
    %v2766 = vrot.slane %v2758, %v2765
    %v2768 = vunpack.c.l.s4 1983009808
    %v2769 = vunpack.c.0.s8 %v2768
    %v2770 = vlaneseq
    %v2771 = vshrl.u32 %v2770, 7
    %v2772 = vsub.s32 %v2769, %v2771
    %v2773 = vrot.slane %v2759, %v2772
    %v2774 = vcombine.low %v2766, %v2773
    %v2775 = vcombine.low %v1198, %v1205
    %v2776 = vcombine.low %v1212, %v1219
    %v2778 = vunpack.c.l.s4 1983009808
    %v2779 = vunpack.c.0.s8 %v2778
    %v2780 = vlaneseq
    %v2781 = vshrl.u32 %v2780, 7
    %v2782 = vsub.s32 %v2779, %v2781
    %v2783 = vrot.slane %v2775, %v2782
    %v2785 = vunpack.c.l.s4 1983009808
    %v2786 = vunpack.c.0.s8 %v2785
    %v2787 = vlaneseq
    %v2788 = vshrl.u32 %v2787, 7
    %v2789 = vsub.s32 %v2786, %v2788
    %v2790 = vrot.slane %v2776, %v2789
    %v2791 = vcombine.low %v2783, %v2790
    %v2792 = vcombine.low %v1226, %v1233
    %v2793 = vcombine.low %v1240, %v1247
    %v2795 = vunpack.c.l.s4 1983009808
    %v2796 = vunpack.c.0.s8 %v2795
    %v2797 = vlaneseq
    %v2798 = vshrl.u32 %v2797, 7
    %v2799 = vsub.s32 %v2796, %v2798
    %v2800 = vrot.slane %v2792, %v2799
    %v2802 = vunpack.c.l.s4 1983009808
    %v2803 = vunpack.c.0.s8 %v2802
    %v2804 = vlaneseq
    %v2805 = vshrl.u32 %v2804, 7
    %v2806 = vsub.s32 %v2803, %v2805
    %v2807 = vrot.slane %v2793, %v2806
    %v2808 = vcombine.low %v2800, %v2807
    %v2809 = vcombine.low %v1254, %v1261
    %v2810 = vcombine.low %v1268, %v1275
    %v2812 = vunpack.c.l.s4 1983009808
    %v2813 = vunpack.c.0.s8 %v2812
    %v2814 = vlaneseq
    %v2815 = vshrl.u32 %v2814, 7
    %v2816 = vsub.s32 %v2813, %v2815
    %v2817 = vrot.slane %v2809, %v2816
    %v2819 = vunpack.c.l.s4 1983009808
    %v2820 = vunpack.c.0.s8 %v2819
    %v2821 = vlaneseq
    %v2822 = vshrl.u32 %v2821, 7
    %v2823 = vsub.s32 %v2820, %v2822
    %v2824 = vrot.slane %v2810, %v2823
    %v2825 = vcombine.low %v2817, %v2824
    %v2826 = vcombine.low %v1282, %v1289
    %v2827 = vcombine.low %v1296, %v1303
    %v2829 = vunpack.c.l.s4 1983009808
    %v2830 = vunpack.c.0.s8 %v2829
    %v2831 = vlaneseq
    %v2832 = vshrl.u32 %v2831, 7
    %v2833 = vsub.s32 %v2830, %v2832
    %v2834 = vrot.slane %v2826, %v2833
    %v2836 = vunpack.c.l.s4 1983009808
    %v2837 = vunpack.c.0.s8 %v2836
    %v2838 = vlaneseq
    %v2839 = vshrl.u32 %v2838, 7
    %v2840 = vsub.s32 %v2837, %v2839
    %v2841 = vrot.slane %v2827, %v2840
    %v2842 = vcombine.low %v2834, %v2841
    %v2843 = vcombine.low %v1310, %v1317
    %v2844 = vcombine.low %v1324, %v1331
    %v2846 = vunpack.c.l.s4 1983009808
    %v2847 = vunpack.c.0.s8 %v2846
    %v2848 = vlaneseq
    %v2849 = vshrl.u32 %v2848, 7
    %v2850 = vsub.s32 %v2847, %v2849
    %v2851 = vrot.slane %v2843, %v2850
    %v2853 = vunpack.c.l.s4 1983009808
    %v2854 = vunpack.c.0.s8 %v2853
    %v2855 = vlaneseq
    %v2856 = vshrl.u32 %v2855, 7
    %v2857 = vsub.s32 %v2854, %v2856
    %v2858 = vrot.slane %v2844, %v2857
    %v2859 = vcombine.low %v2851, %v2858
    %v2860 = vcombine.low %v1338, %v1345
    %v2861 = vcombine.low %v1352, %v1359
    %v2863 = vunpack.c.l.s4 1983009808
    %v2864 = vunpack.c.0.s8 %v2863
    %v2865 = vlaneseq
    %v2866 = vshrl.u32 %v2865, 7
    %v2867 = vsub.s32 %v2864, %v2866
    %v2868 = vrot.slane %v2860, %v2867
    %v2870 = vunpack.c.l.s4 1983009808
    %v2871 = vunpack.c.0.s8 %v2870
    %v2872 = vlaneseq
    %v2873 = vshrl.u32 %v2872, 7
    %v2874 = vsub.s32 %v2871, %v2873
    %v2875 = vrot.slane %v2861, %v2874
    %v2876 = vcombine.low %v2868, %v2875
    %v2877 = vcombine.low %v1366, %v1373
    %v2878 = vcombine.low %v1380, %v1387
    %v2880 = vunpack.c.l.s4 1983009808
    %v2881 = vunpack.c.0.s8 %v2880
    %v2882 = vlaneseq
    %v2883 = vshrl.u32 %v2882, 7
    %v2884 = vsub.s32 %v2881, %v2883
    %v2885 = vrot.slane %v2877, %v2884
    %v2887 = vunpack.c.l.s4 1983009808
    %v2888 = vunpack.c.0.s8 %v2887
    %v2889 = vlaneseq
    %v2890 = vshrl.u32 %v2889, 7
    %v2891 = vsub.s32 %v2888, %v2890
    %v2892 = vrot.slane %v2878, %v2891
    %v2893 = vcombine.low %v2885, %v2892
    %v2894 = vcombine.low %v1394, %v1401
    %v2895 = vcombine.low %v1408, %v1415
    %v2897 = vunpack.c.l.s4 1983009808
    %v2898 = vunpack.c.0.s8 %v2897
    %v2899 = vlaneseq
    %v2900 = vshrl.u32 %v2899, 7
    %v2901 = vsub.s32 %v2898, %v2900
    %v2902 = vrot.slane %v2894, %v2901
    %v2904 = vunpack.c.l.s4 1983009808
    %v2905 = vunpack.c.0.s8 %v2904
    %v2906 = vlaneseq
    %v2907 = vshrl.u32 %v2906, 7
    %v2908 = vsub.s32 %v2905, %v2907
    %v2909 = vrot.slane %v2895, %v2908
    %v2910 = vcombine.low %v2902, %v2909
    %v2911 = vcombine.low %v1422, %v1429
    %v2912 = vcombine.low %v1436, %v1443
    %v2914 = vunpack.c.l.s4 1983009808
    %v2915 = vunpack.c.0.s8 %v2914
    %v2916 = vlaneseq
    %v2917 = vshrl.u32 %v2916, 7
    %v2918 = vsub.s32 %v2915, %v2917
    %v2919 = vrot.slane %v2911, %v2918
    %v2921 = vunpack.c.l.s4 1983009808
    %v2922 = vunpack.c.0.s8 %v2921
    %v2923 = vlaneseq
    %v2924 = vshrl.u32 %v2923, 7
    %v2925 = vsub.s32 %v2922, %v2924
    %v2926 = vrot.slane %v2912, %v2925
    %v2927 = vcombine.low %v2919, %v2926
    %v2928 = vcombine.low %v1450, %v1457
    %v2929 = vcombine.low %v1464, %v1471
    %v2931 = vunpack.c.l.s4 1983009808
    %v2932 = vunpack.c.0.s8 %v2931
    %v2933 = vlaneseq
    %v2934 = vshrl.u32 %v2933, 7
    %v2935 = vsub.s32 %v2932, %v2934
    %v2936 = vrot.slane %v2928, %v2935
    %v2938 = vunpack.c.l.s4 1983009808
    %v2939 = vunpack.c.0.s8 %v2938
    %v2940 = vlaneseq
    %v2941 = vshrl.u32 %v2940, 7
    %v2942 = vsub.s32 %v2939, %v2941
    %v2943 = vrot.slane %v2929, %v2942
    %v2944 = vcombine.low %v2936, %v2943
    %v2945 = vcombine.low %v1478, %v1485
    %v2946 = vcombine.low %v1492, %v1499
    %v2948 = vunpack.c.l.s4 1983009808
    %v2949 = vunpack.c.0.s8 %v2948
    %v2950 = vlaneseq
    %v2951 = vshrl.u32 %v2950, 7
    %v2952 = vsub.s32 %v2949, %v2951
    %v2953 = vrot.slane %v2945, %v2952
    %v2955 = vunpack.c.l.s4 1983009808
    %v2956 = vunpack.c.0.s8 %v2955
    %v2957 = vlaneseq
    %v2958 = vshrl.u32 %v2957, 7
    %v2959 = vsub.s32 %v2956, %v2958
    %v2960 = vrot.slane %v2946, %v2959
    %v2961 = vcombine.low %v2953, %v2960
    %v2962 = vcombine.low %v1506, %v1513
    %v2963 = vcombine.low %v1520, %v1527
    %v2965 = vunpack.c.l.s4 1983009808
    %v2966 = vunpack.c.0.s8 %v2965
    %v2967 = vlaneseq
    %v2968 = vshrl.u32 %v2967, 7
    %v2969 = vsub.s32 %v2966, %v2968
    %v2970 = vrot.slane %v2962, %v2969
    %v2972 = vunpack.c.l.s4 1983009808
    %v2973 = vunpack.c.0.s8 %v2972
    %v2974 = vlaneseq
    %v2975 = vshrl.u32 %v2974, 7
    %v2976 = vsub.s32 %v2973, %v2975
    %v2977 = vrot.slane %v2963, %v2976
    %v2978 = vcombine.low %v2970, %v2977
    %v2979 = vcombine.low %v1534, %v1541
    %v2980 = vcombine.low %v1548, %v1555
    %v2982 = vunpack.c.l.s4 1983009808
    %v2983 = vunpack.c.0.s8 %v2982
    %v2984 = vlaneseq
    %v2985 = vshrl.u32 %v2984, 7
    %v2986 = vsub.s32 %v2983, %v2985
    %v2987 = vrot.slane %v2979, %v2986
    %v2989 = vunpack.c.l.s4 1983009808
    %v2990 = vunpack.c.0.s8 %v2989
    %v2991 = vlaneseq
    %v2992 = vshrl.u32 %v2991, 7
    %v2993 = vsub.s32 %v2990, %v2992
    %v2994 = vrot.slane %v2980, %v2993
    %v2995 = vcombine.low %v2987, %v2994
    %v2996 = vcombine.low %v1562, %v1569
    %v2997 = vcombine.low %v1576, %v1583
    %v2999 = vunpack.c.l.s4 1983009808
    %v3000 = vunpack.c.0.s8 %v2999
    %v3001 = vlaneseq
    %v3002 = vshrl.u32 %v3001, 7
    %v3003 = vsub.s32 %v3000, %v3002
    %v3004 = vrot.slane %v2996, %v3003
    %v3006 = vunpack.c.l.s4 1983009808
    %v3007 = vunpack.c.0.s8 %v3006
    %v3008 = vlaneseq
    %v3009 = vshrl.u32 %v3008, 7
    %v3010 = vsub.s32 %v3007, %v3009
    %v3011 = vrot.slane %v2997, %v3010
    %v3012 = vcombine.low %v3004, %v3011
    %v3013 = vcombine.low %v1590, %v1597
    %v3014 = vcombine.low %v1604, %v1611
    %v3016 = vunpack.c.l.s4 1983009808
    %v3017 = vunpack.c.0.s8 %v3016
    %v3018 = vlaneseq
    %v3019 = vshrl.u32 %v3018, 7
    %v3020 = vsub.s32 %v3017, %v3019
    %v3021 = vrot.slane %v3013, %v3020
    %v3023 = vunpack.c.l.s4 1983009808
    %v3024 = vunpack.c.0.s8 %v3023
    %v3025 = vlaneseq
    %v3026 = vshrl.u32 %v3025, 7
    %v3027 = vsub.s32 %v3024, %v3026
    %v3028 = vrot.slane %v3014, %v3027
    %v3029 = vcombine.low %v3021, %v3028
    %v3030 = vcombine.low %v1618, %v1625
    %v3031 = vcombine.low %v1632, %v1639
    %v3033 = vunpack.c.l.s4 1983009808
    %v3034 = vunpack.c.0.s8 %v3033
    %v3035 = vlaneseq
    %v3036 = vshrl.u32 %v3035, 7
    %v3037 = vsub.s32 %v3034, %v3036
    %v3038 = vrot.slane %v3030, %v3037
    %v3040 = vunpack.c.l.s4 1983009808
    %v3041 = vunpack.c.0.s8 %v3040
    %v3042 = vlaneseq
    %v3043 = vshrl.u32 %v3042, 7
    %v3044 = vsub.s32 %v3041, %v3043
    %v3045 = vrot.slane %v3031, %v3044
    %v3046 = vcombine.low %v3038, %v3045
    %v3047 = vcombine.low %v1646, %v1653
    %v3048 = vcombine.low %v1660, %v1667
    %v3050 = vunpack.c.l.s4 1983009808
    %v3051 = vunpack.c.0.s8 %v3050
    %v3052 = vlaneseq
    %v3053 = vshrl.u32 %v3052, 7
    %v3054 = vsub.s32 %v3051, %v3053
    %v3055 = vrot.slane %v3047, %v3054
    %v3057 = vunpack.c.l.s4 1983009808
    %v3058 = vunpack.c.0.s8 %v3057
    %v3059 = vlaneseq
    %v3060 = vshrl.u32 %v3059, 7
    %v3061 = vsub.s32 %v3058, %v3060
    %v3062 = vrot.slane %v3048, %v3061
    %v3063 = vcombine.low %v3055, %v3062
    %v3064 = vcombine.low %v1674, %v1681
    %v3065 = vcombine.low %v1688, %v1695
    %v3067 = vunpack.c.l.s4 1983009808
    %v3068 = vunpack.c.0.s8 %v3067
    %v3069 = vlaneseq
    %v3070 = vshrl.u32 %v3069, 7
    %v3071 = vsub.s32 %v3068, %v3070
    %v3072 = vrot.slane %v3064, %v3071
    %v3074 = vunpack.c.l.s4 1983009808
    %v3075 = vunpack.c.0.s8 %v3074
    %v3076 = vlaneseq
    %v3077 = vshrl.u32 %v3076, 7
    %v3078 = vsub.s32 %v3075, %v3077
    %v3079 = vrot.slane %v3065, %v3078
    %v3080 = vcombine.low %v3072, %v3079
    %v3081 = vcombine.low %v1702, %v1709
    %v3082 = vcombine.low %v1716, %v1723
    %v3084 = vunpack.c.l.s4 1983009808
    %v3085 = vunpack.c.0.s8 %v3084
    %v3086 = vlaneseq
    %v3087 = vshrl.u32 %v3086, 7
    %v3088 = vsub.s32 %v3085, %v3087
    %v3089 = vrot.slane %v3081, %v3088
    %v3091 = vunpack.c.l.s4 1983009808
    %v3092 = vunpack.c.0.s8 %v3091
    %v3093 = vlaneseq
    %v3094 = vshrl.u32 %v3093, 7
    %v3095 = vsub.s32 %v3092, %v3094
    %v3096 = vrot.slane %v3082, %v3095
    %v3097 = vcombine.low %v3089, %v3096
    %v3098 = vcombine.low %v1730, %v1737
    %v3099 = vcombine.low %v1744, %v1751
    %v3101 = vunpack.c.l.s4 1983009808
    %v3102 = vunpack.c.0.s8 %v3101
    %v3103 = vlaneseq
    %v3104 = vshrl.u32 %v3103, 7
    %v3105 = vsub.s32 %v3102, %v3104
    %v3106 = vrot.slane %v3098, %v3105
    %v3108 = vunpack.c.l.s4 1983009808
    %v3109 = vunpack.c.0.s8 %v3108
    %v3110 = vlaneseq
    %v3111 = vshrl.u32 %v3110, 7
    %v3112 = vsub.s32 %v3109, %v3111
    %v3113 = vrot.slane %v3099, %v3112
    %v3114 = vcombine.low %v3106, %v3113
    %v3115 = vcombine.low %v1758, %v1765
    %v3116 = vcombine.low %v1772, %v1779
    %v3118 = vunpack.c.l.s4 1983009808
    %v3119 = vunpack.c.0.s8 %v3118
    %v3120 = vlaneseq
    %v3121 = vshrl.u32 %v3120, 7
    %v3122 = vsub.s32 %v3119, %v3121
    %v3123 = vrot.slane %v3115, %v3122
    %v3125 = vunpack.c.l.s4 1983009808
    %v3126 = vunpack.c.0.s8 %v3125
    %v3127 = vlaneseq
    %v3128 = vshrl.u32 %v3127, 7
    %v3129 = vsub.s32 %v3126, %v3128
    %v3130 = vrot.slane %v3116, %v3129
    %v3131 = vcombine.low %v3123, %v3130
    %v3132 = vcombine.low %v1786, %v1793
    %v3133 = vcombine.low %v1800, %v1807
    %v3135 = vunpack.c.l.s4 1983009808
    %v3136 = vunpack.c.0.s8 %v3135
    %v3137 = vlaneseq
    %v3138 = vshrl.u32 %v3137, 7
    %v3139 = vsub.s32 %v3136, %v3138
    %v3140 = vrot.slane %v3132, %v3139
    %v3142 = vunpack.c.l.s4 1983009808
    %v3143 = vunpack.c.0.s8 %v3142
    %v3144 = vlaneseq
    %v3145 = vshrl.u32 %v3144, 7
    %v3146 = vsub.s32 %v3143, %v3145
    %v3147 = vrot.slane %v3133, %v3146
    %v3148 = vcombine.low %v3140, %v3147
    %v3149 = vcombine.low %v1814, %v1821
    %v3150 = vcombine.low %v1828, %v1835
    %v3152 = vunpack.c.l.s4 1983009808
    %v3153 = vunpack.c.0.s8 %v3152
    %v3154 = vlaneseq
    %v3155 = vshrl.u32 %v3154, 7
    %v3156 = vsub.s32 %v3153, %v3155
    %v3157 = vrot.slane %v3149, %v3156
    %v3159 = vunpack.c.l.s4 1983009808
    %v3160 = vunpack.c.0.s8 %v3159
    %v3161 = vlaneseq
    %v3162 = vshrl.u32 %v3161, 7
    %v3163 = vsub.s32 %v3160, %v3162
    %v3164 = vrot.slane %v3150, %v3163
    %v3165 = vcombine.low %v3157, %v3164
    %v3166 = vcombine.low %v1842, %v1849
    %v3167 = vcombine.low %v1856, %v1863
    %v3169 = vunpack.c.l.s4 1983009808
    %v3170 = vunpack.c.0.s8 %v3169
    %v3171 = vlaneseq
    %v3172 = vshrl.u32 %v3171, 7
    %v3173 = vsub.s32 %v3170, %v3172
    %v3174 = vrot.slane %v3166, %v3173
    %v3176 = vunpack.c.l.s4 1983009808
    %v3177 = vunpack.c.0.s8 %v3176
    %v3178 = vlaneseq
    %v3179 = vshrl.u32 %v3178, 7
    %v3180 = vsub.s32 %v3177, %v3179
    %v3181 = vrot.slane %v3167, %v3180
    %v3182 = vcombine.low %v3174, %v3181
    %v3183 = vcombine.low %v1870, %v1877
    %v3184 = vcombine.low %v1884, %v1891
    %v3186 = vunpack.c.l.s4 1983009808
    %v3187 = vunpack.c.0.s8 %v3186
    %v3188 = vlaneseq
    %v3189 = vshrl.u32 %v3188, 7
    %v3190 = vsub.s32 %v3187, %v3189
    %v3191 = vrot.slane %v3183, %v3190
    %v3193 = vunpack.c.l.s4 1983009808
    %v3194 = vunpack.c.0.s8 %v3193
    %v3195 = vlaneseq
    %v3196 = vshrl.u32 %v3195, 7
    %v3197 = vsub.s32 %v3194, %v3196
    %v3198 = vrot.slane %v3184, %v3197
    %v3199 = vcombine.low %v3191, %v3198
    %v3200 = vcombine.low %v1898, %v1905
    %v3201 = vcombine.low %v1912, %v1919
    %v3203 = vunpack.c.l.s4 1983009808
    %v3204 = vunpack.c.0.s8 %v3203
    %v3205 = vlaneseq
    %v3206 = vshrl.u32 %v3205, 7
    %v3207 = vsub.s32 %v3204, %v3206
    %v3208 = vrot.slane %v3200, %v3207
    %v3210 = vunpack.c.l.s4 1983009808
    %v3211 = vunpack.c.0.s8 %v3210
    %v3212 = vlaneseq
    %v3213 = vshrl.u32 %v3212, 7
    %v3214 = vsub.s32 %v3211, %v3213
    %v3215 = vrot.slane %v3201, %v3214
    %v3216 = vcombine.low %v3208, %v3215
    %v3217 = vcombine.low %v1926, %v1933
    %v3218 = vcombine.low %v1940, %v1947
    %v3220 = vunpack.c.l.s4 1983009808
    %v3221 = vunpack.c.0.s8 %v3220
    %v3222 = vlaneseq
    %v3223 = vshrl.u32 %v3222, 7
    %v3224 = vsub.s32 %v3221, %v3223
    %v3225 = vrot.slane %v3217, %v3224
    %v3227 = vunpack.c.l.s4 1983009808
    %v3228 = vunpack.c.0.s8 %v3227
    %v3229 = vlaneseq
    %v3230 = vshrl.u32 %v3229, 7
    %v3231 = vsub.s32 %v3228, %v3230
    %v3232 = vrot.slane %v3218, %v3231
    %v3233 = vcombine.low %v3225, %v3232
    %v3234 = vcombine.low %v1954, %v1961
    %v3235 = vcombine.low %v1968, %v1975
    %v3237 = vunpack.c.l.s4 1983009808
    %v3238 = vunpack.c.0.s8 %v3237
    %v3239 = vlaneseq
    %v3240 = vshrl.u32 %v3239, 7
    %v3241 = vsub.s32 %v3238, %v3240
    %v3242 = vrot.slane %v3234, %v3241
    %v3244 = vunpack.c.l.s4 1983009808
    %v3245 = vunpack.c.0.s8 %v3244
    %v3246 = vlaneseq
    %v3247 = vshrl.u32 %v3246, 7
    %v3248 = vsub.s32 %v3245, %v3247
    %v3249 = vrot.slane %v3235, %v3248
    %v3250 = vcombine.low %v3242, %v3249
    %v3251 = vcombine.low %v1982, %v1989
    %v3252 = vcombine.low %v1996, %v2003
    %v3254 = vunpack.c.l.s4 1983009808
    %v3255 = vunpack.c.0.s8 %v3254
    %v3256 = vlaneseq
    %v3257 = vshrl.u32 %v3256, 7
    %v3258 = vsub.s32 %v3255, %v3257
    %v3259 = vrot.slane %v3251, %v3258
    %v3261 = vunpack.c.l.s4 1983009808
    %v3262 = vunpack.c.0.s8 %v3261
    %v3263 = vlaneseq
    %v3264 = vshrl.u32 %v3263, 7
    %v3265 = vsub.s32 %v3262, %v3264
    %v3266 = vrot.slane %v3252, %v3265
    %v3267 = vcombine.low %v3259, %v3266
    %v3268 = vcombine.low %v2010, %v2017
    %v3269 = vcombine.low %v2024, %v2031
    %v3271 = vunpack.c.l.s4 1983009808
    %v3272 = vunpack.c.0.s8 %v3271
    %v3273 = vlaneseq
    %v3274 = vshrl.u32 %v3273, 7
    %v3275 = vsub.s32 %v3272, %v3274
    %v3276 = vrot.slane %v3268, %v3275
    %v3278 = vunpack.c.l.s4 1983009808
    %v3279 = vunpack.c.0.s8 %v3278
    %v3280 = vlaneseq
    %v3281 = vshrl.u32 %v3280, 7
    %v3282 = vsub.s32 %v3279, %v3281
    %v3283 = vrot.slane %v3269, %v3282
    %v3284 = vcombine.low %v3276, %v3283
    %v3285 = vcombine.low %v2038, %v2045
    %v3286 = vcombine.low %v2052, %v2059
    %v3288 = vunpack.c.l.s4 1983009808
    %v3289 = vunpack.c.0.s8 %v3288
    %v3290 = vlaneseq
    %v3291 = vshrl.u32 %v3290, 7
    %v3292 = vsub.s32 %v3289, %v3291
    %v3293 = vrot.slane %v3285, %v3292
    %v3295 = vunpack.c.l.s4 1983009808
    %v3296 = vunpack.c.0.s8 %v3295
    %v3297 = vlaneseq
    %v3298 = vshrl.u32 %v3297, 7
    %v3299 = vsub.s32 %v3296, %v3298
    %v3300 = vrot.slane %v3286, %v3299
    %v3301 = vcombine.low %v3293, %v3300
    %v3302 = vcombine.low %v2066, %v2073
    %v3303 = vcombine.low %v2080, %v2087
    %v3305 = vunpack.c.l.s4 1983009808
    %v3306 = vunpack.c.0.s8 %v3305
    %v3307 = vlaneseq
    %v3308 = vshrl.u32 %v3307, 7
    %v3309 = vsub.s32 %v3306, %v3308
    %v3310 = vrot.slane %v3302, %v3309
    %v3312 = vunpack.c.l.s4 1983009808
    %v3313 = vunpack.c.0.s8 %v3312
    %v3314 = vlaneseq
    %v3315 = vshrl.u32 %v3314, 7
    %v3316 = vsub.s32 %v3313, %v3315
    %v3317 = vrot.slane %v3303, %v3316
    %v3318 = vcombine.low %v3310, %v3317
    %v3319 = vcombine.low %v2094, %v2101
    %v3320 = vcombine.low %v2108, %v2115
    %v3322 = vunpack.c.l.s4 1983009808
    %v3323 = vunpack.c.0.s8 %v3322
    %v3324 = vlaneseq
    %v3325 = vshrl.u32 %v3324, 7
    %v3326 = vsub.s32 %v3323, %v3325
    %v3327 = vrot.slane %v3319, %v3326
    %v3329 = vunpack.c.l.s4 1983009808
    %v3330 = vunpack.c.0.s8 %v3329
    %v3331 = vlaneseq
    %v3332 = vshrl.u32 %v3331, 7
    %v3333 = vsub.s32 %v3330, %v3332
    %v3334 = vrot.slane %v3320, %v3333
    %v3335 = vcombine.low %v3327, %v3334
    %v3336 = vcombine.low %v2122, %v2129
    %v3337 = vcombine.low %v2136, %v2143
    %v3339 = vunpack.c.l.s4 1983009808
    %v3340 = vunpack.c.0.s8 %v3339
    %v3341 = vlaneseq
    %v3342 = vshrl.u32 %v3341, 7
    %v3343 = vsub.s32 %v3340, %v3342
    %v3344 = vrot.slane %v3336, %v3343
    %v3346 = vunpack.c.l.s4 1983009808
    %v3347 = vunpack.c.0.s8 %v3346
    %v3348 = vlaneseq
    %v3349 = vshrl.u32 %v3348, 7
    %v3350 = vsub.s32 %v3347, %v3349
    %v3351 = vrot.slane %v3337, %v3350
    %v3352 = vcombine.low %v3344, %v3351
    %v3353 = vcombine.low %v2150, %v2157
    %v3354 = vcombine.low %v2164, %v2171
    %v3356 = vunpack.c.l.s4 1983009808
    %v3357 = vunpack.c.0.s8 %v3356
    %v3358 = vlaneseq
    %v3359 = vshrl.u32 %v3358, 7
    %v3360 = vsub.s32 %v3357, %v3359
    %v3361 = vrot.slane %v3353, %v3360
    %v3363 = vunpack.c.l.s4 1983009808
    %v3364 = vunpack.c.0.s8 %v3363
    %v3365 = vlaneseq
    %v3366 = vshrl.u32 %v3365, 7
    %v3367 = vsub.s32 %v3364, %v3366
    %v3368 = vrot.slane %v3354, %v3367
    %v3369 = vcombine.low %v3361, %v3368
    %v3370 = vcombine.low %v2178, %v2185
    %v3371 = vcombine.low %v2192, %v2199
    %v3373 = vunpack.c.l.s4 1983009808
    %v3374 = vunpack.c.0.s8 %v3373
    %v3375 = vlaneseq
    %v3376 = vshrl.u32 %v3375, 7
    %v3377 = vsub.s32 %v3374, %v3376
    %v3378 = vrot.slane %v3370, %v3377
    %v3380 = vunpack.c.l.s4 1983009808
    %v3381 = vunpack.c.0.s8 %v3380
    %v3382 = vlaneseq
    %v3383 = vshrl.u32 %v3382, 7
    %v3384 = vsub.s32 %v3381, %v3383
    %v3385 = vrot.slane %v3371, %v3384
    %v3386 = vcombine.low %v3378, %v3385
    %v3387 = vcombine.low %v2206, %v2213
    %v3388 = vcombine.low %v2220, %v2227
    %v3390 = vunpack.c.l.s4 1983009808
    %v3391 = vunpack.c.0.s8 %v3390
    %v3392 = vlaneseq
    %v3393 = vshrl.u32 %v3392, 7
    %v3394 = vsub.s32 %v3391, %v3393
    %v3395 = vrot.slane %v3387, %v3394
    %v3397 = vunpack.c.l.s4 1983009808
    %v3398 = vunpack.c.0.s8 %v3397
    %v3399 = vlaneseq
    %v3400 = vshrl.u32 %v3399, 7
    %v3401 = vsub.s32 %v3398, %v3400
    %v3402 = vrot.slane %v3388, %v3401
    %v3403 = vcombine.low %v3395, %v3402
    %v3404 = vcombine.low %v2234, %v2241
    %v3405 = vcombine.low %v2248, %v2255
    %v3407 = vunpack.c.l.s4 1983009808
    %v3408 = vunpack.c.0.s8 %v3407
    %v3409 = vlaneseq
    %v3410 = vshrl.u32 %v3409, 7
    %v3411 = vsub.s32 %v3408, %v3410
    %v3412 = vrot.slane %v3404, %v3411
    %v3414 = vunpack.c.l.s4 1983009808
    %v3415 = vunpack.c.0.s8 %v3414
    %v3416 = vlaneseq
    %v3417 = vshrl.u32 %v3416, 7
    %v3418 = vsub.s32 %v3415, %v3417
    %v3419 = vrot.slane %v3405, %v3418
    %v3420 = vcombine.low %v3412, %v3419
    %v3421 = vcombine.low %v2262, %v2269
    %v3422 = vcombine.low %v2276, %v2283
    %v3424 = vunpack.c.l.s4 1983009808
    %v3425 = vunpack.c.0.s8 %v3424
    %v3426 = vlaneseq
    %v3427 = vshrl.u32 %v3426, 7
    %v3428 = vsub.s32 %v3425, %v3427
    %v3429 = vrot.slane %v3421, %v3428
    %v3431 = vunpack.c.l.s4 1983009808
    %v3432 = vunpack.c.0.s8 %v3431
    %v3433 = vlaneseq
    %v3434 = vshrl.u32 %v3433, 7
    %v3435 = vsub.s32 %v3432, %v3434
    %v3436 = vrot.slane %v3422, %v3435
    %v3437 = vcombine.low %v3429, %v3436
    %v3438 = vcombine.low %v2290, %v2297
    %v3439 = vcombine.low %v2304, %v2311
    %v3441 = vunpack.c.l.s4 1983009808
    %v3442 = vunpack.c.0.s8 %v3441
    %v3443 = vlaneseq
    %v3444 = vshrl.u32 %v3443, 7
    %v3445 = vsub.s32 %v3442, %v3444
    %v3446 = vrot.slane %v3438, %v3445
    %v3448 = vunpack.c.l.s4 1983009808
    %v3449 = vunpack.c.0.s8 %v3448
    %v3450 = vlaneseq
    %v3451 = vshrl.u32 %v3450, 7
    %v3452 = vsub.s32 %v3449, %v3451
    %v3453 = vrot.slane %v3439, %v3452
    %v3454 = vcombine.low %v3446, %v3453
    %v3455 = vcombine.low %v2318, %v2325
    %v3456 = vcombine.low %v2332, %v2339
    %v3458 = vunpack.c.l.s4 1983009808
    %v3459 = vunpack.c.0.s8 %v3458
    %v3460 = vlaneseq
    %v3461 = vshrl.u32 %v3460, 7
    %v3462 = vsub.s32 %v3459, %v3461
    %v3463 = vrot.slane %v3455, %v3462
    %v3465 = vunpack.c.l.s4 1983009808
    %v3466 = vunpack.c.0.s8 %v3465
    %v3467 = vlaneseq
    %v3468 = vshrl.u32 %v3467, 7
    %v3469 = vsub.s32 %v3466, %v3468
    %v3470 = vrot.slane %v3456, %v3469
    %v3471 = vcombine.low %v3463, %v3470
    %v3472 = vcombine.low %v2346, %v2353
    %v3473 = vcombine.low %v2360, %v2367
    %v3475 = vunpack.c.l.s4 1983009808
    %v3476 = vunpack.c.0.s8 %v3475
    %v3477 = vlaneseq
    %v3478 = vshrl.u32 %v3477, 7
    %v3479 = vsub.s32 %v3476, %v3478
    %v3480 = vrot.slane %v3472, %v3479
    %v3482 = vunpack.c.l.s4 1983009808
    %v3483 = vunpack.c.0.s8 %v3482
    %v3484 = vlaneseq
    %v3485 = vshrl.u32 %v3484, 7
    %v3486 = vsub.s32 %v3483, %v3485
    %v3487 = vrot.slane %v3473, %v3486
    %v3488 = vcombine.low %v3480, %v3487
    %v3489 = vcombine.low %v2374, %v2381
    %v3490 = vcombine.low %v2388, %v2395
    %v3492 = vunpack.c.l.s4 1983009808
    %v3493 = vunpack.c.0.s8 %v3492
    %v3494 = vlaneseq
    %v3495 = vshrl.u32 %v3494, 7
    %v3496 = vsub.s32 %v3493, %v3495
    %v3497 = vrot.slane %v3489, %v3496
    %v3499 = vunpack.c.l.s4 1983009808
    %v3500 = vunpack.c.0.s8 %v3499
    %v3501 = vlaneseq
    %v3502 = vshrl.u32 %v3501, 7
    %v3503 = vsub.s32 %v3500, %v3502
    %v3504 = vrot.slane %v3490, %v3503
    %v3505 = vcombine.low %v3497, %v3504
    %v3506 = vcombine.low %v2402, %v2409
    %v3507 = vcombine.low %v2416, %v2423
    %v3509 = vunpack.c.l.s4 1983009808
    %v3510 = vunpack.c.0.s8 %v3509
    %v3511 = vlaneseq
    %v3512 = vshrl.u32 %v3511, 7
    %v3513 = vsub.s32 %v3510, %v3512
    %v3514 = vrot.slane %v3506, %v3513
    %v3516 = vunpack.c.l.s4 1983009808
    %v3517 = vunpack.c.0.s8 %v3516
    %v3518 = vlaneseq
    %v3519 = vshrl.u32 %v3518, 7
    %v3520 = vsub.s32 %v3517, %v3519
    %v3521 = vrot.slane %v3507, %v3520
    %v3522 = vcombine.low %v3514, %v3521
    %v3523 = vcombine.low %v2430, %v2437
    %v3524 = vcombine.low %v2444, %v2451
    %v3526 = vunpack.c.l.s4 1983009808
    %v3527 = vunpack.c.0.s8 %v3526
    %v3528 = vlaneseq
    %v3529 = vshrl.u32 %v3528, 7
    %v3530 = vsub.s32 %v3527, %v3529
    %v3531 = vrot.slane %v3523, %v3530
    %v3533 = vunpack.c.l.s4 1983009808
    %v3534 = vunpack.c.0.s8 %v3533
    %v3535 = vlaneseq
    %v3536 = vshrl.u32 %v3535, 7
    %v3537 = vsub.s32 %v3534, %v3536
    %v3538 = vrot.slane %v3524, %v3537
    %v3539 = vcombine.low %v3531, %v3538
    %3540 = vset.pattern.permute.xlu0 0
    %3541 = vperm.xlu0 %3540, %v2468
    %v3542 = vpop.permute.xlu0 %3541
    %3543 = vset.pattern.permute.xlu0 0
    %3544 = vperm.xlu0 %3543, %v2485
    %v3545 = vpop.permute.xlu0 %3544
    %3546 = vset.pattern.permute.xlu0 0
    %3547 = vperm.xlu0 %3546, %v2502
    %v3548 = vpop.permute.xlu0 %3547
    %3549 = vset.pattern.permute.xlu0 0
    %3550 = vperm.xlu0 %3549, %v2519
    %v3551 = vpop.permute.xlu0 %3550
    %3552 = vset.pattern.permute.xlu0 0
    %3553 = vperm.xlu0 %3552, %v2536
    %v3554 = vpop.permute.xlu0 %3553
    %3555 = vset.pattern.permute.xlu0 0
    %3556 = vperm.xlu0 %3555, %v2553
    %v3557 = vpop.permute.xlu0 %3556
    %3558 = vset.pattern.permute.xlu0 0
    %3559 = vperm.xlu0 %3558, %v2570
    %v3560 = vpop.permute.xlu0 %3559
    %3561 = vset.pattern.permute.xlu0 0
    %3562 = vperm.xlu0 %3561, %v2587
    %v3563 = vpop.permute.xlu0 %3562
    %3564 = vset.pattern.permute.xlu0 0
    %3565 = vperm.xlu0 %3564, %v2604
    %v3566 = vpop.permute.xlu0 %3565
    %3567 = vset.pattern.permute.xlu0 0
    %3568 = vperm.xlu0 %3567, %v2621
    %v3569 = vpop.permute.xlu0 %3568
    %3570 = vset.pattern.permute.xlu0 0
    %3571 = vperm.xlu0 %3570, %v2638
    %v3572 = vpop.permute.xlu0 %3571
    %3573 = vset.pattern.permute.xlu0 0
    %3574 = vperm.xlu0 %3573, %v2655
    %v3575 = vpop.permute.xlu0 %3574
    %3576 = vset.pattern.permute.xlu0 0
    %3577 = vperm.xlu0 %3576, %v2672
    %v3578 = vpop.permute.xlu0 %3577
    %3579 = vset.pattern.permute.xlu0 0
    %3580 = vperm.xlu0 %3579, %v2689
    %v3581 = vpop.permute.xlu0 %3580
    %3582 = vset.pattern.permute.xlu0 0
    %3583 = vperm.xlu0 %3582, %v2706
    %v3584 = vpop.permute.xlu0 %3583
    %3585 = vset.pattern.permute.xlu0 0
    %3586 = vperm.xlu0 %3585, %v2723
    %v3587 = vpop.permute.xlu0 %3586
    %3588 = vset.pattern.permute.xlu0 0
    %3589 = vperm.xlu0 %3588, %v2740
    %v3590 = vpop.permute.xlu0 %3589
    %3591 = vset.pattern.permute.xlu0 0
    %3592 = vperm.xlu0 %3591, %v2757
    %v3593 = vpop.permute.xlu0 %3592
    %3594 = vset.pattern.permute.xlu0 0
    %3595 = vperm.xlu0 %3594, %v2774
    %v3596 = vpop.permute.xlu0 %3595
    %3597 = vset.pattern.permute.xlu0 0
    %3598 = vperm.xlu0 %3597, %v2791
    %v3599 = vpop.permute.xlu0 %3598
    %3600 = vset.pattern.permute.xlu0 0
    %3601 = vperm.xlu0 %3600, %v2808
    %v3602 = vpop.permute.xlu0 %3601
    %3603 = vset.pattern.permute.xlu0 0
    %3604 = vperm.xlu0 %3603, %v2825
    %v3605 = vpop.permute.xlu0 %3604
    %3606 = vset.pattern.permute.xlu0 0
    %3607 = vperm.xlu0 %3606, %v2842
    %v3608 = vpop.permute.xlu0 %3607
    %3609 = vset.pattern.permute.xlu0 0
    %3610 = vperm.xlu0 %3609, %v2859
    %v3611 = vpop.permute.xlu0 %3610
    %3612 = vset.pattern.permute.xlu0 0
    %3613 = vperm.xlu0 %3612, %v2876
    %v3614 = vpop.permute.xlu0 %3613
    %3615 = vset.pattern.permute.xlu0 0
    %3616 = vperm.xlu0 %3615, %v2893
    %v3617 = vpop.permute.xlu0 %3616
    %3618 = vset.pattern.permute.xlu0 0
    %3619 = vperm.xlu0 %3618, %v2910
    %v3620 = vpop.permute.xlu0 %3619
    %3621 = vset.pattern.permute.xlu0 0
    %3622 = vperm.xlu0 %3621, %v2927
    %v3623 = vpop.permute.xlu0 %3622
    %3624 = vset.pattern.permute.xlu0 0
    %3625 = vperm.xlu0 %3624, %v2944
    %v3626 = vpop.permute.xlu0 %3625
    %3627 = vset.pattern.permute.xlu0 0
    %3628 = vperm.xlu0 %3627, %v2961
    %v3629 = vpop.permute.xlu0 %3628
    %3630 = vset.pattern.permute.xlu0 0
    %3631 = vperm.xlu0 %3630, %v2978
    %v3632 = vpop.permute.xlu0 %3631
    %3633 = vset.pattern.permute.xlu0 0
    %3634 = vperm.xlu0 %3633, %v2995
    %v3635 = vpop.permute.xlu0 %3634
    %3636 = vset.pattern.permute.xlu0 0
    %3637 = vperm.xlu0 %3636, %v3012
    %v3638 = vpop.permute.xlu0 %3637
    %3639 = vset.pattern.permute.xlu0 0
    %3640 = vperm.xlu0 %3639, %v3029
    %v3641 = vpop.permute.xlu0 %3640
    %3642 = vset.pattern.permute.xlu0 0
    %3643 = vperm.xlu0 %3642, %v3046
    %v3644 = vpop.permute.xlu0 %3643
    %3645 = vset.pattern.permute.xlu0 0
    %3646 = vperm.xlu0 %3645, %v3063
    %v3647 = vpop.permute.xlu0 %3646
    %3648 = vset.pattern.permute.xlu0 0
    %3649 = vperm.xlu0 %3648, %v3080
    %v3650 = vpop.permute.xlu0 %3649
    %3651 = vset.pattern.permute.xlu0 0
    %3652 = vperm.xlu0 %3651, %v3097
    %v3653 = vpop.permute.xlu0 %3652
    %3654 = vset.pattern.permute.xlu0 0
    %3655 = vperm.xlu0 %3654, %v3114
    %v3656 = vpop.permute.xlu0 %3655
    %3657 = vset.pattern.permute.xlu0 0
    %3658 = vperm.xlu0 %3657, %v3131
    %v3659 = vpop.permute.xlu0 %3658
    %3660 = vset.pattern.permute.xlu0 0
    %3661 = vperm.xlu0 %3660, %v3148
    %v3662 = vpop.permute.xlu0 %3661
    %3663 = vset.pattern.permute.xlu0 0
    %3664 = vperm.xlu0 %3663, %v3165
    %v3665 = vpop.permute.xlu0 %3664
    %3666 = vset.pattern.permute.xlu0 0
    %3667 = vperm.xlu0 %3666, %v3182
    %v3668 = vpop.permute.xlu0 %3667
    %3669 = vset.pattern.permute.xlu0 0
    %3670 = vperm.xlu0 %3669, %v3199
    %v3671 = vpop.permute.xlu0 %3670
    %3672 = vset.pattern.permute.xlu0 0
    %3673 = vperm.xlu0 %3672, %v3216
    %v3674 = vpop.permute.xlu0 %3673
    %3675 = vset.pattern.permute.xlu0 0
    %3676 = vperm.xlu0 %3675, %v3233
    %v3677 = vpop.permute.xlu0 %3676
    %3678 = vset.pattern.permute.xlu0 0
    %3679 = vperm.xlu0 %3678, %v3250
    %v3680 = vpop.permute.xlu0 %3679
    %3681 = vset.pattern.permute.xlu0 0
    %3682 = vperm.xlu0 %3681, %v3267
    %v3683 = vpop.permute.xlu0 %3682
    %3684 = vset.pattern.permute.xlu0 0
    %3685 = vperm.xlu0 %3684, %v3284
    %v3686 = vpop.permute.xlu0 %3685
    %3687 = vset.pattern.permute.xlu0 0
    %3688 = vperm.xlu0 %3687, %v3301
    %v3689 = vpop.permute.xlu0 %3688
    %3690 = vset.pattern.permute.xlu0 0
    %3691 = vperm.xlu0 %3690, %v3318
    %v3692 = vpop.permute.xlu0 %3691
    %3693 = vset.pattern.permute.xlu0 0
    %3694 = vperm.xlu0 %3693, %v3335
    %v3695 = vpop.permute.xlu0 %3694
    %3696 = vset.pattern.permute.xlu0 0
    %3697 = vperm.xlu0 %3696, %v3352
    %v3698 = vpop.permute.xlu0 %3697
    %3699 = vset.pattern.permute.xlu0 0
    %3700 = vperm.xlu0 %3699, %v3369
    %v3701 = vpop.permute.xlu0 %3700
    %3702 = vset.pattern.permute.xlu0 0
    %3703 = vperm.xlu0 %3702, %v3386
    %v3704 = vpop.permute.xlu0 %3703
    %3705 = vset.pattern.permute.xlu0 0
    %3706 = vperm.xlu0 %3705, %v3403
    %v3707 = vpop.permute.xlu0 %3706
    %3708 = vset.pattern.permute.xlu0 0
    %3709 = vperm.xlu0 %3708, %v3420
    %v3710 = vpop.permute.xlu0 %3709
    %3711 = vset.pattern.permute.xlu0 0
    %3712 = vperm.xlu0 %3711, %v3437
    %v3713 = vpop.permute.xlu0 %3712
    %3714 = vset.pattern.permute.xlu0 0
    %3715 = vperm.xlu0 %3714, %v3454
    %v3716 = vpop.permute.xlu0 %3715
    %3717 = vset.pattern.permute.xlu0 0
    %3718 = vperm.xlu0 %3717, %v3471
    %v3719 = vpop.permute.xlu0 %3718
    %3720 = vset.pattern.permute.xlu0 0
    %3721 = vperm.xlu0 %3720, %v3488
    %v3722 = vpop.permute.xlu0 %3721
    %3723 = vset.pattern.permute.xlu0 0
    %3724 = vperm.xlu0 %3723, %v3505
    %v3725 = vpop.permute.xlu0 %3724
    %3726 = vset.pattern.permute.xlu0 0
    %3727 = vperm.xlu0 %3726, %v3522
    %v3728 = vpop.permute.xlu0 %3727
    %3729 = vset.pattern.permute.xlu0 0
    %3730 = vperm.xlu0 %3729, %v3539
    %v3731 = vpop.permute.xlu0 %3730
    %v3732 = vlaneseq
    %v3733 = vshrl.u32 %v3732, 7
    %v3734 = vsub.s32 %v76, %v3733
    %v3735 = vrot.slane %v3542, %v3734
    %v3736 = vadd.s32 %v76, 4294967288
    %v3737 = vlaneseq
    %v3738 = vshrl.u32 %v3737, 7
    %v3739 = vsub.s32 %v3736, %v3738
    %v3740 = vrot.slane %v3545, %v3739
    %vm3741 = vcmask 130112
    %v3742 = vsel %vm3741, %v3740, %v3735
    %v3743 = vadd.s32 %v76, 4294967280
    %v3744 = vlaneseq
    %v3745 = vshrl.u32 %v3744, 7
    %v3746 = vsub.s32 %v3743, %v3745
    %v3747 = vrot.slane %v3548, %v3746
    %vm3748 = vcmask 195712
    %v3749 = vsel %vm3748, %v3747, %v3742
    %v3750 = vadd.s32 %v76, 4294967272
    %v3751 = vlaneseq
    %v3752 = vshrl.u32 %v3751, 7
    %v3753 = vsub.s32 %v3750, %v3752
    %v3754 = vrot.slane %v3551, %v3753
    %vm3755 = vcmask 261312
    %v3756 = vsel %vm3755, %v3754, %v3749
    %v3757 = vadd.s32 %v76, 4294967264
    %v3758 = vlaneseq
    %v3759 = vshrl.u32 %v3758, 7
    %v3760 = vsub.s32 %v3757, %v3759
    %v3761 = vrot.slane %v3554, %v3760
    %vm3762 = vcmask 326912
    %v3763 = vsel %vm3762, %v3761, %v3756
    %v3764 = vadd.s32 %v76, 4294967256
    %v3765 = vlaneseq
    %v3766 = vshrl.u32 %v3765, 7
    %v3767 = vsub.s32 %v3764, %v3766
    %v3768 = vrot.slane %v3557, %v3767
    %vm3769 = vcmask 392512
    %v3770 = vsel %vm3769, %v3768, %v3763
    %v3771 = vadd.s32 %v76, 4294967248
    %v3772 = vlaneseq
    %v3773 = vshrl.u32 %v3772, 7
    %v3774 = vsub.s32 %v3771, %v3773
    %v3775 = vrot.slane %v3560, %v3774
    %vm3776 = vcmask 458112
    %v3777 = vsel %vm3776, %v3775, %v3770
    %v3778 = vadd.s32 %v76, 4294967240
    %v3779 = vlaneseq
    %v3780 = vshrl.u32 %v3779, 7
    %v3781 = vsub.s32 %v3778, %v3780
    %v3782 = vrot.slane %v3563, %v3781
    %vm3783 = vcmask 523712
    %v3784 = vsel %vm3783, %v3782, %v3777
    %v3785 = vadd.s32 %v76, 4294967232
    %v3786 = vlaneseq
    %v3787 = vshrl.u32 %v3786, 7
    %v3788 = vsub.s32 %v3785, %v3787
    %v3789 = vrot.slane %v3566, %v3788
    %vm3790 = vcmask 589312
    %v3791 = vsel %vm3790, %v3789, %v3784
    %v3792 = vadd.s32 %v76, 4294967224
    %v3793 = vlaneseq
    %v3794 = vshrl.u32 %v3793, 7
    %v3795 = vsub.s32 %v3792, %v3794
    %v3796 = vrot.slane %v3569, %v3795
    %vm3797 = vcmask 654912
    %v3798 = vsel %vm3797, %v3796, %v3791
    %v3799 = vadd.s32 %v76, 4294967216
    %v3800 = vlaneseq
    %v3801 = vshrl.u32 %v3800, 7
    %v3802 = vsub.s32 %v3799, %v3801
    %v3803 = vrot.slane %v3572, %v3802
    %vm3804 = vcmask 720512
    %v3805 = vsel %vm3804, %v3803, %v3798
    %v3806 = vadd.s32 %v76, 4294967208
    %v3807 = vlaneseq
    %v3808 = vshrl.u32 %v3807, 7
    %v3809 = vsub.s32 %v3806, %v3808
    %v3810 = vrot.slane %v3575, %v3809
    %vm3811 = vcmask 786112
    %v3812 = vsel %vm3811, %v3810, %v3805
    %v3813 = vadd.s32 %v76, 4294967200
    %v3814 = vlaneseq
    %v3815 = vshrl.u32 %v3814, 7
    %v3816 = vsub.s32 %v3813, %v3815
    %v3817 = vrot.slane %v3578, %v3816
    %vm3818 = vcmask 851712
    %v3819 = vsel %vm3818, %v3817, %v3812
    %v3820 = vadd.s32 %v76, 4294967192
    %v3821 = vlaneseq
    %v3822 = vshrl.u32 %v3821, 7
    %v3823 = vsub.s32 %v3820, %v3822
    %v3824 = vrot.slane %v3581, %v3823
    %vm3825 = vcmask 917312
    %v3826 = vsel %vm3825, %v3824, %v3819
    %v3827 = vadd.s32 %v76, 4294967184
    %v3828 = vlaneseq
    %v3829 = vshrl.u32 %v3828, 7
    %v3830 = vsub.s32 %v3827, %v3829
    %v3831 = vrot.slane %v3584, %v3830
    %vm3832 = vcmask 982912
    %v3833 = vsel %vm3832, %v3831, %v3826
    %v3834 = vadd.s32 %v76, 4294967176
    %v3835 = vlaneseq
    %v3836 = vshrl.u32 %v3835, 7
    %v3837 = vsub.s32 %v3834, %v3836
    %v3838 = vrot.slane %v3587, %v3837
    %vm3839 = vcmask 1048512
    %v3840 = vsel %vm3839, %v3838, %v3833
    %v3841 = vlaneseq
    %v3842 = vshrl.u32 %v3841, 7
    %v3843 = vsub.s32 %v76, %v3842
    %v3844 = vrot.slane %v3590, %v3843
    %v3845 = vlaneseq
    %v3846 = vshrl.u32 %v3845, 7
    %v3847 = vsub.s32 %v3736, %v3846
    %v3848 = vrot.slane %v3593, %v3847
    %v3849 = vsel %vm3741, %v3848, %v3844
    %v3850 = vlaneseq
    %v3851 = vshrl.u32 %v3850, 7
    %v3852 = vsub.s32 %v3743, %v3851
    %v3853 = vrot.slane %v3596, %v3852
    %v3854 = vsel %vm3748, %v3853, %v3849
    %v3855 = vlaneseq
    %v3856 = vshrl.u32 %v3855, 7
    %v3857 = vsub.s32 %v3750, %v3856
    %v3858 = vrot.slane %v3599, %v3857
    %v3859 = vsel %vm3755, %v3858, %v3854
    %v3860 = vlaneseq
    %v3861 = vshrl.u32 %v3860, 7
    %v3862 = vsub.s32 %v3757, %v3861
    %v3863 = vrot.slane %v3602, %v3862
    %v3864 = vsel %vm3762, %v3863, %v3859
    %v3865 = vlaneseq
    %v3866 = vshrl.u32 %v3865, 7
    %v3867 = vsub.s32 %v3764, %v3866
    %v3868 = vrot.slane %v3605, %v3867
    %v3869 = vsel %vm3769, %v3868, %v3864
    %v3870 = vlaneseq
    %v3871 = vshrl.u32 %v3870, 7
    %v3872 = vsub.s32 %v3771, %v3871
    %v3873 = vrot.slane %v3608, %v3872
    %v3874 = vsel %vm3776, %v3873, %v3869
    %v3875 = vlaneseq
    %v3876 = vshrl.u32 %v3875, 7
    %v3877 = vsub.s32 %v3778, %v3876
    %v3878 = vrot.slane %v3611, %v3877
    %v3879 = vsel %vm3783, %v3878, %v3874
    %v3880 = vlaneseq
    %v3881 = vshrl.u32 %v3880, 7
    %v3882 = vsub.s32 %v3785, %v3881
    %v3883 = vrot.slane %v3614, %v3882
    %v3884 = vsel %vm3790, %v3883, %v3879
    %v3885 = vlaneseq
    %v3886 = vshrl.u32 %v3885, 7
    %v3887 = vsub.s32 %v3792, %v3886
    %v3888 = vrot.slane %v3617, %v3887
    %v3889 = vsel %vm3797, %v3888, %v3884
    %v3890 = vlaneseq
    %v3891 = vshrl.u32 %v3890, 7
    %v3892 = vsub.s32 %v3799, %v3891
    %v3893 = vrot.slane %v3620, %v3892
    %v3894 = vsel %vm3804, %v3893, %v3889
    %v3895 = vlaneseq
    %v3896 = vshrl.u32 %v3895, 7
    %v3897 = vsub.s32 %v3806, %v3896
    %v3898 = vrot.slane %v3623, %v3897
    %v3899 = vsel %vm3811, %v3898, %v3894
    %v3900 = vlaneseq
    %v3901 = vshrl.u32 %v3900, 7
    %v3902 = vsub.s32 %v3813, %v3901
    %v3903 = vrot.slane %v3626, %v3902
    %v3904 = vsel %vm3818, %v3903, %v3899
    %v3905 = vlaneseq
    %v3906 = vshrl.u32 %v3905, 7
    %v3907 = vsub.s32 %v3820, %v3906
    %v3908 = vrot.slane %v3629, %v3907
    %v3909 = vsel %vm3825, %v3908, %v3904
    %v3910 = vlaneseq
    %v3911 = vshrl.u32 %v3910, 7
    %v3912 = vsub.s32 %v3827, %v3911
    %v3913 = vrot.slane %v3632, %v3912
    %v3914 = vsel %vm3832, %v3913, %v3909
    %v3915 = vlaneseq
    %v3916 = vshrl.u32 %v3915, 7
    %v3917 = vsub.s32 %v3834, %v3916
    %v3918 = vrot.slane %v3635, %v3917
    %v3919 = vsel %vm3839, %v3918, %v3914
    %v3920 = vlaneseq
    %v3921 = vshrl.u32 %v3920, 7
    %v3922 = vsub.s32 %v76, %v3921
    %v3923 = vrot.slane %v3638, %v3922
    %v3924 = vlaneseq
    %v3925 = vshrl.u32 %v3924, 7
    %v3926 = vsub.s32 %v3736, %v3925
    %v3927 = vrot.slane %v3641, %v3926
    %v3928 = vsel %vm3741, %v3927, %v3923
    %v3929 = vlaneseq
    %v3930 = vshrl.u32 %v3929, 7
    %v3931 = vsub.s32 %v3743, %v3930
    %v3932 = vrot.slane %v3644, %v3931
    %v3933 = vsel %vm3748, %v3932, %v3928
    %v3934 = vlaneseq
    %v3935 = vshrl.u32 %v3934, 7
    %v3936 = vsub.s32 %v3750, %v3935
    %v3937 = vrot.slane %v3647, %v3936
    %v3938 = vsel %vm3755, %v3937, %v3933
    %v3939 = vlaneseq
    %v3940 = vshrl.u32 %v3939, 7
    %v3941 = vsub.s32 %v3757, %v3940
    %v3942 = vrot.slane %v3650, %v3941
    %v3943 = vsel %vm3762, %v3942, %v3938
    %v3944 = vlaneseq
    %v3945 = vshrl.u32 %v3944, 7
    %v3946 = vsub.s32 %v3764, %v3945
    %v3947 = vrot.slane %v3653, %v3946
    %v3948 = vsel %vm3769, %v3947, %v3943
    %v3949 = vlaneseq
    %v3950 = vshrl.u32 %v3949, 7
    %v3951 = vsub.s32 %v3771, %v3950
    %v3952 = vrot.slane %v3656, %v3951
    %v3953 = vsel %vm3776, %v3952, %v3948
    %v3954 = vlaneseq
    %v3955 = vshrl.u32 %v3954, 7
    %v3956 = vsub.s32 %v3778, %v3955
    %v3957 = vrot.slane %v3659, %v3956
    %v3958 = vsel %vm3783, %v3957, %v3953
    %v3959 = vlaneseq
    %v3960 = vshrl.u32 %v3959, 7
    %v3961 = vsub.s32 %v3785, %v3960
    %v3962 = vrot.slane %v3662, %v3961
    %v3963 = vsel %vm3790, %v3962, %v3958
    %v3964 = vlaneseq
    %v3965 = vshrl.u32 %v3964, 7
    %v3966 = vsub.s32 %v3792, %v3965
    %v3967 = vrot.slane %v3665, %v3966
    %v3968 = vsel %vm3797, %v3967, %v3963
    %v3969 = vlaneseq
    %v3970 = vshrl.u32 %v3969, 7
    %v3971 = vsub.s32 %v3799, %v3970
    %v3972 = vrot.slane %v3668, %v3971
    %v3973 = vsel %vm3804, %v3972, %v3968
    %v3974 = vlaneseq
    %v3975 = vshrl.u32 %v3974, 7
    %v3976 = vsub.s32 %v3806, %v3975
    %v3977 = vrot.slane %v3671, %v3976
    %v3978 = vsel %vm3811, %v3977, %v3973
    %v3979 = vlaneseq
    %v3980 = vshrl.u32 %v3979, 7
    %v3981 = vsub.s32 %v3813, %v3980
    %v3982 = vrot.slane %v3674, %v3981
    %v3983 = vsel %vm3818, %v3982, %v3978
    %v3984 = vlaneseq
    %v3985 = vshrl.u32 %v3984, 7
    %v3986 = vsub.s32 %v3820, %v3985
    %v3987 = vrot.slane %v3677, %v3986
    %v3988 = vsel %vm3825, %v3987, %v3983
    %v3989 = vlaneseq
    %v3990 = vshrl.u32 %v3989, 7
    %v3991 = vsub.s32 %v3827, %v3990
    %v3992 = vrot.slane %v3680, %v3991
    %v3993 = vsel %vm3832, %v3992, %v3988
    %v3994 = vlaneseq
    %v3995 = vshrl.u32 %v3994, 7
    %v3996 = vsub.s32 %v3834, %v3995
    %v3997 = vrot.slane %v3683, %v3996
    %v3998 = vsel %vm3839, %v3997, %v3993
    %v3999 = vlaneseq
    %v4000 = vshrl.u32 %v3999, 7
    %v4001 = vsub.s32 %v76, %v4000
    %v4002 = vrot.slane %v3686, %v4001
    %v4003 = vlaneseq
    %v4004 = vshrl.u32 %v4003, 7
    %v4005 = vsub.s32 %v3736, %v4004
    %v4006 = vrot.slane %v3689, %v4005
    %v4007 = vsel %vm3741, %v4006, %v4002
    %v4008 = vlaneseq
    %v4009 = vshrl.u32 %v4008, 7
    %v4010 = vsub.s32 %v3743, %v4009
    %v4011 = vrot.slane %v3692, %v4010
    %v4012 = vsel %vm3748, %v4011, %v4007
    %v4013 = vlaneseq
    %v4014 = vshrl.u32 %v4013, 7
    %v4015 = vsub.s32 %v3750, %v4014
    %v4016 = vrot.slane %v3695, %v4015
    %v4017 = vsel %vm3755, %v4016, %v4012
    %v4018 = vlaneseq
    %v4019 = vshrl.u32 %v4018, 7
    %v4020 = vsub.s32 %v3757, %v4019
    %v4021 = vrot.slane %v3698, %v4020
    %v4022 = vsel %vm3762, %v4021, %v4017
    %v4023 = vlaneseq
    %v4024 = vshrl.u32 %v4023, 7
    %v4025 = vsub.s32 %v3764, %v4024
    %v4026 = vrot.slane %v3701, %v4025
    %v4027 = vsel %vm3769, %v4026, %v4022
    %v4028 = vlaneseq
    %v4029 = vshrl.u32 %v4028, 7
    %v4030 = vsub.s32 %v3771, %v4029
    %v4031 = vrot.slane %v3704, %v4030
    %v4032 = vsel %vm3776, %v4031, %v4027
    %v4033 = vlaneseq
    %v4034 = vshrl.u32 %v4033, 7
    %v4035 = vsub.s32 %v3778, %v4034
    %v4036 = vrot.slane %v3707, %v4035
    %v4037 = vsel %vm3783, %v4036, %v4032
    %v4038 = vlaneseq
    %v4039 = vshrl.u32 %v4038, 7
    %v4040 = vsub.s32 %v3785, %v4039
    %v4041 = vrot.slane %v3710, %v4040
    %v4042 = vsel %vm3790, %v4041, %v4037
    %v4043 = vlaneseq
    %v4044 = vshrl.u32 %v4043, 7
    %v4045 = vsub.s32 %v3792, %v4044
    %v4046 = vrot.slane %v3713, %v4045
    %v4047 = vsel %vm3797, %v4046, %v4042
    %v4048 = vlaneseq
    %v4049 = vshrl.u32 %v4048, 7
    %v4050 = vsub.s32 %v3799, %v4049
    %v4051 = vrot.slane %v3716, %v4050
    %v4052 = vsel %vm3804, %v4051, %v4047
    %v4053 = vlaneseq
    %v4054 = vshrl.u32 %v4053, 7
    %v4055 = vsub.s32 %v3806, %v4054
    %v4056 = vrot.slane %v3719, %v4055
    %v4057 = vsel %vm3811, %v4056, %v4052
    %v4058 = vlaneseq
    %v4059 = vshrl.u32 %v4058, 7
    %v4060 = vsub.s32 %v3813, %v4059
    %v4061 = vrot.slane %v3722, %v4060
    %v4062 = vsel %vm3818, %v4061, %v4057
    %v4063 = vlaneseq
    %v4064 = vshrl.u32 %v4063, 7
    %v4065 = vsub.s32 %v3820, %v4064
    %v4066 = vrot.slane %v3725, %v4065
    %v4067 = vsel %vm3825, %v4066, %v4062
    %v4068 = vlaneseq
    %v4069 = vshrl.u32 %v4068, 7
    %v4070 = vsub.s32 %v3827, %v4069
    %v4071 = vrot.slane %v3728, %v4070
    %v4072 = vsel %vm3832, %v4071, %v4067
    %v4073 = vlaneseq
    %v4074 = vshrl.u32 %v4073, 7
    %v4075 = vsub.s32 %v3834, %v4074
    %v4076 = vrot.slane %v3731, %v4075
    %v4077 = vsel %vm3839, %v4076, %v4072
    %vm4078 = vcmask 1041409
    %v4079 = vsel %vm4078, %v3998, %v3840
    %v4080 = vsel %vm4078, %v4077, %v3919
    %v4081 = vcombine.low %v4079, %v4080
    %v4083 = vunpack.c.l.s4 1983009808
    %v4084 = vunpack.c.0.s8 %v4083
    %v4085 = vlaneseq
    %v4086 = vshrl.u32 %v4085, 7
    %v4087 = vsub.s32 %v4084, %v4086
    %v4088 = vrot.slane %v4081, %v4087
    %4090 = vst [vmem:[#allocation2 + $0x2] sm:$0xf] %v4088
    // Predicated region
    $region6: #{tpu_custom_call.1} parent=1 // pred_check
      _
    $region7: #{tpu_custom_call.1} parent=1 // pred_check_branch
      %4092 = sbr.rel (0) target = $region9
    $region8: #{tpu_custom_call.1} parent=1 // pred_region
      %s4094 = ssub.s32 128, 128
      %4095 = vsyncadd [#allocation3], %s4094
      %s4097 = sshll.u32 [#allocation2], 4
      %s4098 = int_to_ptr.vmem [resolvable:$true] %s4097
      %4100 = dma.vmem_to_hbm [thread:$0]  %s4098, 128, %s1, [#allocation3]
    $region9: #{tpu_custom_call.1} parent=1 // pred_fallthru
      _
    // Predicated region
    $region10: #{tpu_custom_call.1} parent=1 // pred_check
      _
    $region11: #{tpu_custom_call.1} parent=1 // pred_check_branch
      %4102 = sbr.rel (0) target = $region13
    $region12: #{tpu_custom_call.1} parent=1 // pred_region
      %4103 = dma.done [#allocation3], 128
    $region13: #{tpu_custom_call.1} parent=1 // pred_fallthru
      _
    %4104 = vsyncpa [#allocation3], 1

</llo_original>
